<compile_context>
chip_gen: v5e
topology: v5e:2x2
jax: 0.10.0
libtpu: 0.0.40
codegen_flags: <defaults>
</compile_context>

<pallas_src>
import functools

import jax
import jax.numpy as jnp
from jax.experimental import pallas as pl
from jax.experimental.pallas import tpu as pltpu

LEAKY_SLOPE = 0.01  # PyTorch nn.LeakyReLU default


def _leaky_relu(x):
    return jnp.where(x >= 0, x, LEAKY_SLOPE * x)


def _round_up(v, m):
    return ((v + m - 1) // m) * m


def _tap_rows(h2d, l_in, tb, k, l_out, stride):
    """Rows of h2d (shape (l_in*tb, C), row = l*tb + b) feeding conv tap k.

    Returns (l_out*tb, C).  For stride==1 this is one sublane-tile-aligned
    static slice (tb is a multiple of 8); for stride>1 it is a static
    concatenation of whole (tb, C) row blocks.  No lane shuffling either way.
    """
    if stride == 1:
        return h2d[k * tb:(k + l_out) * tb, :]
    h3 = h2d.reshape(l_in, tb, h2d.shape[-1])
    return jnp.concatenate([h3[t * stride + k] for t in range(l_out)], axis=0)


def _conv_layer(h2d, l_in, tb, w_ref, b_ref, k_size, stride):
    """Conv1d + bias + LeakyReLU as k_size full-size MXU matmuls.

    h2d: (l_in*tb, C_in) f32/bf16; w_ref: (K, C_in, C_out) bf16;
    b_ref: (1, C_out) f32.
    """
    l_out = (l_in - k_size) // stride + 1
    acc = None
    for k in range(k_size):
        rows = _tap_rows(h2d, l_in, tb, k, l_out, stride).astype(jnp.bfloat16)
        part = jnp.dot(rows, w_ref[k], preferred_element_type=jnp.float32)
        acc = part if acc is None else acc + part
    return _leaky_relu(acc + b_ref[...]), l_out


def _disc_kernel(x_ref,
                 w1, b1, w2, b2, w3, b3, w4, b4, w5, b5,
                 fw1, fw2, fw3, fb3,
                 o_ref, *, k_size, stride, tb):
    l0 = x_ref.shape[0] // tb
    h = x_ref[...]                                              # (L0*TB, C_in) bf16
    h, l = _conv_layer(h, l0, tb, w1, b1, k_size, stride)       # (L1*TB, 20)
    h, l = _conv_layer(h, l, tb, w2, b2, k_size, stride)        # (L2*TB, 40)
    h, l = _conv_layer(h, l, tb, w3, b3, k_size, stride)        # (L3*TB, 80)
    h, l = _conv_layer(h, l, tb, w4, b4, k_size, stride)        # (L4*TB, 160)

    # conv5: 1x1 conv with a single output channel -> VPU multiply + lane
    # reduce (avoids a degenerate (M, 1) matmul); result laid out (L5, TB), f32.
    l5 = (l - 1) // stride + 1
    h5 = _tap_rows(h, l, tb, 0, l5, stride).reshape(l5, tb, h.shape[-1])
    c5 = _leaky_relu(jnp.sum(h5 * w5[...], axis=-1) + b5[...])  # (L5, TB)

    # FC stage: batched (TB, .) MXU matmuls with lane-dense (512 / 128) widths.
    y = jnp.transpose(c5, (1, 0)).astype(jnp.bfloat16)          # (TB, L5)
    y = _leaky_relu(jnp.dot(y, fw1[...], preferred_element_type=jnp.float32))
    y = jnp.dot(y.astype(jnp.bfloat16), fw2[...], preferred_element_type=jnp.float32)
    y = jnp.maximum(y, 0.0)
    y = jnp.dot(y.astype(jnp.bfloat16), fw3[...], preferred_element_type=jnp.float32)
    y = y + fb3[...]
    # sigmoid: exp and reciprocal both go to the EUP slot (approx recip is free-ish)
    o_ref[...] = pl.reciprocal(1.0 + jnp.exp(-y), approx=True)  # (TB, OC_PAD)


def cnn_discriminator_forward(x, params, kernel_size, stride, output_channels):
    """Forward pass of cnn_discriminator.  x: (N, C_in, L0) -> (N, 1, oc)."""
    n, c_in, l0 = x.shape

    # conv-stack length bookkeeping; must end at fc1's input width.
    l = l0
    for _ in range(4):
        l = (l - kernel_size) // stride + 1
    l5 = (l - 1) // stride + 1
    d_in, hid = params["fc1_w"].shape
    assert l5 == d_in, f"conv stack length {l5} != fc1 input width {d_in}"

    tb = min(128, _round_up(n, 8))             # batch tile (multiple of 8 sublanes)
    n_pad = _round_up(n, tb)
    g = n_pad // tb
    hid_pad = _round_up(hid, 128)              # 440 -> 512 (full MXU lane tiles)
    oc_pad = _round_up(output_channels, 128)   # lane-dense output store

    # input.float(); lay out as (G, L0*TB, C_in) with row = l*TB + b per tile
    # so every conv tap in the kernel is a sublane-aligned row-block selection.
    # Shipped as bf16 (consumed in bf16 by the first MXU matmul anyway).
    x_t = jnp.transpose(x.astype(jnp.float32), (2, 0, 1))       # (L0, N, C_in)
    if n_pad != n:
        x_t = jnp.pad(x_t, ((0, 0), (0, n_pad - n), (0, 0)))
    x_t = (x_t.reshape(l0, g, tb, c_in)
              .transpose(1, 0, 2, 3)
              .reshape(g, l0 * tb, c_in)
              .astype(jnp.bfloat16))

    def pad2(a, rows, cols):
        return jnp.pad(a, ((0, rows - a.shape[0]), (0, cols - a.shape[1])))

    inputs = [x_t]
    for i in range(1, 5):                                        # conv1..conv4
        inputs.append(params[f"conv{i}_w"].astype(jnp.bfloat16))  # (K, C_in, C_out)
        inputs.append(params[f"conv{i}_b"])                       # (1, C_out) f32
    inputs.append(params["conv5_w"].reshape(1, 1, -1))            # (1, 1, 160) f32
    inputs.append(params["conv5_b"].reshape(1, 1))                # (1, 1) f32
    inputs.append(pad2(params["fc1_w"], d_in, hid_pad).astype(jnp.bfloat16))
    inputs.append(pad2(params["fc2_w"], hid_pad, hid_pad).astype(jnp.bfloat16))
    inputs.append(pad2(params["fc3_w"], hid_pad, oc_pad).astype(jnp.bfloat16))
    inputs.append(pad2(params["fc3_b"], 1, oc_pad))               # (1, OC_PAD) f32

    in_specs = [pl.BlockSpec((pl.Squeezed(), l0 * tb, c_in), lambda i: (i, 0, 0))]
    for a in inputs[1:]:
        # constant index_map -> weights are fetched once and kept resident
        in_specs.append(pl.BlockSpec(a.shape, lambda i, nd=a.ndim: (0,) * nd))
    out_spec = pl.BlockSpec((tb, oc_pad), lambda i: (i, 0))

    kernel = functools.partial(_disc_kernel, k_size=kernel_size, stride=stride, tb=tb)
    out = pl.pallas_call(
        kernel,
        out_shape=jax.ShapeDtypeStruct((n_pad, oc_pad), jnp.float32),
        grid_spec=pltpu.PrefetchScalarGridSpec(
            num_scalar_prefetch=0,
            grid=(g,),
            in_specs=in_specs,
            out_specs=out_spec,
        ),
        compiler_params=pltpu.CompilerParams(
            dimension_semantics=("parallel",)),    # batch tiles are independent
    )(*inputs)
    return out[:n, :output_channels].reshape(n, 1, output_channels)


def init_params(key, input_channels, output_channels, kernel_size, sent=True):
    """Deterministic synthetic parameters (uniform +/- 1/sqrt(fan_in)) in
    kernel-friendly shapes: conv w (K, C_in, C_out), conv b (1, C_out),
    fc w (in, out), fc3_b (1, out)."""
    conv_dims = [
        (input_channels, 20, kernel_size),
        (20, 40, kernel_size),
        (40, 80, kernel_size),
        (80, 160, kernel_size),
        (160, 1, 1),
    ]
    keys = jax.random.split(key, 8)
    params = {}
    for i, (cin, cout, k) in enumerate(conv_dims):
        wk, bk = jax.random.split(keys[i])
        bound = 1.0 / (cin * k) ** 0.5
        params[f"conv{i + 1}_w"] = jax.random.uniform(
            wk, (k, cin, cout), jnp.float32, -bound, bound)
        params[f"conv{i + 1}_b"] = jax.random.uniform(
            bk, (1, cout), jnp.float32, -bound, bound)
    d_in = 13 if sent else 22
    d_hid = output_channels * 220
    b1 = 1.0 / d_in ** 0.5
    b2 = 1.0 / d_hid ** 0.5
    params["fc1_w"] = jax.random.uniform(keys[5], (d_in, d_hid), jnp.float32, -b1, b1)
    params["fc2_w"] = jax.random.uniform(keys[6], (d_hid, d_hid), jnp.float32, -b2, b2)
    kw, kb = jax.random.split(keys[7])
    params["fc3_w"] = jax.random.uniform(kw, (d_hid, output_channels), jnp.float32, -b2, b2)
    params["fc3_b"] = jax.random.uniform(kb, (1, output_channels), jnp.float32, -b2, b2)
    return params


def reference_forward(x, params, kernel_size, stride, output_channels):
    """Pure-JAX reference (lax.conv + einsum) mirroring the kernel's bf16
    quantization points (bf16 operands, f32 accumulation; conv5 stays f32)."""
    h = x.astype(jnp.float32)
    for i in range(1, 5):
        w = jnp.transpose(params[f"conv{i}_w"], (2, 1, 0)).astype(jnp.bfloat16)
        b = params[f"conv{i}_b"][0]
        h = jax.lax.conv_general_dilated(
            h.astype(jnp.bfloat16), w, (stride,), "VALID",
            dimension_numbers=("NCH", "OIH", "NCH"),
            preferred_element_type=jnp.float32)
        h = _leaky_relu(h + b[None, :, None])
    w5 = jnp.transpose(params["conv5_w"], (2, 1, 0))              # f32, like the kernel
    b5 = params["conv5_b"][0]
    h = jax.lax.conv_general_dilated(
        h, w5, (stride,), "VALID", dimension_numbers=("NCH", "OIH", "NCH"))
    h = _leaky_relu(h + b5[None, :, None])                        # (N, 1, 13)

    def fc(a, w):
        return jnp.einsum("ncl,lo->nco", a.astype(jnp.bfloat16),
                          w.astype(jnp.bfloat16),
                          preferred_element_type=jnp.float32)

    h = _leaky_relu(fc(h, params["fc1_w"]))
    h = jnp.maximum(fc(h, params["fc2_w"]), 0.0)
    h = fc(h, params["fc3_w"]) + params["fc3_b"][None]
    return jax.nn.sigmoid(h)


if __name__ == "__main__":
    key = jax.random.PRNGKey(0)
    k_x, k_p = jax.random.split(key)

    # Small shapes: stride=1, kernel_size=3, L0=21 so the conv stack yields
    # length 13 (required by Linear(13, ...), sent=True).
    input_channels, output_channels, kernel_size, stride = 4, 2, 3, 1
    batch, seq_len = 2, 21

    x = jax.random.normal(k_x, (batch, input_channels, seq_len), jnp.float32)
    params = init_params(k_p, input_channels, output_channels, kernel_size, sent=True)

    out = cnn_discriminator_forward(x, params, kernel_size, stride, output_channels)
    out = jax.block_until_ready(out)

    ref = reference_forward(x, params, kernel_size, stride, output_channels)
    assert out.shape == (batch, 1, output_channels), out.shape
    max_err = float(jnp.max(jnp.abs(out - ref)))
    assert jnp.allclose(out, ref, atol=5e-3), max_err
    print("KERNEL_OK")
</pallas_src>

<mosaic_0001>
module attributes {stable_mosaic.version = 11 : i64} {
  func.func @_disc_kernel(%arg0: i32, %arg1: memref<1x168x4xbf16, #tpu.memory_space<vmem>>, %arg2: memref<3x4x20xbf16, #tpu.memory_space<vmem>>, %arg3: memref<1x20xf32, #tpu.memory_space<vmem>>, %arg4: memref<3x20x40xbf16, #tpu.memory_space<vmem>>, %arg5: memref<1x40xf32, #tpu.memory_space<vmem>>, %arg6: memref<3x40x80xbf16, #tpu.memory_space<vmem>>, %arg7: memref<1x80xf32, #tpu.memory_space<vmem>>, %arg8: memref<3x80x160xbf16, #tpu.memory_space<vmem>>, %arg9: memref<1x160xf32, #tpu.memory_space<vmem>>, %arg10: memref<1x1x160xf32, #tpu.memory_space<vmem>>, %arg11: memref<1x1xf32, #tpu.memory_space<vmem>>, %arg12: memref<13x512xbf16, #tpu.memory_space<vmem>>, %arg13: memref<512x512xbf16, #tpu.memory_space<vmem>>, %arg14: memref<512x128xbf16, #tpu.memory_space<vmem>>, %arg15: memref<1x128xf32, #tpu.memory_space<vmem>>, %arg16: memref<8x128xf32, #tpu.memory_space<vmem>>) attributes {dimension_semantics = [#tpu.dimension_semantics<parallel>], iteration_bounds = array<i64: 1>, scalar_prefetch = 0 : i64, scratch_operands = 0 : i64, tpu.core_type = #tpu.core_type<tc>, window_params = [{transform_indices = @transform_0, window_bounds = array<i64: 1, 168, 4>}, {pipeline_mode = #tpu.pipeline_mode<synchronous>, transform_indices = @transform_1, window_bounds = array<i64: 3, 4, 20>}, {pipeline_mode = #tpu.pipeline_mode<synchronous>, transform_indices = @transform_2, window_bounds = array<i64: 1, 20>}, {pipeline_mode = #tpu.pipeline_mode<synchronous>, transform_indices = @transform_3, window_bounds = array<i64: 3, 20, 40>}, {pipeline_mode = #tpu.pipeline_mode<synchronous>, transform_indices = @transform_4, window_bounds = array<i64: 1, 40>}, {pipeline_mode = #tpu.pipeline_mode<synchronous>, transform_indices = @transform_5, window_bounds = array<i64: 3, 40, 80>}, {pipeline_mode = #tpu.pipeline_mode<synchronous>, transform_indices = @transform_6, window_bounds = array<i64: 1, 80>}, {pipeline_mode = #tpu.pipeline_mode<synchronous>, transform_indices = @transform_7, window_bounds = array<i64: 3, 80, 160>}, {pipeline_mode = #tpu.pipeline_mode<synchronous>, transform_indices = @transform_8, window_bounds = array<i64: 1, 160>}, {pipeline_mode = #tpu.pipeline_mode<synchronous>, transform_indices = @transform_9, window_bounds = array<i64: 1, 1, 160>}, {pipeline_mode = #tpu.pipeline_mode<synchronous>, transform_indices = @transform_10, window_bounds = array<i64: 1, 1>}, {pipeline_mode = #tpu.pipeline_mode<synchronous>, transform_indices = @transform_11, window_bounds = array<i64: 13, 512>}, {pipeline_mode = #tpu.pipeline_mode<synchronous>, transform_indices = @transform_12, window_bounds = array<i64: 512, 512>}, {pipeline_mode = #tpu.pipeline_mode<synchronous>, transform_indices = @transform_13, window_bounds = array<i64: 512, 128>}, {pipeline_mode = #tpu.pipeline_mode<synchronous>, transform_indices = @transform_14, window_bounds = array<i64: 1, 128>}, {transform_indices = @transform_15, window_bounds = array<i64: 8, 128>}]} {
    %c0 = arith.constant 0 : index
    %c0_0 = arith.constant 0 : index
    %c0_1 = arith.constant 0 : index
    %0 = vector.load %arg1[%c0, %c0_0, %c0_1] : memref<1x168x4xbf16, #tpu.memory_space<vmem>>, vector<1x168x4xbf16>
    %1 = vector.shape_cast %0 : vector<1x168x4xbf16> to vector<168x4xbf16>
    %2 = vector.extract_strided_slice %1 {offsets = [0, 0], sizes = [152, 4], strides = [1, 1]} : vector<168x4xbf16> to vector<152x4xbf16>
    %c0_2 = arith.constant 0 : index
    %c0_3 = arith.constant 0 : index
    %c0_4 = arith.constant 0 : index
    %3 = vector.load %arg2[%c0_2, %c0_3, %c0_4] : memref<3x4x20xbf16, #tpu.memory_space<vmem>>, vector<1x4x20xbf16>
    %4 = vector.shape_cast %3 : vector<1x4x20xbf16> to vector<4x20xbf16>
    %cst = arith.constant dense<0.000000e+00> : vector<152x20xf32>
    %5 = tpu.matmul %2, %4, %cst {dimension_numbers = #tpu.dot_dimension_numbers<[1], [0], [0], [1], [0, 0, 1, 1], [], []>} : vector<152x4xbf16>, vector<4x20xbf16>, vector<152x20xf32> -> vector<152x20xf32>
    %6 = vector.extract_strided_slice %1 {offsets = [8, 0], sizes = [152, 4], strides = [1, 1]} : vector<168x4xbf16> to vector<152x4xbf16>
    %c1 = arith.constant 1 : index
    %c0_5 = arith.constant 0 : index
    %c0_6 = arith.constant 0 : index
    %7 = vector.load %arg2[%c1, %c0_5, %c0_6] : memref<3x4x20xbf16, #tpu.memory_space<vmem>>, vector<1x4x20xbf16>
    %8 = vector.shape_cast %7 : vector<1x4x20xbf16> to vector<4x20xbf16>
    %cst_7 = arith.constant dense<0.000000e+00> : vector<152x20xf32>
    %9 = tpu.matmul %6, %8, %cst_7 {dimension_numbers = #tpu.dot_dimension_numbers<[1], [0], [0], [1], [0, 0, 1, 1], [], []>} : vector<152x4xbf16>, vector<4x20xbf16>, vector<152x20xf32> -> vector<152x20xf32>
    %10 = arith.addf %5, %9 : vector<152x20xf32>
    %11 = vector.extract_strided_slice %1 {offsets = [16, 0], sizes = [152, 4], strides = [1, 1]} : vector<168x4xbf16> to vector<152x4xbf16>
    %c2 = arith.constant 2 : index
    %c0_8 = arith.constant 0 : index
    %c0_9 = arith.constant 0 : index
    %12 = vector.load %arg2[%c2, %c0_8, %c0_9] : memref<3x4x20xbf16, #tpu.memory_space<vmem>>, vector<1x4x20xbf16>
    %13 = vector.shape_cast %12 : vector<1x4x20xbf16> to vector<4x20xbf16>
    %cst_10 = arith.constant dense<0.000000e+00> : vector<152x20xf32>
    %14 = tpu.matmul %11, %13, %cst_10 {dimension_numbers = #tpu.dot_dimension_numbers<[1], [0], [0], [1], [0, 0, 1, 1], [], []>} : vector<152x4xbf16>, vector<4x20xbf16>, vector<152x20xf32> -> vector<152x20xf32>
    %15 = arith.addf %10, %14 : vector<152x20xf32>
    %c0_11 = arith.constant 0 : index
    %c0_12 = arith.constant 0 : index
    %16 = vector.load %arg3[%c0_11, %c0_12] : memref<1x20xf32, #tpu.memory_space<vmem>>, vector<1x20xf32>
    %17 = vector.broadcast %16 : vector<1x20xf32> to vector<152x20xf32>
    %18 = arith.addf %15, %17 : vector<152x20xf32>
    %cst_13 = arith.constant 0.000000e+00 : f32
    %19 = vector.broadcast %cst_13 : f32 to vector<152x20xf32>
    %20 = arith.cmpf oge, %18, %19 : vector<152x20xf32>
    %cst_14 = arith.constant 0.00999999977 : f32
    %21 = vector.broadcast %cst_14 : f32 to vector<152x20xf32>
    %22 = arith.mulf %21, %18 : vector<152x20xf32>
    %23 = arith.select %20, %18, %22 : vector<152x20xi1>, vector<152x20xf32>
    %24 = vector.extract_strided_slice %23 {offsets = [0, 0], sizes = [136, 20], strides = [1, 1]} : vector<152x20xf32> to vector<136x20xf32>
    %25 = arith.truncf %24 : vector<136x20xf32> to vector<136x20xbf16>
    %c0_15 = arith.constant 0 : index
    %c0_16 = arith.constant 0 : index
    %c0_17 = arith.constant 0 : index
    %26 = vector.load %arg4[%c0_15, %c0_16, %c0_17] : memref<3x20x40xbf16, #tpu.memory_space<vmem>>, vector<1x20x40xbf16>
    %27 = vector.shape_cast %26 : vector<1x20x40xbf16> to vector<20x40xbf16>
    %cst_18 = arith.constant dense<0.000000e+00> : vector<136x40xf32>
    %28 = tpu.matmul %25, %27, %cst_18 {dimension_numbers = #tpu.dot_dimension_numbers<[1], [0], [0], [1], [0, 0, 1, 1], [], []>} : vector<136x20xbf16>, vector<20x40xbf16>, vector<136x40xf32> -> vector<136x40xf32>
    %29 = vector.extract_strided_slice %23 {offsets = [8, 0], sizes = [136, 20], strides = [1, 1]} : vector<152x20xf32> to vector<136x20xf32>
    %30 = arith.truncf %29 : vector<136x20xf32> to vector<136x20xbf16>
    %c1_19 = arith.constant 1 : index
    %c0_20 = arith.constant 0 : index
    %c0_21 = arith.constant 0 : index
    %31 = vector.load %arg4[%c1_19, %c0_20, %c0_21] : memref<3x20x40xbf16, #tpu.memory_space<vmem>>, vector<1x20x40xbf16>
    %32 = vector.shape_cast %31 : vector<1x20x40xbf16> to vector<20x40xbf16>
    %cst_22 = arith.constant dense<0.000000e+00> : vector<136x40xf32>
    %33 = tpu.matmul %30, %32, %cst_22 {dimension_numbers = #tpu.dot_dimension_numbers<[1], [0], [0], [1], [0, 0, 1, 1], [], []>} : vector<136x20xbf16>, vector<20x40xbf16>, vector<136x40xf32> -> vector<136x40xf32>
    %34 = arith.addf %28, %33 : vector<136x40xf32>
    %35 = vector.extract_strided_slice %23 {offsets = [16, 0], sizes = [136, 20], strides = [1, 1]} : vector<152x20xf32> to vector<136x20xf32>
    %36 = arith.truncf %35 : vector<136x20xf32> to vector<136x20xbf16>
    %c2_23 = arith.constant 2 : index
    %c0_24 = arith.constant 0 : index
    %c0_25 = arith.constant 0 : index
    %37 = vector.load %arg4[%c2_23, %c0_24, %c0_25] : memref<3x20x40xbf16, #tpu.memory_space<vmem>>, vector<1x20x40xbf16>
    %38 = vector.shape_cast %37 : vector<1x20x40xbf16> to vector<20x40xbf16>
    %cst_26 = arith.constant dense<0.000000e+00> : vector<136x40xf32>
    %39 = tpu.matmul %36, %38, %cst_26 {dimension_numbers = #tpu.dot_dimension_numbers<[1], [0], [0], [1], [0, 0, 1, 1], [], []>} : vector<136x20xbf16>, vector<20x40xbf16>, vector<136x40xf32> -> vector<136x40xf32>
    %40 = arith.addf %34, %39 : vector<136x40xf32>
    %c0_27 = arith.constant 0 : index
    %c0_28 = arith.constant 0 : index
    %41 = vector.load %arg5[%c0_27, %c0_28] : memref<1x40xf32, #tpu.memory_space<vmem>>, vector<1x40xf32>
    %42 = vector.broadcast %41 : vector<1x40xf32> to vector<136x40xf32>
    %43 = arith.addf %40, %42 : vector<136x40xf32>
    %cst_29 = arith.constant 0.000000e+00 : f32
    %44 = vector.broadcast %cst_29 : f32 to vector<136x40xf32>
    %45 = arith.cmpf oge, %43, %44 : vector<136x40xf32>
    %cst_30 = arith.constant 0.00999999977 : f32
    %46 = vector.broadcast %cst_30 : f32 to vector<136x40xf32>
    %47 = arith.mulf %46, %43 : vector<136x40xf32>
    %48 = arith.select %45, %43, %47 : vector<136x40xi1>, vector<136x40xf32>
    %49 = vector.extract_strided_slice %48 {offsets = [0, 0], sizes = [120, 40], strides = [1, 1]} : vector<136x40xf32> to vector<120x40xf32>
    %50 = arith.truncf %49 : vector<120x40xf32> to vector<120x40xbf16>
    %c0_31 = arith.constant 0 : index
    %c0_32 = arith.constant 0 : index
    %c0_33 = arith.constant 0 : index
    %51 = vector.load %arg6[%c0_31, %c0_32, %c0_33] : memref<3x40x80xbf16, #tpu.memory_space<vmem>>, vector<1x40x80xbf16>
    %52 = vector.shape_cast %51 : vector<1x40x80xbf16> to vector<40x80xbf16>
    %cst_34 = arith.constant dense<0.000000e+00> : vector<120x80xf32>
    %53 = tpu.matmul %50, %52, %cst_34 {dimension_numbers = #tpu.dot_dimension_numbers<[1], [0], [0], [1], [0, 0, 1, 1], [], []>} : vector<120x40xbf16>, vector<40x80xbf16>, vector<120x80xf32> -> vector<120x80xf32>
    %54 = vector.extract_strided_slice %48 {offsets = [8, 0], sizes = [120, 40], strides = [1, 1]} : vector<136x40xf32> to vector<120x40xf32>
    %55 = arith.truncf %54 : vector<120x40xf32> to vector<120x40xbf16>
    %c1_35 = arith.constant 1 : index
    %c0_36 = arith.constant 0 : index
    %c0_37 = arith.constant 0 : index
    %56 = vector.load %arg6[%c1_35, %c0_36, %c0_37] : memref<3x40x80xbf16, #tpu.memory_space<vmem>>, vector<1x40x80xbf16>
    %57 = vector.shape_cast %56 : vector<1x40x80xbf16> to vector<40x80xbf16>
    %cst_38 = arith.constant dense<0.000000e+00> : vector<120x80xf32>
    %58 = tpu.matmul %55, %57, %cst_38 {dimension_numbers = #tpu.dot_dimension_numbers<[1], [0], [0], [1], [0, 0, 1, 1], [], []>} : vector<120x40xbf16>, vector<40x80xbf16>, vector<120x80xf32> -> vector<120x80xf32>
    %59 = arith.addf %53, %58 : vector<120x80xf32>
    %60 = vector.extract_strided_slice %48 {offsets = [16, 0], sizes = [120, 40], strides = [1, 1]} : vector<136x40xf32> to vector<120x40xf32>
    %61 = arith.truncf %60 : vector<120x40xf32> to vector<120x40xbf16>
    %c2_39 = arith.constant 2 : index
    %c0_40 = arith.constant 0 : index
    %c0_41 = arith.constant 0 : index
    %62 = vector.load %arg6[%c2_39, %c0_40, %c0_41] : memref<3x40x80xbf16, #tpu.memory_space<vmem>>, vector<1x40x80xbf16>
    %63 = vector.shape_cast %62 : vector<1x40x80xbf16> to vector<40x80xbf16>
    %cst_42 = arith.constant dense<0.000000e+00> : vector<120x80xf32>
    %64 = tpu.matmul %61, %63, %cst_42 {dimension_numbers = #tpu.dot_dimension_numbers<[1], [0], [0], [1], [0, 0, 1, 1], [], []>} : vector<120x40xbf16>, vector<40x80xbf16>, vector<120x80xf32> -> vector<120x80xf32>
    %65 = arith.addf %59, %64 : vector<120x80xf32>
    %c0_43 = arith.constant 0 : index
    %c0_44 = arith.constant 0 : index
    %66 = vector.load %arg7[%c0_43, %c0_44] : memref<1x80xf32, #tpu.memory_space<vmem>>, vector<1x80xf32>
    %67 = vector.broadcast %66 : vector<1x80xf32> to vector<120x80xf32>
    %68 = arith.addf %65, %67 : vector<120x80xf32>
    %cst_45 = arith.constant 0.000000e+00 : f32
    %69 = vector.broadcast %cst_45 : f32 to vector<120x80xf32>
    %70 = arith.cmpf oge, %68, %69 : vector<120x80xf32>
    %cst_46 = arith.constant 0.00999999977 : f32
    %71 = vector.broadcast %cst_46 : f32 to vector<120x80xf32>
    %72 = arith.mulf %71, %68 : vector<120x80xf32>
    %73 = arith.select %70, %68, %72 : vector<120x80xi1>, vector<120x80xf32>
    %74 = vector.extract_strided_slice %73 {offsets = [0, 0], sizes = [104, 80], strides = [1, 1]} : vector<120x80xf32> to vector<104x80xf32>
    %75 = arith.truncf %74 : vector<104x80xf32> to vector<104x80xbf16>
    %c0_47 = arith.constant 0 : index
    %c0_48 = arith.constant 0 : index
    %c0_49 = arith.constant 0 : index
    %76 = vector.load %arg8[%c0_47, %c0_48, %c0_49] : memref<3x80x160xbf16, #tpu.memory_space<vmem>>, vector<1x80x160xbf16>
    %77 = vector.shape_cast %76 : vector<1x80x160xbf16> to vector<80x160xbf16>
    %cst_50 = arith.constant dense<0.000000e+00> : vector<104x160xf32>
    %78 = tpu.matmul %75, %77, %cst_50 {dimension_numbers = #tpu.dot_dimension_numbers<[1], [0], [0], [1], [0, 0, 1, 1], [], []>} : vector<104x80xbf16>, vector<80x160xbf16>, vector<104x160xf32> -> vector<104x160xf32>
    %79 = vector.extract_strided_slice %73 {offsets = [8, 0], sizes = [104, 80], strides = [1, 1]} : vector<120x80xf32> to vector<104x80xf32>
    %80 = arith.truncf %79 : vector<104x80xf32> to vector<104x80xbf16>
    %c1_51 = arith.constant 1 : index
    %c0_52 = arith.constant 0 : index
    %c0_53 = arith.constant 0 : index
    %81 = vector.load %arg8[%c1_51, %c0_52, %c0_53] : memref<3x80x160xbf16, #tpu.memory_space<vmem>>, vector<1x80x160xbf16>
    %82 = vector.shape_cast %81 : vector<1x80x160xbf16> to vector<80x160xbf16>
    %cst_54 = arith.constant dense<0.000000e+00> : vector<104x160xf32>
    %83 = tpu.matmul %80, %82, %cst_54 {dimension_numbers = #tpu.dot_dimension_numbers<[1], [0], [0], [1], [0, 0, 1, 1], [], []>} : vector<104x80xbf16>, vector<80x160xbf16>, vector<104x160xf32> -> vector<104x160xf32>
    %84 = arith.addf %78, %83 : vector<104x160xf32>
    %85 = vector.extract_strided_slice %73 {offsets = [16, 0], sizes = [104, 80], strides = [1, 1]} : vector<120x80xf32> to vector<104x80xf32>
    %86 = arith.truncf %85 : vector<104x80xf32> to vector<104x80xbf16>
    %c2_55 = arith.constant 2 : index
    %c0_56 = arith.constant 0 : index
    %c0_57 = arith.constant 0 : index
    %87 = vector.load %arg8[%c2_55, %c0_56, %c0_57] : memref<3x80x160xbf16, #tpu.memory_space<vmem>>, vector<1x80x160xbf16>
    %88 = vector.shape_cast %87 : vector<1x80x160xbf16> to vector<80x160xbf16>
    %cst_58 = arith.constant dense<0.000000e+00> : vector<104x160xf32>
    %89 = tpu.matmul %86, %88, %cst_58 {dimension_numbers = #tpu.dot_dimension_numbers<[1], [0], [0], [1], [0, 0, 1, 1], [], []>} : vector<104x80xbf16>, vector<80x160xbf16>, vector<104x160xf32> -> vector<104x160xf32>
    %90 = arith.addf %84, %89 : vector<104x160xf32>
    %c0_59 = arith.constant 0 : index
    %c0_60 = arith.constant 0 : index
    %91 = vector.load %arg9[%c0_59, %c0_60] : memref<1x160xf32, #tpu.memory_space<vmem>>, vector<1x160xf32>
    %92 = vector.broadcast %91 : vector<1x160xf32> to vector<104x160xf32>
    %93 = arith.addf %90, %92 : vector<104x160xf32>
    %cst_61 = arith.constant 0.000000e+00 : f32
    %94 = vector.broadcast %cst_61 : f32 to vector<104x160xf32>
    %95 = arith.cmpf oge, %93, %94 : vector<104x160xf32>
    %cst_62 = arith.constant 0.00999999977 : f32
    %96 = vector.broadcast %cst_62 : f32 to vector<104x160xf32>
    %97 = arith.mulf %96, %93 : vector<104x160xf32>
    %98 = arith.select %95, %93, %97 : vector<104x160xi1>, vector<104x160xf32>
    %99 = vector.shape_cast %98 : vector<104x160xf32> to vector<13x8x160xf32>
    %c0_63 = arith.constant 0 : index
    %c0_64 = arith.constant 0 : index
    %c0_65 = arith.constant 0 : index
    %100 = vector.load %arg10[%c0_63, %c0_64, %c0_65] : memref<1x1x160xf32, #tpu.memory_space<vmem>>, vector<1x1x160xf32>
    %101 = vector.broadcast %100 : vector<1x1x160xf32> to vector<13x8x160xf32>
    %102 = arith.mulf %99, %101 : vector<13x8x160xf32>
    %cst_66 = arith.constant dense<0.000000e+00> : vector<13x8xf32>
    %103 = vector.multi_reduction <add>, %102, %cst_66 [2] : vector<13x8x160xf32> to vector<13x8xf32>
    %c0_67 = arith.constant 0 : index
    %c0_68 = arith.constant 0 : index
    %104 = vector.load %arg11[%c0_67, %c0_68] : memref<1x1xf32, #tpu.memory_space<vmem>>, vector<1x1xf32>
    %105 = vector.broadcast %104 : vector<1x1xf32> to vector<13x8xf32>
    %106 = arith.addf %103, %105 : vector<13x8xf32>
    %cst_69 = arith.constant 0.000000e+00 : f32
    %107 = vector.broadcast %cst_69 : f32 to vector<13x8xf32>
    %108 = arith.cmpf oge, %106, %107 : vector<13x8xf32>
    %cst_70 = arith.constant 0.00999999977 : f32
    %109 = vector.broadcast %cst_70 : f32 to vector<13x8xf32>
    %110 = arith.mulf %109, %106 : vector<13x8xf32>
    %111 = arith.select %108, %106, %110 : vector<13x8xi1>, vector<13x8xf32>
    %112 = tpu.transpose %111, [1, 0] : vector<13x8xf32> -> vector<8x13xf32>
    %113 = arith.truncf %112 : vector<8x13xf32> to vector<8x13xbf16>
    %c0_71 = arith.constant 0 : index
    %c0_72 = arith.constant 0 : index
    %114 = vector.load %arg12[%c0_71, %c0_72] : memref<13x512xbf16, #tpu.memory_space<vmem>>, vector<13x512xbf16>
    %cst_73 = arith.constant dense<0.000000e+00> : vector<8x512xf32>
    %115 = tpu.matmul %113, %114, %cst_73 {dimension_numbers = #tpu.dot_dimension_numbers<[1], [0], [0], [1], [0, 0, 1, 1], [], []>} : vector<8x13xbf16>, vector<13x512xbf16>, vector<8x512xf32> -> vector<8x512xf32>
    %cst_74 = arith.constant 0.000000e+00 : f32
    %116 = vector.broadcast %cst_74 : f32 to vector<8x512xf32>
    %117 = arith.cmpf oge, %115, %116 : vector<8x512xf32>
    %cst_75 = arith.constant 0.00999999977 : f32
    %118 = vector.broadcast %cst_75 : f32 to vector<8x512xf32>
    %119 = arith.mulf %118, %115 : vector<8x512xf32>
    %120 = arith.select %117, %115, %119 : vector<8x512xi1>, vector<8x512xf32>
    %121 = arith.truncf %120 : vector<8x512xf32> to vector<8x512xbf16>
    %c0_76 = arith.constant 0 : index
    %c0_77 = arith.constant 0 : index
    %122 = vector.load %arg13[%c0_76, %c0_77] : memref<512x512xbf16, #tpu.memory_space<vmem>>, vector<512x512xbf16>
    %cst_78 = arith.constant dense<0.000000e+00> : vector<8x512xf32>
    %123 = tpu.matmul %121, %122, %cst_78 {dimension_numbers = #tpu.dot_dimension_numbers<[1], [0], [0], [1], [0, 0, 1, 1], [], []>} : vector<8x512xbf16>, vector<512x512xbf16>, vector<8x512xf32> -> vector<8x512xf32>
    %cst_79 = arith.constant 0.000000e+00 : f32
    %124 = vector.broadcast %cst_79 : f32 to vector<8x512xf32>
    %125 = arith.maximumf %123, %124 : vector<8x512xf32>
    %126 = arith.truncf %125 : vector<8x512xf32> to vector<8x512xbf16>
    %c0_80 = arith.constant 0 : index
    %c0_81 = arith.constant 0 : index
    %127 = vector.load %arg14[%c0_80, %c0_81] : memref<512x128xbf16, #tpu.memory_space<vmem>>, vector<512x128xbf16>
    %cst_82 = arith.constant dense<0.000000e+00> : vector<8x128xf32>
    %128 = tpu.matmul %126, %127, %cst_82 {dimension_numbers = #tpu.dot_dimension_numbers<[1], [0], [0], [1], [0, 0, 1, 1], [], []>} : vector<8x512xbf16>, vector<512x128xbf16>, vector<8x128xf32> -> vector<8x128xf32>
    %c0_83 = arith.constant 0 : index
    %c0_84 = arith.constant 0 : index
    %129 = vector.load %arg15[%c0_83, %c0_84] : memref<1x128xf32, #tpu.memory_space<vmem>>, vector<1x128xf32>
    %130 = vector.broadcast %129 : vector<1x128xf32> to vector<8x128xf32>
    %131 = arith.addf %128, %130 : vector<8x128xf32>
    %cst_85 = arith.constant 0.000000e+00 : f32
    %132 = vector.broadcast %cst_85 : f32 to vector<8x128xf32>
    %133 = arith.subf %132, %131 : vector<8x128xf32>
    %134 = math.exp %133 : vector<8x128xf32>
    %cst_86 = arith.constant 1.000000e+00 : f32
    %135 = vector.broadcast %cst_86 : f32 to vector<8x128xf32>
    %136 = arith.addf %135, %134 : vector<8x128xf32>
    %137 = tpu.reciprocal %136 {approx = true} : vector<8x128xf32> -> vector<8x128xf32>
    %c0_87 = arith.constant 0 : index
    %c0_88 = arith.constant 0 : index
    %138 = vector.load %arg16[%c0_87, %c0_88] : memref<8x128xf32, #tpu.memory_space<vmem>>, vector<8x128xf32>
    tpu.vector_store %arg16[%c0_87, %c0_88], %137 {strides = array<i32>} : memref<8x128xf32, #tpu.memory_space<vmem>>, vector<8x128xf32>,
    return
  }
  func.func @transform_0(%arg0: i32) -> (i32, i32, i32) {
    %c0_i32 = arith.constant 0 : i32
    %c0_i32_0 = arith.constant 0 : i32
    %c0_i32_1 = arith.constant 0 : i32
    return %arg0, %c0_i32, %c0_i32_0 : i32, i32, i32
  }
  func.func @transform_1(%arg0: i32) -> (i32, i32, i32) {
    %c0_i32 = arith.constant 0 : i32
    %c0_i32_0 = arith.constant 0 : i32
    %c0_i32_1 = arith.constant 0 : i32
    %c0_i32_2 = arith.constant 0 : i32
    return %c0_i32, %c0_i32_0, %c0_i32_1 : i32, i32, i32
  }
  func.func @transform_2(%arg0: i32) -> (i32, i32) {
    %c0_i32 = arith.constant 0 : i32
    %c0_i32_0 = arith.constant 0 : i32
    %c0_i32_1 = arith.constant 0 : i32
    return %c0_i32, %c0_i32_0 : i32, i32
  }
  func.func @transform_3(%arg0: i32) -> (i32, i32, i32) {
    %c0_i32 = arith.constant 0 : i32
    %c0_i32_0 = arith.constant 0 : i32
    %c0_i32_1 = arith.constant 0 : i32
    %c0_i32_2 = arith.constant 0 : i32
    return %c0_i32, %c0_i32_0, %c0_i32_1 : i32, i32, i32
  }
  func.func @transform_4(%arg0: i32) -> (i32, i32) {
    %c0_i32 = arith.constant 0 : i32
    %c0_i32_0 = arith.constant 0 : i32
    %c0_i32_1 = arith.constant 0 : i32
    return %c0_i32, %c0_i32_0 : i32, i32
  }
  func.func @transform_5(%arg0: i32) -> (i32, i32, i32) {
    %c0_i32 = arith.constant 0 : i32
    %c0_i32_0 = arith.constant 0 : i32
    %c0_i32_1 = arith.constant 0 : i32
    %c0_i32_2 = arith.constant 0 : i32
    return %c0_i32, %c0_i32_0, %c0_i32_1 : i32, i32, i32
  }
  func.func @transform_6(%arg0: i32) -> (i32, i32) {
    %c0_i32 = arith.constant 0 : i32
    %c0_i32_0 = arith.constant 0 : i32
    %c0_i32_1 = arith.constant 0 : i32
    return %c0_i32, %c0_i32_0 : i32, i32
  }
  func.func @transform_7(%arg0: i32) -> (i32, i32, i32) {
    %c0_i32 = arith.constant 0 : i32
    %c0_i32_0 = arith.constant 0 : i32
    %c0_i32_1 = arith.constant 0 : i32
    %c0_i32_2 = arith.constant 0 : i32
    return %c0_i32, %c0_i32_0, %c0_i32_1 : i32, i32, i32
  }
  func.func @transform_8(%arg0: i32) -> (i32, i32) {
    %c0_i32 = arith.constant 0 : i32
    %c0_i32_0 = arith.constant 0 : i32
    %c0_i32_1 = arith.constant 0 : i32
    return %c0_i32, %c0_i32_0 : i32, i32
  }
  func.func @transform_9(%arg0: i32) -> (i32, i32, i32) {
    %c0_i32 = arith.constant 0 : i32
    %c0_i32_0 = arith.constant 0 : i32
    %c0_i32_1 = arith.constant 0 : i32
    %c0_i32_2 = arith.constant 0 : i32
    return %c0_i32, %c0_i32_0, %c0_i32_1 : i32, i32, i32
  }
  func.func @transform_10(%arg0: i32) -> (i32, i32) {
    %c0_i32 = arith.constant 0 : i32
    %c0_i32_0 = arith.constant 0 : i32
    %c0_i32_1 = arith.constant 0 : i32
    return %c0_i32, %c0_i32_0 : i32, i32
  }
  func.func @transform_11(%arg0: i32) -> (i32, i32) {
    %c0_i32 = arith.constant 0 : i32
    %c0_i32_0 = arith.constant 0 : i32
    %c0_i32_1 = arith.constant 0 : i32
    return %c0_i32, %c0_i32_0 : i32, i32
  }
  func.func @transform_12(%arg0: i32) -> (i32, i32) {
    %c0_i32 = arith.constant 0 : i32
    %c0_i32_0 = arith.constant 0 : i32
    %c0_i32_1 = arith.constant 0 : i32
    return %c0_i32, %c0_i32_0 : i32, i32
  }
  func.func @transform_13(%arg0: i32) -> (i32, i32) {
    %c0_i32 = arith.constant 0 : i32
    %c0_i32_0 = arith.constant 0 : i32
    %c0_i32_1 = arith.constant 0 : i32
    return %c0_i32, %c0_i32_0 : i32, i32
  }
  func.func @transform_14(%arg0: i32) -> (i32, i32) {
    %c0_i32 = arith.constant 0 : i32
    %c0_i32_0 = arith.constant 0 : i32
    %c0_i32_1 = arith.constant 0 : i32
    return %c0_i32, %c0_i32_0 : i32, i32
  }
  func.func @transform_15(%arg0: i32) -> (i32, i32) {
    %c0_i32 = arith.constant 0 : i32
    %c0_i32_0 = arith.constant 0 : i32
    return %arg0, %c0_i32 : i32, i32
  }
}

</mosaic_0001>

<llo_original>
// kernel: tpu_custom_call.1
$region0: #{tpu_custom_call.1}
  #allocation0 [shape = 'u32[]', space=smem, size = 0x4, offset = 0x4, fixed_abs, tag = 'smem constant byte address 0x4 - core index']
  #allocation1 [shape = 'u32[72,128]{1,0:T(1,128)}', space=vmem, size = 0x9000, scoped, tag = 'internal scratch']
  #allocation2 [shape = 'f32[1,1]{1,0:T(1,128)S(1)}', space=vmem, size = 0x200, scoped, tag = 'scoped memory for tpu_custom_call.1']
  %s0 = inlined_call_operand.vmem [shape: bf16[1,168,4], index: 0, kind: input, shape index: {}]
  %s1 = inlined_call_operand.hbm [shape: bf16[3,4,20], index: 1, kind: input, shape index: {}]
  %s2 = inlined_call_operand.hbm [shape: f32[1,20], index: 2, kind: input, shape index: {}]
  %s3 = inlined_call_operand.hbm [shape: bf16[3,20,40], index: 3, kind: input, shape index: {}]
  %s4 = inlined_call_operand.hbm [shape: f32[1,40], index: 4, kind: input, shape index: {}]
  %s5 = inlined_call_operand.vmem [shape: bf16[3,40,80], index: 5, kind: input, shape index: {}]
  %s6 = inlined_call_operand.vmem [shape: f32[1,80], index: 6, kind: input, shape index: {}]
  %s7 = inlined_call_operand.hbm [shape: bf16[3,80,160], index: 7, kind: input, shape index: {}]
  %s8 = inlined_call_operand.vmem [shape: f32[1,160], index: 8, kind: input, shape index: {}]
  %s9 = inlined_call_operand.vmem [shape: f32[1,1,160], index: 9, kind: input, shape index: {}]
  %s10 = inlined_call_operand.<no memory space> [shape: f32[1,1], index: 10, kind: input, shape index: {}]
  %s11 = inlined_call_operand.vmem [shape: bf16[13,512], index: 11, kind: input, shape index: {}]
  %s12 = inlined_call_operand.hbm [shape: bf16[512,512], index: 12, kind: input, shape index: {}]
  %s13 = inlined_call_operand.hbm [shape: bf16[512,128], index: 13, kind: input, shape index: {}]
  %s14 = inlined_call_operand.vmem [shape: f32[1,128], index: 14, kind: input, shape index: {}]
  %s15 = inlined_call_operand.hbm [shape: f32[8,128], index: 15, kind: output, shape index: {}]
  %s16 = sld [smem:[#allocation0]]
  $region98: #{tpu_custom_call.1} parent=0
    _
  %s18 = ssub.s32 1, %s16
  %s19 = scalar_select 0, %s18, %s16
  %v20 = vstv %s10
  %21 = vst [vmem:[#allocation2] sm:$0x1] %v20
  $region1: #{tpu_custom_call.1} parent=0
    #allocation3 [shape = 'u8[3072]{0}', space=vmem, size = 0xc00, scoped, tag = 'input window, operand 1, single buffered']
    #allocation4 [shape = 's32[1]{0}', space=sflag, size = 0x4, scoped, tag = 'scoped memory for tpu_custom_call.1']
    #allocation5 [shape = 's32[1]{0}', space=sflag, size = 0x4, scoped, tag = 'scoped memory for tpu_custom_call.1']
    #allocation6 [shape = 'u8[512]{0}', space=vmem, size = 0x400, scoped, tag = 'input window, operand 2, single buffered']
    #allocation7 [shape = 's32[1]{0}', space=sflag, size = 0x4, scoped, tag = 'scoped memory for tpu_custom_call.1']
    #allocation8 [shape = 'u8[18432]{0}', space=vmem, size = 0x4800, scoped, tag = 'input window, operand 3, single buffered']
    #allocation9 [shape = 'u8[512]{0}', space=vmem, size = 0x400, scoped, tag = 'input window, operand 4, single buffered']
    #allocation10 [shape = 's32[1]{0}', space=sflag, size = 0x4, scoped, tag = 'scoped memory for tpu_custom_call.1']
    #allocation11 [shape = 'u8[122880]{0}', space=vmem, size = 0x1e000, scoped, tag = 'input window, operand 7, single buffered']
    #allocation12 [shape = 'u8[524288]{0}', space=vmem, size = 0x80000, scoped, tag = 'input window, operand 12, single buffered']
    #allocation13 [shape = 's32[1]{0}', space=sflag, size = 0x4, scoped, tag = 'scoped memory for tpu_custom_call.1']
    #allocation14 [shape = 'u8[131072]{0}', space=vmem, size = 0x20000, scoped, tag = 'input window, operand 13, single buffered']
    #allocation15 [shape = 'u8[4096]{0}', space=vmem, size = 0x1000, scoped, tag = 'output window, operand 0, single buffered']
    %22 = vsyncpa [#allocation4], 0
    %23 = vsyncpa [#allocation7], 0
    %24 = vsyncpa [#allocation10], 0
    %25 = vsyncpa [#allocation13], 0
    %26 = vsyncpa [#allocation5], 0
    // Predicated region
    $region2: #{tpu_custom_call.1} parent=1 // pred_check
      _
    $region3: #{tpu_custom_call.1} parent=1 // pred_check_branch
      %28 = sbr.rel (0) target = $region5
    $region4: #{tpu_custom_call.1} parent=1 // pred_region
      _
    $region5: #{tpu_custom_call.1} parent=1 // pred_fallthru
      _
    // Predicated region
    $region6: #{tpu_custom_call.1} parent=1 // pred_check
      _
    $region7: #{tpu_custom_call.1} parent=1 // pred_check_branch
      %30 = sbr.rel (0) target = $region9
    $region8: #{tpu_custom_call.1} parent=1 // pred_region
      %32 = vsyncadd [#allocation4], 0
      %s33 = sshll.u32 %s1, 4
      %s34 = int_to_ptr.hbm [resolvable:$true] %s33
      %s35 = sshll.u32 [#allocation3], 4
      %s36 = int_to_ptr.vmem [resolvable:$true] %s35
      %41 = dma.hbm_to_vmem [thread:$0]  %s34, 96, %s36, [#allocation4], 32, 32, 2
    $region9: #{tpu_custom_call.1} parent=1 // pred_fallthru
      _
    // Predicated region
    $region10: #{tpu_custom_call.1} parent=1 // pred_check
      _
    $region11: #{tpu_custom_call.1} parent=1 // pred_check_branch
      %43 = sbr.rel (0) target = $region13
    $region12: #{tpu_custom_call.1} parent=1 // pred_region
      %45 = vsyncadd [#allocation7], 0
      %s47 = sshll.u32 %s2, 4
      %s48 = int_to_ptr.hbm [resolvable:$true] %s47
      %s49 = sshll.u32 [#allocation6], 4
      %s50 = int_to_ptr.vmem [resolvable:$true] %s49
      %52 = dma.hbm_to_vmem [thread:$0]  %s48, 16, %s50, [#allocation7]
    $region13: #{tpu_custom_call.1} parent=1 // pred_fallthru
      _
    // Predicated region
    $region14: #{tpu_custom_call.1} parent=1 // pred_check
      _
    $region15: #{tpu_custom_call.1} parent=1 // pred_check_branch
      %54 = sbr.rel (0) target = $region17
    $region16: #{tpu_custom_call.1} parent=1 // pred_region
      %56 = vsyncadd [#allocation7], 0
      %s57 = sshll.u32 %s3, 4
      %s58 = int_to_ptr.hbm [resolvable:$true] %s57
      %s59 = sshll.u32 [#allocation8], 4
      %s60 = int_to_ptr.vmem [resolvable:$true] %s59
      %65 = dma.hbm_to_vmem [thread:$0]  %s58, 576, %s60, [#allocation7], 64, 64, 4
    $region17: #{tpu_custom_call.1} parent=1 // pred_fallthru
      _
    // Predicated region
    $region18: #{tpu_custom_call.1} parent=1 // pred_check
      _
    $region19: #{tpu_custom_call.1} parent=1 // pred_check_branch
      %67 = sbr.rel (0) target = $region21
    $region20: #{tpu_custom_call.1} parent=1 // pred_region
      %69 = vsyncadd [#allocation10], 0
      %s71 = sshll.u32 %s4, 4
      %s72 = int_to_ptr.hbm [resolvable:$true] %s71
      %s73 = sshll.u32 [#allocation9], 4
      %s74 = int_to_ptr.vmem [resolvable:$true] %s73
      %76 = dma.hbm_to_vmem [thread:$0]  %s72, 16, %s74, [#allocation10]
    $region21: #{tpu_custom_call.1} parent=1 // pred_fallthru
      _
    // Predicated region
    $region22: #{tpu_custom_call.1} parent=1 // pred_check
      _
    $region23: #{tpu_custom_call.1} parent=1 // pred_check_branch
      %78 = sbr.rel (0) target = $region25
    $region24: #{tpu_custom_call.1} parent=1 // pred_region
      _
    $region25: #{tpu_custom_call.1} parent=1 // pred_fallthru
      _
    // Predicated region
    $region26: #{tpu_custom_call.1} parent=1 // pred_check
      _
    $region27: #{tpu_custom_call.1} parent=1 // pred_check_branch
      %80 = sbr.rel (0) target = $region29
    $region28: #{tpu_custom_call.1} parent=1 // pred_region
      _
    $region29: #{tpu_custom_call.1} parent=1 // pred_fallthru
      _
    // Predicated region
    $region30: #{tpu_custom_call.1} parent=1 // pred_check
      _
    $region31: #{tpu_custom_call.1} parent=1 // pred_check_branch
      %82 = sbr.rel (0) target = $region33
    $region32: #{tpu_custom_call.1} parent=1 // pred_region
      %84 = vsyncadd [#allocation10], 0
      %s85 = sshll.u32 %s7, 4
      %s86 = int_to_ptr.hbm [resolvable:$true] %s85
      %s87 = sshll.u32 [#allocation11], 4
      %s88 = int_to_ptr.vmem [resolvable:$true] %s87
      %93 = dma.hbm_to_vmem [thread:$0]  %s86, 3840, %s88, [#allocation10], 128, 128, 8
    $region33: #{tpu_custom_call.1} parent=1 // pred_fallthru
      _
    // Predicated region
    $region34: #{tpu_custom_call.1} parent=1 // pred_check
      _
    $region35: #{tpu_custom_call.1} parent=1 // pred_check_branch
      %95 = sbr.rel (0) target = $region37
    $region36: #{tpu_custom_call.1} parent=1 // pred_region
      _
    $region37: #{tpu_custom_call.1} parent=1 // pred_fallthru
      _
    // Predicated region
    $region38: #{tpu_custom_call.1} parent=1 // pred_check
      _
    $region39: #{tpu_custom_call.1} parent=1 // pred_check_branch
      %97 = sbr.rel (0) target = $region41
    $region40: #{tpu_custom_call.1} parent=1 // pred_region
      _
    $region41: #{tpu_custom_call.1} parent=1 // pred_fallthru
      _
    // Predicated region
    $region42: #{tpu_custom_call.1} parent=1 // pred_check
      _
    $region43: #{tpu_custom_call.1} parent=1 // pred_check_branch
      %99 = sbr.rel (0) target = $region45
    $region44: #{tpu_custom_call.1} parent=1 // pred_region
      _
    $region45: #{tpu_custom_call.1} parent=1 // pred_fallthru
      _
    // Predicated region
    $region46: #{tpu_custom_call.1} parent=1 // pred_check
      _
    $region47: #{tpu_custom_call.1} parent=1 // pred_check_branch
      %101 = sbr.rel (0) target = $region49
    $region48: #{tpu_custom_call.1} parent=1 // pred_region
      _
    $region49: #{tpu_custom_call.1} parent=1 // pred_fallthru
      _
    // Predicated region
    $region50: #{tpu_custom_call.1} parent=1 // pred_check
      _
    $region51: #{tpu_custom_call.1} parent=1 // pred_check_branch
      %103 = sbr.rel (0) target = $region53
    $region52: #{tpu_custom_call.1} parent=1 // pred_region
      %105 = vsyncadd [#allocation13], 0
      %s106 = sshll.u32 %s12, 4
      %s107 = int_to_ptr.hbm [resolvable:$true] %s106
      %s108 = sshll.u32 [#allocation12], 4
      %s109 = int_to_ptr.vmem [resolvable:$true] %s108
      %114 = dma.hbm_to_vmem [thread:$0]  %s107, 16384, %s109, [#allocation13], 256, 256, 16
    $region53: #{tpu_custom_call.1} parent=1 // pred_fallthru
      _
    // Predicated region
    $region54: #{tpu_custom_call.1} parent=1 // pred_check
      _
    $region55: #{tpu_custom_call.1} parent=1 // pred_check_branch
      %116 = sbr.rel (0) target = $region57
    $region56: #{tpu_custom_call.1} parent=1 // pred_region
      %118 = vsyncadd [#allocation13], 0
      %s119 = sshll.u32 %s13, 4
      %s120 = int_to_ptr.hbm [resolvable:$true] %s119
      %s121 = sshll.u32 [#allocation14], 4
      %s122 = int_to_ptr.vmem [resolvable:$true] %s121
      %127 = dma.hbm_to_vmem [thread:$0]  %s120, 4096, %s122, [#allocation13], 64, 64, 4
    $region57: #{tpu_custom_call.1} parent=1 // pred_fallthru
      _
    // Predicated region
    $region58: #{tpu_custom_call.1} parent=1 // pred_check
      _
    $region59: #{tpu_custom_call.1} parent=1 // pred_check_branch
      %129 = sbr.rel (0) target = $region61
    $region60: #{tpu_custom_call.1} parent=1 // pred_region
      _
    $region61: #{tpu_custom_call.1} parent=1 // pred_fallthru
      _
    // Predicated region
    $region62: #{tpu_custom_call.1} parent=1 // pred_check
      _
    $region63: #{tpu_custom_call.1} parent=1 // pred_check_branch
      %131 = sbr.rel (0) target = $region65
    $region64: #{tpu_custom_call.1} parent=1 // pred_region
      %133 = dma.done [#allocation4], 96
    $region65: #{tpu_custom_call.1} parent=1 // pred_fallthru
      _
    // Predicated region
    $region66: #{tpu_custom_call.1} parent=1 // pred_check
      _
    $region67: #{tpu_custom_call.1} parent=1 // pred_check_branch
      %135 = sbr.rel (0) target = $region69
    $region68: #{tpu_custom_call.1} parent=1 // pred_region
      %137 = dma.done [#allocation7], 16
    $region69: #{tpu_custom_call.1} parent=1 // pred_fallthru
      _
    // Predicated region
    $region70: #{tpu_custom_call.1} parent=1 // pred_check
      _
    $region71: #{tpu_custom_call.1} parent=1 // pred_check_branch
      %139 = sbr.rel (0) target = $region73
    $region72: #{tpu_custom_call.1} parent=1 // pred_region
      %141 = dma.done [#allocation7], 576
    $region73: #{tpu_custom_call.1} parent=1 // pred_fallthru
      _
    // Predicated region
    $region74: #{tpu_custom_call.1} parent=1 // pred_check
      _
    $region75: #{tpu_custom_call.1} parent=1 // pred_check_branch
      %143 = sbr.rel (0) target = $region77
    $region76: #{tpu_custom_call.1} parent=1 // pred_region
      %145 = dma.done [#allocation10], 16
    $region77: #{tpu_custom_call.1} parent=1 // pred_fallthru
      _
    // Predicated region
    $region78: #{tpu_custom_call.1} parent=1 // pred_check
      _
    $region79: #{tpu_custom_call.1} parent=1 // pred_check_branch
      %147 = sbr.rel (0) target = $region81
    $region80: #{tpu_custom_call.1} parent=1 // pred_region
      %149 = dma.done [#allocation10], 3840
    $region81: #{tpu_custom_call.1} parent=1 // pred_fallthru
      _
    // Predicated region
    $region82: #{tpu_custom_call.1} parent=1 // pred_check
      _
    $region83: #{tpu_custom_call.1} parent=1 // pred_check_branch
      %151 = sbr.rel (0) target = $region85
    $region84: #{tpu_custom_call.1} parent=1 // pred_region
      %153 = dma.done [#allocation13], 16384
    $region85: #{tpu_custom_call.1} parent=1 // pred_fallthru
      _
    // Predicated region
    $region86: #{tpu_custom_call.1} parent=1 // pred_check
      _
    $region87: #{tpu_custom_call.1} parent=1 // pred_check_branch
      %155 = sbr.rel (0) target = $region89
    $region88: #{tpu_custom_call.1} parent=1 // pred_region
      %157 = dma.done [#allocation13], 4096
    $region89: #{tpu_custom_call.1} parent=1 // pred_fallthru
      _
    %v159 = vld [vmem:[%s0] sm:$0xf]
    %v160 = vld [vmem:[%s0 + $0x4] sm:$0xf]
    %v161 = vld [vmem:[%s0 + $0x8] sm:$0xf]
    %v162 = vld [vmem:[%s0 + $0xc] sm:$0xf]
    %v163 = vld [vmem:[%s0 + $0x10] sm:$0xf]
    %v164 = vld [vmem:[%s0 + $0x14] sm:$0xf]
    %v165 = vld [vmem:[%s0 + $0x18] sm:$0xf]
    %v166 = vld [vmem:[%s0 + $0x1c] sm:$0xf]
    %v167 = vld [vmem:[%s0 + $0x20] sm:$0xf]
    %v168 = vld [vmem:[%s0 + $0x24] sm:$0xf]
    %v169 = vld [vmem:[%s0 + $0x28] sm:$0xf]
    %v170 = vld [vmem:[%s0 + $0x2c] sm:$0xf]
    %v171 = vld [vmem:[%s0 + $0x30] sm:$0xf]
    %v172 = vld [vmem:[%s0 + $0x34] sm:$0xf]
    %v173 = vld [vmem:[%s0 + $0x38] sm:$0xf]
    %v174 = vld [vmem:[%s0 + $0x3c] sm:$0xf]
    %v175 = vld [vmem:[%s0 + $0x40] sm:$0xf]
    %v176 = vld [vmem:[%s0 + $0x44] sm:$0xf]
    %v177 = vld [vmem:[%s0 + $0x48] sm:$0xf]
    %v178 = vld [vmem:[%s0 + $0x4c] sm:$0xf]
    %v179 = vld [vmem:[%s0 + $0x50] sm:$0xf]
    %v180 = vld [vmem:[#allocation3] sm:$0x3]
    %s181 = scalar_lea.vmem [#allocation3], 2
    %v182 = vld [vmem:[%s181] sm:$0x3]
    %v202 = vunpack.c.l.b16 %v160
    %v203 = vunpack.c.l.b16 %v161
    %v204 = vunpack.c.l.b16 %v162
    %v205 = vunpack.c.l.b16 %v163
    %v206 = vunpack.c.l.b16 %v164
    %v207 = vunpack.c.l.b16 %v165
    %v208 = vunpack.c.l.b16 %v166
    %v209 = vunpack.c.l.b16 %v167
    %v210 = vunpack.c.l.b16 %v168
    %v211 = vunpack.c.l.b16 %v169
    %v212 = vunpack.c.l.b16 %v170
    %v213 = vunpack.c.l.b16 %v171
    %v214 = vunpack.c.l.b16 %v172
    %v215 = vunpack.c.l.b16 %v173
    %v216 = vunpack.c.l.b16 %v174
    %v217 = vunpack.c.l.b16 %v175
    %v218 = vunpack.c.l.b16 %v176
    %v219 = vunpack.c.l.b16 %v177
    %v220 = vunpack.c.l.b16 %v178
    %v221 = vpack.c.b16 %v203, %v202
    %v222 = vpack.c.b16 %v205, %v204
    %v223 = vpack.c.b16 %v207, %v206
    %v224 = vpack.c.b16 %v209, %v208
    %v225 = vpack.c.b16 %v211, %v210
    %v226 = vpack.c.b16 %v213, %v212
    %v227 = vpack.c.b16 %v215, %v214
    %v228 = vpack.c.b16 %v217, %v216
    %v229 = vpack.c.b16 %v219, %v218
    %v230 = vpack.c.b16 %v220, %v220
    %vm231 = vcmask 31744
    %v233 = vsel %vm231, %v221, 0
    %v236 = vsel %vm231, %v222, 0
    %v239 = vsel %vm231, %v223, 0
    %v242 = vsel %vm231, %v224, 0
    %v245 = vsel %vm231, %v225, 0
    %v248 = vsel %vm231, %v226, 0
    %v251 = vsel %vm231, %v227, 0
    %v254 = vsel %vm231, %v228, 0
    %v257 = vsel %vm231, %v229, 0
    %v260 = vsel %vm231, %v230, 0
    %vm262 = vcmask 1041408
    %v264 = vsel %vm262, %v182, 0
    %266 = vmatpush.bf16.msra.mxu0 0
    %267 = vmatpush.bf16.msra.mxu0 0
    %268 = vmatpush.bf16.msra.mxu0 0
    %269 = vmatpush.bf16.msra.mxu0 0
    %270 = vmatpush.bf16.msra.mxu0 0
    %271 = vmatpush.bf16.msra.mxu0 0
    %272 = vmatpush.bf16.msra.mxu0 0
    %273 = vmatpush.bf16.msra.mxu0 %v264
    %274 = vmatmul.bf16.gmra.mxu0 %v233
    %v275 = vpop.f32.mrf.mxu0
    %v276 = vadd.f32 0.0, %v275
    %v277 = vpop.f32.mrf.mxu0
    %v278 = vadd.f32 0.0, %v277
    %279 = vmatmul.bf16.gmra.mxu0 %v236
    %v280 = vpop.f32.mrf.mxu0
    %v281 = vadd.f32 0.0, %v280
    %v282 = vpop.f32.mrf.mxu0
    %v283 = vadd.f32 0.0, %v282
    %284 = vmatmul.bf16.gmra.mxu0 %v239
    %v285 = vpop.f32.mrf.mxu0
    %v286 = vadd.f32 0.0, %v285
    %v287 = vpop.f32.mrf.mxu0
    %v288 = vadd.f32 0.0, %v287
    %289 = vmatmul.bf16.gmra.mxu0 %v242
    %v290 = vpop.f32.mrf.mxu0
    %v291 = vadd.f32 0.0, %v290
    %v292 = vpop.f32.mrf.mxu0
    %v293 = vadd.f32 0.0, %v292
    %294 = vmatmul.bf16.gmra.mxu0 %v245
    %v295 = vpop.f32.mrf.mxu0
    %v296 = vadd.f32 0.0, %v295
    %v297 = vpop.f32.mrf.mxu0
    %v298 = vadd.f32 0.0, %v297
    %299 = vmatmul.bf16.gmra.mxu0 %v248
    %v300 = vpop.f32.mrf.mxu0
    %v301 = vadd.f32 0.0, %v300
    %v302 = vpop.f32.mrf.mxu0
    %v303 = vadd.f32 0.0, %v302
    %304 = vmatmul.bf16.gmra.mxu0 %v251
    %v305 = vpop.f32.mrf.mxu0
    %v306 = vadd.f32 0.0, %v305
    %v307 = vpop.f32.mrf.mxu0
    %v308 = vadd.f32 0.0, %v307
    %309 = vmatmul.bf16.gmra.mxu0 %v254
    %v310 = vpop.f32.mrf.mxu0
    %v311 = vadd.f32 0.0, %v310
    %v312 = vpop.f32.mrf.mxu0
    %v313 = vadd.f32 0.0, %v312
    %314 = vmatmul.bf16.gmra.mxu0 %v257
    %v315 = vpop.f32.mrf.mxu0
    %v316 = vadd.f32 0.0, %v315
    %v317 = vpop.f32.mrf.mxu0
    %v318 = vadd.f32 0.0, %v317
    %319 = vmatmul.bf16.gmra.mxu0 %v260
    %v320 = vpop.f32.mrf.mxu0
    %v321 = vadd.f32 0.0, %v320
    %v322 = vpop.f32.mrf.mxu0
    %323 = vdwg.mxu0
    %v325 = vunpack.c.l.b16 %v159
    %v326 = vpack.c.b16 %v202, %v325
    %v327 = vpack.c.b16 %v204, %v203
    %v328 = vpack.c.b16 %v206, %v205
    %v329 = vpack.c.b16 %v208, %v207
    %v330 = vpack.c.b16 %v210, %v209
    %v331 = vpack.c.b16 %v212, %v211
    %v332 = vpack.c.b16 %v214, %v213
    %v333 = vpack.c.b16 %v216, %v215
    %v334 = vpack.c.b16 %v218, %v217
    %v335 = vpack.c.b16 %v219, %v219
    %v337 = vsel %vm231, %v326, 0
    %v340 = vsel %vm231, %v327, 0
    %v343 = vsel %vm231, %v328, 0
    %v346 = vsel %vm231, %v329, 0
    %v349 = vsel %vm231, %v330, 0
    %v352 = vsel %vm231, %v331, 0
    %v355 = vsel %vm231, %v332, 0
    %v358 = vsel %vm231, %v333, 0
    %v361 = vsel %vm231, %v334, 0
    %v364 = vsel %vm231, %v335, 0
    %v367 = vsel %vm262, %v180, 0
    %369 = vmatpush.bf16.msra.mxu0 0
    %370 = vmatpush.bf16.msra.mxu0 0
    %371 = vmatpush.bf16.msra.mxu0 0
    %372 = vmatpush.bf16.msra.mxu0 0
    %373 = vmatpush.bf16.msra.mxu0 0
    %374 = vmatpush.bf16.msra.mxu0 0
    %375 = vmatpush.bf16.msra.mxu0 0
    %376 = vmatpush.bf16.msra.mxu0 %v367
    %377 = vmatmul.bf16.gmra.mxu0 %v337
    %v378 = vpop.f32.mrf.mxu0
    %v379 = vadd.f32 %v276, %v378
    %v380 = vpop.f32.mrf.mxu0
    %v381 = vadd.f32 %v278, %v380
    %382 = vmatmul.bf16.gmra.mxu0 %v340
    %v383 = vpop.f32.mrf.mxu0
    %v384 = vadd.f32 %v281, %v383
    %v385 = vpop.f32.mrf.mxu0
    %v386 = vadd.f32 %v283, %v385
    %387 = vmatmul.bf16.gmra.mxu0 %v343
    %v388 = vpop.f32.mrf.mxu0
    %v389 = vadd.f32 %v286, %v388
    %v390 = vpop.f32.mrf.mxu0
    %v391 = vadd.f32 %v288, %v390
    %392 = vmatmul.bf16.gmra.mxu0 %v346
    %v393 = vpop.f32.mrf.mxu0
    %v394 = vadd.f32 %v291, %v393
    %v395 = vpop.f32.mrf.mxu0
    %v396 = vadd.f32 %v293, %v395
    %397 = vmatmul.bf16.gmra.mxu0 %v349
    %v398 = vpop.f32.mrf.mxu0
    %v399 = vadd.f32 %v296, %v398
    %v400 = vpop.f32.mrf.mxu0
    %v401 = vadd.f32 %v298, %v400
    %402 = vmatmul.bf16.gmra.mxu0 %v352
    %v403 = vpop.f32.mrf.mxu0
    %v404 = vadd.f32 %v301, %v403
    %v405 = vpop.f32.mrf.mxu0
    %v406 = vadd.f32 %v303, %v405
    %407 = vmatmul.bf16.gmra.mxu0 %v355
    %v408 = vpop.f32.mrf.mxu0
    %v409 = vadd.f32 %v306, %v408
    %v410 = vpop.f32.mrf.mxu0
    %v411 = vadd.f32 %v308, %v410
    %412 = vmatmul.bf16.gmra.mxu0 %v358
    %v413 = vpop.f32.mrf.mxu0
    %v414 = vadd.f32 %v311, %v413
    %v415 = vpop.f32.mrf.mxu0
    %v416 = vadd.f32 %v313, %v415
    %417 = vmatmul.bf16.gmra.mxu0 %v361
    %v418 = vpop.f32.mrf.mxu0
    %v419 = vadd.f32 %v316, %v418
    %v420 = vpop.f32.mrf.mxu0
    %v421 = vadd.f32 %v318, %v420
    %422 = vmatmul.bf16.gmra.mxu0 %v364
    %v423 = vpop.f32.mrf.mxu0
    %v424 = vadd.f32 %v321, %v423
    %v425 = vpop.f32.mrf.mxu0
    %426 = vdwg.mxu0
    %s427 = scalar_lea.vmem [#allocation3], 4
    %v428 = vld [vmem:[%s427] sm:$0x3]
    %v430 = vunpack.c.l.b16 %v179
    %v431 = vpack.c.b16 %v220, %v219
    %v432 = vpack.c.b16 %v430, %v430
    %v434 = vsel %vm231, %v431, 0
    %v437 = vsel %vm231, %v432, 0
    %v440 = vsel %vm262, %v428, 0
    %442 = vmatpush.bf16.msra.mxu0 0
    %443 = vmatpush.bf16.msra.mxu0 0
    %444 = vmatpush.bf16.msra.mxu0 0
    %445 = vmatpush.bf16.msra.mxu0 0
    %446 = vmatpush.bf16.msra.mxu0 0
    %447 = vmatpush.bf16.msra.mxu0 0
    %448 = vmatpush.bf16.msra.mxu0 0
    %449 = vmatpush.bf16.msra.mxu0 %v440
    %450 = vmatmul.bf16.gmra.mxu0 %v340
    %v451 = vpop.f32.mrf.mxu0
    %v452 = vadd.f32 0.0, %v451
    %v453 = vpop.f32.mrf.mxu0
    %v454 = vadd.f32 0.0, %v453
    %455 = vmatmul.bf16.gmra.mxu0 %v343
    %v456 = vpop.f32.mrf.mxu0
    %v457 = vadd.f32 0.0, %v456
    %v458 = vpop.f32.mrf.mxu0
    %v459 = vadd.f32 0.0, %v458
    %460 = vmatmul.bf16.gmra.mxu0 %v346
    %v461 = vpop.f32.mrf.mxu0
    %v462 = vadd.f32 0.0, %v461
    %v463 = vpop.f32.mrf.mxu0
    %v464 = vadd.f32 0.0, %v463
    %465 = vmatmul.bf16.gmra.mxu0 %v349
    %v466 = vpop.f32.mrf.mxu0
    %v467 = vadd.f32 0.0, %v466
    %v468 = vpop.f32.mrf.mxu0
    %v469 = vadd.f32 0.0, %v468
    %470 = vmatmul.bf16.gmra.mxu0 %v352
    %v471 = vpop.f32.mrf.mxu0
    %v472 = vadd.f32 0.0, %v471
    %v473 = vpop.f32.mrf.mxu0
    %v474 = vadd.f32 0.0, %v473
    %475 = vmatmul.bf16.gmra.mxu0 %v355
    %v476 = vpop.f32.mrf.mxu0
    %v477 = vadd.f32 0.0, %v476
    %v478 = vpop.f32.mrf.mxu0
    %v479 = vadd.f32 0.0, %v478
    %480 = vmatmul.bf16.gmra.mxu0 %v358
    %v481 = vpop.f32.mrf.mxu0
    %v482 = vadd.f32 0.0, %v481
    %v483 = vpop.f32.mrf.mxu0
    %v484 = vadd.f32 0.0, %v483
    %485 = vmatmul.bf16.gmra.mxu0 %v361
    %v486 = vpop.f32.mrf.mxu0
    %v487 = vadd.f32 0.0, %v486
    %v488 = vpop.f32.mrf.mxu0
    %v489 = vadd.f32 0.0, %v488
    %490 = vmatmul.bf16.gmra.mxu0 %v434
    %v491 = vpop.f32.mrf.mxu0
    %v492 = vadd.f32 0.0, %v491
    %v493 = vpop.f32.mrf.mxu0
    %v494 = vadd.f32 0.0, %v493
    %495 = vmatmul.bf16.gmra.mxu0 %v437
    %v496 = vpop.f32.mrf.mxu0
    %v497 = vadd.f32 0.0, %v496
    %v498 = vpop.f32.mrf.mxu0
    %499 = vdwg.mxu0
    %v500 = vadd.f32 %v379, %v452
    %v501 = vadd.f32 %v381, %v454
    %v502 = vadd.f32 %v384, %v457
    %v503 = vadd.f32 %v386, %v459
    %v504 = vadd.f32 %v389, %v462
    %v505 = vadd.f32 %v391, %v464
    %v506 = vadd.f32 %v394, %v467
    %v507 = vadd.f32 %v396, %v469
    %v508 = vadd.f32 %v399, %v472
    %v509 = vadd.f32 %v401, %v474
    %v510 = vadd.f32 %v404, %v477
    %v511 = vadd.f32 %v406, %v479
    %v512 = vadd.f32 %v409, %v482
    %v513 = vadd.f32 %v411, %v484
    %v514 = vadd.f32 %v414, %v487
    %v515 = vadd.f32 %v416, %v489
    %v516 = vadd.f32 %v419, %v492
    %v517 = vadd.f32 %v421, %v494
    %v518 = vadd.f32 %v424, %v497
    %v519 = vld [vmem:[#allocation6] sm:$0x1]
    %v521 = vperm.slane %v519, 0
    %v523 = vadd.f32 %v500, %v521
    %v524 = vadd.f32 %v501, %v521
    %v525 = vadd.f32 %v502, %v521
    %v526 = vadd.f32 %v503, %v521
    %v527 = vadd.f32 %v504, %v521
    %v528 = vadd.f32 %v505, %v521
    %v529 = vadd.f32 %v506, %v521
    %v530 = vadd.f32 %v507, %v521
    %v531 = vadd.f32 %v508, %v521
    %v532 = vadd.f32 %v509, %v521
    %v533 = vadd.f32 %v510, %v521
    %v534 = vadd.f32 %v511, %v521
    %v535 = vadd.f32 %v512, %v521
    %v536 = vadd.f32 %v513, %v521
    %v537 = vadd.f32 %v514, %v521
    %v538 = vadd.f32 %v515, %v521
    %v539 = vadd.f32 %v516, %v521
    %v540 = vadd.f32 %v517, %v521
    %v541 = vadd.f32 %v518, %v521
    %vm542 = vcmp.ge.f32.partialorder %v523, 0.0
    %vm543 = vcmp.ge.f32.partialorder %v524, 0.0
    %vm544 = vcmp.ge.f32.partialorder %v525, 0.0
    %vm545 = vcmp.ge.f32.partialorder %v526, 0.0
    %vm546 = vcmp.ge.f32.partialorder %v527, 0.0
    %vm547 = vcmp.ge.f32.partialorder %v528, 0.0
    %vm548 = vcmp.ge.f32.partialorder %v529, 0.0
    %vm549 = vcmp.ge.f32.partialorder %v530, 0.0
    %vm550 = vcmp.ge.f32.partialorder %v531, 0.0
    %vm551 = vcmp.ge.f32.partialorder %v532, 0.0
    %vm552 = vcmp.ge.f32.partialorder %v533, 0.0
    %vm553 = vcmp.ge.f32.partialorder %v534, 0.0
    %vm554 = vcmp.ge.f32.partialorder %v535, 0.0
    %vm555 = vcmp.ge.f32.partialorder %v536, 0.0
    %vm556 = vcmp.ge.f32.partialorder %v537, 0.0
    %vm557 = vcmp.ge.f32.partialorder %v538, 0.0
    %vm558 = vcmp.ge.f32.partialorder %v539, 0.0
    %vm559 = vcmp.ge.f32.partialorder %v540, 0.0
    %vm560 = vcmp.ge.f32.partialorder %v541, 0.0
    %v561 = vmul.f32 %v523, 0.01
    %v562 = vmul.f32 %v524, 0.01
    %v563 = vmul.f32 %v525, 0.01
    %v564 = vmul.f32 %v526, 0.01
    %v565 = vmul.f32 %v527, 0.01
    %v566 = vmul.f32 %v528, 0.01
    %v567 = vmul.f32 %v529, 0.01
    %v568 = vmul.f32 %v530, 0.01
    %v569 = vmul.f32 %v531, 0.01
    %v570 = vmul.f32 %v532, 0.01
    %v571 = vmul.f32 %v533, 0.01
    %v572 = vmul.f32 %v534, 0.01
    %v573 = vmul.f32 %v535, 0.01
    %v574 = vmul.f32 %v536, 0.01
    %v575 = vmul.f32 %v537, 0.01
    %v576 = vmul.f32 %v538, 0.01
    %v577 = vmul.f32 %v539, 0.01
    %v578 = vmul.f32 %v540, 0.01
    %v579 = vmul.f32 %v541, 0.01
    %v580 = vsel %vm542, %v523, %v561
    %v581 = vsel %vm543, %v524, %v562
    %v582 = vsel %vm544, %v525, %v563
    %v583 = vsel %vm545, %v526, %v564
    %v584 = vsel %vm546, %v527, %v565
    %v585 = vsel %vm547, %v528, %v566
    %v586 = vsel %vm548, %v529, %v567
    %v587 = vsel %vm549, %v530, %v568
    %v588 = vsel %vm550, %v531, %v569
    %v589 = vsel %vm551, %v532, %v570
    %v590 = vsel %vm552, %v533, %v571
    %v591 = vsel %vm553, %v534, %v572
    %v592 = vsel %vm554, %v535, %v573
    %v593 = vsel %vm555, %v536, %v574
    %v594 = vsel %vm556, %v537, %v575
    %v595 = vsel %vm557, %v538, %v576
    %v596 = vsel %vm558, %v539, %v577
    %v597 = vsel %vm559, %v540, %v578
    %v598 = vsel %vm560, %v541, %v579
    %v599 = vpack.c.bf16 %v581, %v580
    %v600 = vpack.c.bf16 %v583, %v582
    %v601 = vpack.c.bf16 %v585, %v584
    %v602 = vpack.c.bf16 %v587, %v586
    %v603 = vpack.c.bf16 %v589, %v588
    %v604 = vpack.c.bf16 %v591, %v590
    %v605 = vpack.c.bf16 %v593, %v592
    %v606 = vpack.c.bf16 %v595, %v594
    %v607 = vpack.c.bf16 %v596, %v596
    %v608 = vld [vmem:[#allocation8] sm:$0xf]
    %v609 = vld [vmem:[#allocation8 + $0x4] sm:$0xf]
    %v610 = vld [vmem:[#allocation8 + $0x8] sm:$0x3]
    %v611 = vpack.c.bf16 %v582, %v581
    %v612 = vpack.c.bf16 %v584, %v583
    %v613 = vpack.c.bf16 %v586, %v585
    %v614 = vpack.c.bf16 %v588, %v587
    %v615 = vpack.c.bf16 %v590, %v589
    %v616 = vpack.c.bf16 %v592, %v591
    %v617 = vpack.c.bf16 %v594, %v593
    %v618 = vpack.c.bf16 %v596, %v595
    %v619 = vpack.c.bf16 %v597, %v597
    %s620 = scalar_lea.vmem [#allocation8], 12
    %v621 = vld [vmem:[%s620] sm:$0xf]
    %v622 = vld [vmem:[%s620 + $0x4] sm:$0xf]
    %v623 = vld [vmem:[%s620 + $0x8] sm:$0x3]
    %v627 = vunpack.c.l.b16 %v621
    %v628 = vunpack.c.l.b16 %v622
    %v629 = vunpack.c.l.b16 %v623
    %v630 = vpack.c.b16 %v628, %v627
    %v631 = vpack.c.b16 %v629, %v629
    %vm633 = vcmask 162816
    %v635 = vsel %vm633, %v611, 0
    %v638 = vsel %vm633, %v612, 0
    %v641 = vsel %vm633, %v613, 0
    %v644 = vsel %vm633, %v614, 0
    %v647 = vsel %vm633, %v615, 0
    %v650 = vsel %vm633, %v616, 0
    %v653 = vsel %vm633, %v617, 0
    %v656 = vsel %vm633, %v618, 0
    %v659 = vsel %vm633, %v619, 0
    %v662 = vsel %vm262, %v631, 0
    %664 = vmatpush.bf16.msra.mxu0 0
    %665 = vmatpush.bf16.msra.mxu0 0
    %666 = vmatpush.bf16.msra.mxu0 0
    %667 = vmatpush.bf16.msra.mxu0 0
    %668 = vmatpush.bf16.msra.mxu0 0
    %669 = vmatpush.bf16.msra.mxu0 0
    %670 = vmatpush.bf16.msra.mxu0 %v662
    %671 = vmatpush.bf16.msra.mxu0 %v630
    %672 = vmatmul.bf16.gmra.mxu0 %v635
    %v673 = vpop.f32.mrf.mxu0
    %v674 = vadd.f32 0.0, %v673
    %v675 = vpop.f32.mrf.mxu0
    %v676 = vadd.f32 0.0, %v675
    %677 = vmatmul.bf16.gmra.mxu0 %v638
    %v678 = vpop.f32.mrf.mxu0
    %v679 = vadd.f32 0.0, %v678
    %v680 = vpop.f32.mrf.mxu0
    %v681 = vadd.f32 0.0, %v680
    %682 = vmatmul.bf16.gmra.mxu0 %v641
    %v683 = vpop.f32.mrf.mxu0
    %v684 = vadd.f32 0.0, %v683
    %v685 = vpop.f32.mrf.mxu0
    %v686 = vadd.f32 0.0, %v685
    %687 = vmatmul.bf16.gmra.mxu0 %v644
    %v688 = vpop.f32.mrf.mxu0
    %v689 = vadd.f32 0.0, %v688
    %v690 = vpop.f32.mrf.mxu0
    %v691 = vadd.f32 0.0, %v690
    %692 = vmatmul.bf16.gmra.mxu0 %v647
    %v693 = vpop.f32.mrf.mxu0
    %v694 = vadd.f32 0.0, %v693
    %v695 = vpop.f32.mrf.mxu0
    %v696 = vadd.f32 0.0, %v695
    %697 = vmatmul.bf16.gmra.mxu0 %v650
    %v698 = vpop.f32.mrf.mxu0
    %v699 = vadd.f32 0.0, %v698
    %v700 = vpop.f32.mrf.mxu0
    %v701 = vadd.f32 0.0, %v700
    %702 = vmatmul.bf16.gmra.mxu0 %v653
    %v703 = vpop.f32.mrf.mxu0
    %v704 = vadd.f32 0.0, %v703
    %v705 = vpop.f32.mrf.mxu0
    %v706 = vadd.f32 0.0, %v705
    %707 = vmatmul.bf16.gmra.mxu0 %v656
    %v708 = vpop.f32.mrf.mxu0
    %v709 = vadd.f32 0.0, %v708
    %v710 = vpop.f32.mrf.mxu0
    %v711 = vadd.f32 0.0, %v710
    %712 = vmatmul.bf16.gmra.mxu0 %v659
    %v713 = vpop.f32.mrf.mxu0
    %v714 = vadd.f32 0.0, %v713
    %v715 = vpop.f32.mrf.mxu0
    %716 = vdwg.mxu0
    %v720 = vunpack.c.l.b16 %v608
    %v721 = vunpack.c.l.b16 %v609
    %v722 = vunpack.c.l.b16 %v610
    %v723 = vpack.c.b16 %v721, %v720
    %v724 = vpack.c.b16 %v722, %v722
    %v727 = vsel %vm633, %v599, 0
    %v730 = vsel %vm633, %v600, 0
    %v733 = vsel %vm633, %v601, 0
    %v736 = vsel %vm633, %v602, 0
    %v739 = vsel %vm633, %v603, 0
    %v742 = vsel %vm633, %v604, 0
    %v745 = vsel %vm633, %v605, 0
    %v748 = vsel %vm633, %v606, 0
    %v751 = vsel %vm633, %v607, 0
    %v754 = vsel %vm262, %v724, 0
    %756 = vmatpush.bf16.msra.mxu0 0
    %757 = vmatpush.bf16.msra.mxu0 0
    %758 = vmatpush.bf16.msra.mxu0 0
    %759 = vmatpush.bf16.msra.mxu0 0
    %760 = vmatpush.bf16.msra.mxu0 0
    %761 = vmatpush.bf16.msra.mxu0 0
    %762 = vmatpush.bf16.msra.mxu0 %v754
    %763 = vmatpush.bf16.msra.mxu0 %v723
    %764 = vmatmul.bf16.gmra.mxu0 %v727
    %v765 = vpop.f32.mrf.mxu0
    %v766 = vadd.f32 %v674, %v765
    %v767 = vpop.f32.mrf.mxu0
    %v768 = vadd.f32 %v676, %v767
    %769 = vmatmul.bf16.gmra.mxu0 %v730
    %v770 = vpop.f32.mrf.mxu0
    %v771 = vadd.f32 %v679, %v770
    %v772 = vpop.f32.mrf.mxu0
    %v773 = vadd.f32 %v681, %v772
    %774 = vmatmul.bf16.gmra.mxu0 %v733
    %v775 = vpop.f32.mrf.mxu0
    %v776 = vadd.f32 %v684, %v775
    %v777 = vpop.f32.mrf.mxu0
    %v778 = vadd.f32 %v686, %v777
    %779 = vmatmul.bf16.gmra.mxu0 %v736
    %v780 = vpop.f32.mrf.mxu0
    %v781 = vadd.f32 %v689, %v780
    %v782 = vpop.f32.mrf.mxu0
    %v783 = vadd.f32 %v691, %v782
    %784 = vmatmul.bf16.gmra.mxu0 %v739
    %v785 = vpop.f32.mrf.mxu0
    %v786 = vadd.f32 %v694, %v785
    %v787 = vpop.f32.mrf.mxu0
    %v788 = vadd.f32 %v696, %v787
    %789 = vmatmul.bf16.gmra.mxu0 %v742
    %v790 = vpop.f32.mrf.mxu0
    %v791 = vadd.f32 %v699, %v790
    %v792 = vpop.f32.mrf.mxu0
    %v793 = vadd.f32 %v701, %v792
    %794 = vmatmul.bf16.gmra.mxu0 %v745
    %v795 = vpop.f32.mrf.mxu0
    %v796 = vadd.f32 %v704, %v795
    %v797 = vpop.f32.mrf.mxu0
    %v798 = vadd.f32 %v706, %v797
    %799 = vmatmul.bf16.gmra.mxu0 %v748
    %v800 = vpop.f32.mrf.mxu0
    %v801 = vadd.f32 %v709, %v800
    %v802 = vpop.f32.mrf.mxu0
    %v803 = vadd.f32 %v711, %v802
    %804 = vmatmul.bf16.gmra.mxu0 %v751
    %v805 = vpop.f32.mrf.mxu0
    %v806 = vadd.f32 %v714, %v805
    %v807 = vpop.f32.mrf.mxu0
    %808 = vdwg.mxu0
    %v809 = vpack.c.bf16 %v597, %v596
    %v810 = vpack.c.bf16 %v598, %v598
    %s811 = scalar_lea.vmem [#allocation8], 24
    %v812 = vld [vmem:[%s811] sm:$0xf]
    %v813 = vld [vmem:[%s811 + $0x4] sm:$0xf]
    %v814 = vld [vmem:[%s811 + $0x8] sm:$0x3]
    %v818 = vunpack.c.l.b16 %v812
    %v819 = vunpack.c.l.b16 %v813
    %v820 = vunpack.c.l.b16 %v814
    %v821 = vpack.c.b16 %v819, %v818
    %v822 = vpack.c.b16 %v820, %v820
    %v825 = vsel %vm633, %v809, 0
    %v828 = vsel %vm633, %v810, 0
    %v831 = vsel %vm262, %v822, 0
    %833 = vmatpush.bf16.msra.mxu0 0
    %834 = vmatpush.bf16.msra.mxu0 0
    %835 = vmatpush.bf16.msra.mxu0 0
    %836 = vmatpush.bf16.msra.mxu0 0
    %837 = vmatpush.bf16.msra.mxu0 0
    %838 = vmatpush.bf16.msra.mxu0 0
    %839 = vmatpush.bf16.msra.mxu0 %v831
    %840 = vmatpush.bf16.msra.mxu0 %v821
    %841 = vmatmul.bf16.gmra.mxu0 %v730
    %v842 = vpop.f32.mrf.mxu0
    %v843 = vadd.f32 0.0, %v842
    %v844 = vpop.f32.mrf.mxu0
    %v845 = vadd.f32 0.0, %v844
    %846 = vmatmul.bf16.gmra.mxu0 %v733
    %v847 = vpop.f32.mrf.mxu0
    %v848 = vadd.f32 0.0, %v847
    %v849 = vpop.f32.mrf.mxu0
    %v850 = vadd.f32 0.0, %v849
    %851 = vmatmul.bf16.gmra.mxu0 %v736
    %v852 = vpop.f32.mrf.mxu0
    %v853 = vadd.f32 0.0, %v852
    %v854 = vpop.f32.mrf.mxu0
    %v855 = vadd.f32 0.0, %v854
    %856 = vmatmul.bf16.gmra.mxu0 %v739
    %v857 = vpop.f32.mrf.mxu0
    %v858 = vadd.f32 0.0, %v857
    %v859 = vpop.f32.mrf.mxu0
    %v860 = vadd.f32 0.0, %v859
    %861 = vmatmul.bf16.gmra.mxu0 %v742
    %v862 = vpop.f32.mrf.mxu0
    %v863 = vadd.f32 0.0, %v862
    %v864 = vpop.f32.mrf.mxu0
    %v865 = vadd.f32 0.0, %v864
    %866 = vmatmul.bf16.gmra.mxu0 %v745
    %v867 = vpop.f32.mrf.mxu0
    %v868 = vadd.f32 0.0, %v867
    %v869 = vpop.f32.mrf.mxu0
    %v870 = vadd.f32 0.0, %v869
    %871 = vmatmul.bf16.gmra.mxu0 %v748
    %v872 = vpop.f32.mrf.mxu0
    %v873 = vadd.f32 0.0, %v872
    %v874 = vpop.f32.mrf.mxu0
    %v875 = vadd.f32 0.0, %v874
    %876 = vmatmul.bf16.gmra.mxu0 %v825
    %v877 = vpop.f32.mrf.mxu0
    %v878 = vadd.f32 0.0, %v877
    %v879 = vpop.f32.mrf.mxu0
    %v880 = vadd.f32 0.0, %v879
    %881 = vmatmul.bf16.gmra.mxu0 %v828
    %v882 = vpop.f32.mrf.mxu0
    %v883 = vadd.f32 0.0, %v882
    %v884 = vpop.f32.mrf.mxu0
    %885 = vdwg.mxu0
    %v886 = vadd.f32 %v766, %v843
    %v887 = vadd.f32 %v768, %v845
    %v888 = vadd.f32 %v771, %v848
    %v889 = vadd.f32 %v773, %v850
    %v890 = vadd.f32 %v776, %v853
    %v891 = vadd.f32 %v778, %v855
    %v892 = vadd.f32 %v781, %v858
    %v893 = vadd.f32 %v783, %v860
    %v894 = vadd.f32 %v786, %v863
    %v895 = vadd.f32 %v788, %v865
    %v896 = vadd.f32 %v791, %v868
    %v897 = vadd.f32 %v793, %v870
    %v898 = vadd.f32 %v796, %v873
    %v899 = vadd.f32 %v798, %v875
    %v900 = vadd.f32 %v801, %v878
    %v901 = vadd.f32 %v803, %v880
    %v902 = vadd.f32 %v806, %v883
    %v903 = vld [vmem:[#allocation9] sm:$0x1]
    %v905 = vperm.slane %v903, 0
    %v907 = vadd.f32 %v886, %v905
    %v908 = vadd.f32 %v887, %v905
    %v909 = vadd.f32 %v888, %v905
    %v910 = vadd.f32 %v889, %v905
    %v911 = vadd.f32 %v890, %v905
    %v912 = vadd.f32 %v891, %v905
    %v913 = vadd.f32 %v892, %v905
    %v914 = vadd.f32 %v893, %v905
    %v915 = vadd.f32 %v894, %v905
    %v916 = vadd.f32 %v895, %v905
    %v917 = vadd.f32 %v896, %v905
    %v918 = vadd.f32 %v897, %v905
    %v919 = vadd.f32 %v898, %v905
    %v920 = vadd.f32 %v899, %v905
    %v921 = vadd.f32 %v900, %v905
    %v922 = vadd.f32 %v901, %v905
    %v923 = vadd.f32 %v902, %v905
    %vm924 = vcmp.ge.f32.partialorder %v907, 0.0
    %vm925 = vcmp.ge.f32.partialorder %v908, 0.0
    %vm926 = vcmp.ge.f32.partialorder %v909, 0.0
    %vm927 = vcmp.ge.f32.partialorder %v910, 0.0
    %vm928 = vcmp.ge.f32.partialorder %v911, 0.0
    %vm929 = vcmp.ge.f32.partialorder %v912, 0.0
    %vm930 = vcmp.ge.f32.partialorder %v913, 0.0
    %vm931 = vcmp.ge.f32.partialorder %v914, 0.0
    %vm932 = vcmp.ge.f32.partialorder %v915, 0.0
    %vm933 = vcmp.ge.f32.partialorder %v916, 0.0
    %vm934 = vcmp.ge.f32.partialorder %v917, 0.0
    %vm935 = vcmp.ge.f32.partialorder %v918, 0.0
    %vm936 = vcmp.ge.f32.partialorder %v919, 0.0
    %vm937 = vcmp.ge.f32.partialorder %v920, 0.0
    %vm938 = vcmp.ge.f32.partialorder %v921, 0.0
    %vm939 = vcmp.ge.f32.partialorder %v922, 0.0
    %vm940 = vcmp.ge.f32.partialorder %v923, 0.0
    %v941 = vmul.f32 %v907, 0.01
    %v942 = vmul.f32 %v908, 0.01
    %v943 = vmul.f32 %v909, 0.01
    %v944 = vmul.f32 %v910, 0.01
    %v945 = vmul.f32 %v911, 0.01
    %v946 = vmul.f32 %v912, 0.01
    %v947 = vmul.f32 %v913, 0.01
    %v948 = vmul.f32 %v914, 0.01
    %v949 = vmul.f32 %v915, 0.01
    %v950 = vmul.f32 %v916, 0.01
    %v951 = vmul.f32 %v917, 0.01
    %v952 = vmul.f32 %v918, 0.01
    %v953 = vmul.f32 %v919, 0.01
    %v954 = vmul.f32 %v920, 0.01
    %v955 = vmul.f32 %v921, 0.01
    %v956 = vmul.f32 %v922, 0.01
    %v957 = vmul.f32 %v923, 0.01
    %v958 = vsel %vm924, %v907, %v941
    %v959 = vsel %vm925, %v908, %v942
    %v960 = vsel %vm926, %v909, %v943
    %v961 = vsel %vm927, %v910, %v944
    %v962 = vsel %vm928, %v911, %v945
    %v963 = vsel %vm929, %v912, %v946
    %v964 = vsel %vm930, %v913, %v947
    %v965 = vsel %vm931, %v914, %v948
    %v966 = vsel %vm932, %v915, %v949
    %v967 = vsel %vm933, %v916, %v950
    %v968 = vsel %vm934, %v917, %v951
    %v969 = vsel %vm935, %v918, %v952
    %v970 = vsel %vm936, %v919, %v953
    %v971 = vsel %vm937, %v920, %v954
    %v972 = vsel %vm938, %v921, %v955
    %v973 = vsel %vm939, %v922, %v956
    %v974 = vsel %vm940, %v923, %v957
    %v975 = vpack.c.bf16 %v959, %v958
    %v976 = vpack.c.bf16 %v961, %v960
    %v977 = vpack.c.bf16 %v963, %v962
    %v978 = vpack.c.bf16 %v965, %v964
    %v979 = vpack.c.bf16 %v967, %v966
    %v980 = vpack.c.bf16 %v969, %v968
    %v981 = vpack.c.bf16 %v971, %v970
    %v982 = vpack.c.bf16 %v972, %v972
    %v983 = vld [vmem:[%s5] sm:$0xf]
    %v984 = vld [vmem:[%s5 + $0x4] sm:$0xf]
    %v985 = vld [vmem:[%s5 + $0x8] sm:$0xf]
    %v986 = vld [vmem:[%s5 + $0xc] sm:$0xf]
    %v987 = vld [vmem:[%s5 + $0x10] sm:$0xf]
    %v988 = vpack.c.bf16 %v960, %v959
    %v989 = vpack.c.bf16 %v962, %v961
    %v990 = vpack.c.bf16 %v964, %v963
    %v991 = vpack.c.bf16 %v966, %v965
    %v992 = vpack.c.bf16 %v968, %v967
    %v993 = vpack.c.bf16 %v970, %v969
    %v994 = vpack.c.bf16 %v972, %v971
    %v995 = vpack.c.bf16 %v973, %v973
    %s996 = scalar_lea.vmem %s5, 20
    %v997 = vld [vmem:[%s996] sm:$0xf]
    %v998 = vld [vmem:[%s996 + $0x4] sm:$0xf]
    %v999 = vld [vmem:[%s996 + $0x8] sm:$0xf]
    %v1000 = vld [vmem:[%s996 + $0xc] sm:$0xf]
    %v1001 = vld [vmem:[%s996 + $0x10] sm:$0xf]
    %v1007 = vunpack.c.l.b16 %v997
    %v1008 = vunpack.c.l.b16 %v998
    %v1009 = vunpack.c.l.b16 %v999
    %v1010 = vunpack.c.l.b16 %v1000
    %v1011 = vunpack.c.l.b16 %v1001
    %v1012 = vpack.c.b16 %v1008, %v1007
    %v1013 = vpack.c.b16 %v1010, %v1009
    %v1014 = vpack.c.b16 %v1011, %v1011
    %vm1017 = vcmask 326656
    %v1019 = vsel %vm1017, %v988, 0
    %v1022 = vsel %vm1017, %v989, 0
    %v1025 = vsel %vm1017, %v990, 0
    %v1028 = vsel %vm1017, %v991, 0
    %v1031 = vsel %vm1017, %v992, 0
    %v1034 = vsel %vm1017, %v993, 0
    %v1037 = vsel %vm1017, %v994, 0
    %v1040 = vsel %vm1017, %v995, 0
    %vm1042 = vcmask 1043456
    %v1044 = vsel %vm1042, %v1014, 0
    %1046 = vmatpush.bf16.msra.mxu0 0
    %1047 = vmatpush.bf16.msra.mxu0 0
    %1048 = vmatpush.bf16.msra.mxu0 0
    %1049 = vmatpush.bf16.msra.mxu0 0
    %1050 = vmatpush.bf16.msra.mxu0 0
    %1051 = vmatpush.bf16.msra.mxu0 %v1044
    %1052 = vmatpush.bf16.msra.mxu0 %v1013
    %1053 = vmatpush.bf16.msra.mxu0 %v1012
    %1054 = vmatmul.bf16.gmra.mxu0 %v1019
    %v1055 = vpop.f32.mrf.mxu0
    %v1056 = vadd.f32 0.0, %v1055
    %v1057 = vpop.f32.mrf.mxu0
    %v1058 = vadd.f32 0.0, %v1057
    %1059 = vmatmul.bf16.gmra.mxu0 %v1022
    %v1060 = vpop.f32.mrf.mxu0
    %v1061 = vadd.f32 0.0, %v1060
    %v1062 = vpop.f32.mrf.mxu0
    %v1063 = vadd.f32 0.0, %v1062
    %1064 = vmatmul.bf16.gmra.mxu0 %v1025
    %v1065 = vpop.f32.mrf.mxu0
    %v1066 = vadd.f32 0.0, %v1065
    %v1067 = vpop.f32.mrf.mxu0
    %v1068 = vadd.f32 0.0, %v1067
    %1069 = vmatmul.bf16.gmra.mxu0 %v1028
    %v1070 = vpop.f32.mrf.mxu0
    %v1071 = vadd.f32 0.0, %v1070
    %v1072 = vpop.f32.mrf.mxu0
    %v1073 = vadd.f32 0.0, %v1072
    %1074 = vmatmul.bf16.gmra.mxu0 %v1031
    %v1075 = vpop.f32.mrf.mxu0
    %v1076 = vadd.f32 0.0, %v1075
    %v1077 = vpop.f32.mrf.mxu0
    %v1078 = vadd.f32 0.0, %v1077
    %1079 = vmatmul.bf16.gmra.mxu0 %v1034
    %v1080 = vpop.f32.mrf.mxu0
    %v1081 = vadd.f32 0.0, %v1080
    %v1082 = vpop.f32.mrf.mxu0
    %v1083 = vadd.f32 0.0, %v1082
    %1084 = vmatmul.bf16.gmra.mxu0 %v1037
    %v1085 = vpop.f32.mrf.mxu0
    %v1086 = vadd.f32 0.0, %v1085
    %v1087 = vpop.f32.mrf.mxu0
    %v1088 = vadd.f32 0.0, %v1087
    %1089 = vmatmul.bf16.gmra.mxu0 %v1040
    %v1090 = vpop.f32.mrf.mxu0
    %v1091 = vadd.f32 0.0, %v1090
    %v1092 = vpop.f32.mrf.mxu0
    %1093 = vdwg.mxu0
    %v1099 = vunpack.c.l.b16 %v983
    %v1100 = vunpack.c.l.b16 %v984
    %v1101 = vunpack.c.l.b16 %v985
    %v1102 = vunpack.c.l.b16 %v986
    %v1103 = vunpack.c.l.b16 %v987
    %v1104 = vpack.c.b16 %v1100, %v1099
    %v1105 = vpack.c.b16 %v1102, %v1101
    %v1106 = vpack.c.b16 %v1103, %v1103
    %v1110 = vsel %vm1017, %v975, 0
    %v1113 = vsel %vm1017, %v976, 0
    %v1116 = vsel %vm1017, %v977, 0
    %v1119 = vsel %vm1017, %v978, 0
    %v1122 = vsel %vm1017, %v979, 0
    %v1125 = vsel %vm1017, %v980, 0
    %v1128 = vsel %vm1017, %v981, 0
    %v1131 = vsel %vm1017, %v982, 0
    %v1134 = vsel %vm1042, %v1106, 0
    %1136 = vmatpush.bf16.msra.mxu0 0
    %1137 = vmatpush.bf16.msra.mxu0 0
    %1138 = vmatpush.bf16.msra.mxu0 0
    %1139 = vmatpush.bf16.msra.mxu0 0
    %1140 = vmatpush.bf16.msra.mxu0 0
    %1141 = vmatpush.bf16.msra.mxu0 %v1134
    %1142 = vmatpush.bf16.msra.mxu0 %v1105
    %1143 = vmatpush.bf16.msra.mxu0 %v1104
    %1144 = vmatmul.bf16.gmra.mxu0 %v1110
    %v1145 = vpop.f32.mrf.mxu0
    %v1146 = vadd.f32 %v1056, %v1145
    %v1147 = vpop.f32.mrf.mxu0
    %v1148 = vadd.f32 %v1058, %v1147
    %1149 = vmatmul.bf16.gmra.mxu0 %v1113
    %v1150 = vpop.f32.mrf.mxu0
    %v1151 = vadd.f32 %v1061, %v1150
    %v1152 = vpop.f32.mrf.mxu0
    %v1153 = vadd.f32 %v1063, %v1152
    %1154 = vmatmul.bf16.gmra.mxu0 %v1116
    %v1155 = vpop.f32.mrf.mxu0
    %v1156 = vadd.f32 %v1066, %v1155
    %v1157 = vpop.f32.mrf.mxu0
    %v1158 = vadd.f32 %v1068, %v1157
    %1159 = vmatmul.bf16.gmra.mxu0 %v1119
    %v1160 = vpop.f32.mrf.mxu0
    %v1161 = vadd.f32 %v1071, %v1160
    %v1162 = vpop.f32.mrf.mxu0
    %v1163 = vadd.f32 %v1073, %v1162
    %1164 = vmatmul.bf16.gmra.mxu0 %v1122
    %v1165 = vpop.f32.mrf.mxu0
    %v1166 = vadd.f32 %v1076, %v1165
    %v1167 = vpop.f32.mrf.mxu0
    %v1168 = vadd.f32 %v1078, %v1167
    %1169 = vmatmul.bf16.gmra.mxu0 %v1125
    %v1170 = vpop.f32.mrf.mxu0
    %v1171 = vadd.f32 %v1081, %v1170
    %v1172 = vpop.f32.mrf.mxu0
    %v1173 = vadd.f32 %v1083, %v1172
    %1174 = vmatmul.bf16.gmra.mxu0 %v1128
    %v1175 = vpop.f32.mrf.mxu0
    %v1176 = vadd.f32 %v1086, %v1175
    %v1177 = vpop.f32.mrf.mxu0
    %v1178 = vadd.f32 %v1088, %v1177
    %1179 = vmatmul.bf16.gmra.mxu0 %v1131
    %v1180 = vpop.f32.mrf.mxu0
    %v1181 = vadd.f32 %v1091, %v1180
    %v1182 = vpop.f32.mrf.mxu0
    %1183 = vdwg.mxu0
    %v1184 = vpack.c.bf16 %v973, %v972
    %v1185 = vpack.c.bf16 %v974, %v974
    %s1186 = scalar_lea.vmem %s5, 40
    %v1187 = vld [vmem:[%s1186] sm:$0xf]
    %v1188 = vld [vmem:[%s1186 + $0x4] sm:$0xf]
    %v1189 = vld [vmem:[%s1186 + $0x8] sm:$0xf]
    %v1190 = vld [vmem:[%s1186 + $0xc] sm:$0xf]
    %v1191 = vld [vmem:[%s1186 + $0x10] sm:$0xf]
    %v1197 = vunpack.c.l.b16 %v1187
    %v1198 = vunpack.c.l.b16 %v1188
    %v1199 = vunpack.c.l.b16 %v1189
    %v1200 = vunpack.c.l.b16 %v1190
    %v1201 = vunpack.c.l.b16 %v1191
    %v1202 = vpack.c.b16 %v1198, %v1197
    %v1203 = vpack.c.b16 %v1200, %v1199
    %v1204 = vpack.c.b16 %v1201, %v1201
    %v1208 = vsel %vm1017, %v1184, 0
    %v1211 = vsel %vm1017, %v1185, 0
    %v1214 = vsel %vm1042, %v1204, 0
    %1216 = vmatpush.bf16.msra.mxu0 0
    %1217 = vmatpush.bf16.msra.mxu0 0
    %1218 = vmatpush.bf16.msra.mxu0 0
    %1219 = vmatpush.bf16.msra.mxu0 0
    %1220 = vmatpush.bf16.msra.mxu0 0
    %1221 = vmatpush.bf16.msra.mxu0 %v1214
    %1222 = vmatpush.bf16.msra.mxu0 %v1203
    %1223 = vmatpush.bf16.msra.mxu0 %v1202
    %1224 = vmatmul.bf16.gmra.mxu0 %v1113
    %v1225 = vpop.f32.mrf.mxu0
    %v1226 = vadd.f32 0.0, %v1225
    %v1227 = vpop.f32.mrf.mxu0
    %v1228 = vadd.f32 0.0, %v1227
    %1229 = vmatmul.bf16.gmra.mxu0 %v1116
    %v1230 = vpop.f32.mrf.mxu0
    %v1231 = vadd.f32 0.0, %v1230
    %v1232 = vpop.f32.mrf.mxu0
    %v1233 = vadd.f32 0.0, %v1232
    %1234 = vmatmul.bf16.gmra.mxu0 %v1119
    %v1235 = vpop.f32.mrf.mxu0
    %v1236 = vadd.f32 0.0, %v1235
    %v1237 = vpop.f32.mrf.mxu0
    %v1238 = vadd.f32 0.0, %v1237
    %1239 = vmatmul.bf16.gmra.mxu0 %v1122
    %v1240 = vpop.f32.mrf.mxu0
    %v1241 = vadd.f32 0.0, %v1240
    %v1242 = vpop.f32.mrf.mxu0
    %v1243 = vadd.f32 0.0, %v1242
    %1244 = vmatmul.bf16.gmra.mxu0 %v1125
    %v1245 = vpop.f32.mrf.mxu0
    %v1246 = vadd.f32 0.0, %v1245
    %v1247 = vpop.f32.mrf.mxu0
    %v1248 = vadd.f32 0.0, %v1247
    %1249 = vmatmul.bf16.gmra.mxu0 %v1128
    %v1250 = vpop.f32.mrf.mxu0
    %v1251 = vadd.f32 0.0, %v1250
    %v1252 = vpop.f32.mrf.mxu0
    %v1253 = vadd.f32 0.0, %v1252
    %1254 = vmatmul.bf16.gmra.mxu0 %v1208
    %v1255 = vpop.f32.mrf.mxu0
    %v1256 = vadd.f32 0.0, %v1255
    %v1257 = vpop.f32.mrf.mxu0
    %v1258 = vadd.f32 0.0, %v1257
    %1259 = vmatmul.bf16.gmra.mxu0 %v1211
    %v1260 = vpop.f32.mrf.mxu0
    %v1261 = vadd.f32 0.0, %v1260
    %v1262 = vpop.f32.mrf.mxu0
    %1263 = vdwg.mxu0
    %v1264 = vadd.f32 %v1146, %v1226
    %v1265 = vadd.f32 %v1148, %v1228
    %v1266 = vadd.f32 %v1151, %v1231
    %v1267 = vadd.f32 %v1153, %v1233
    %v1268 = vadd.f32 %v1156, %v1236
    %v1269 = vadd.f32 %v1158, %v1238
    %v1270 = vadd.f32 %v1161, %v1241
    %v1271 = vadd.f32 %v1163, %v1243
    %v1272 = vadd.f32 %v1166, %v1246
    %v1273 = vadd.f32 %v1168, %v1248
    %v1274 = vadd.f32 %v1171, %v1251
    %v1275 = vadd.f32 %v1173, %v1253
    %v1276 = vadd.f32 %v1176, %v1256
    %v1277 = vadd.f32 %v1178, %v1258
    %v1278 = vadd.f32 %v1181, %v1261
    %v1279 = vld [vmem:[%s6] sm:$0x1]
    %v1281 = vperm.slane %v1279, 0
    %v1283 = vadd.f32 %v1264, %v1281
    %v1284 = vadd.f32 %v1265, %v1281
    %v1285 = vadd.f32 %v1266, %v1281
    %v1286 = vadd.f32 %v1267, %v1281
    %v1287 = vadd.f32 %v1268, %v1281
    %v1288 = vadd.f32 %v1269, %v1281
    %v1289 = vadd.f32 %v1270, %v1281
    %v1290 = vadd.f32 %v1271, %v1281
    %v1291 = vadd.f32 %v1272, %v1281
    %v1292 = vadd.f32 %v1273, %v1281
    %v1293 = vadd.f32 %v1274, %v1281
    %v1294 = vadd.f32 %v1275, %v1281
    %v1295 = vadd.f32 %v1276, %v1281
    %v1296 = vadd.f32 %v1277, %v1281
    %v1297 = vadd.f32 %v1278, %v1281
    %vm1298 = vcmp.ge.f32.partialorder %v1283, 0.0
    %vm1299 = vcmp.ge.f32.partialorder %v1284, 0.0
    %vm1300 = vcmp.ge.f32.partialorder %v1285, 0.0
    %vm1301 = vcmp.ge.f32.partialorder %v1286, 0.0
    %vm1302 = vcmp.ge.f32.partialorder %v1287, 0.0
    %vm1303 = vcmp.ge.f32.partialorder %v1288, 0.0
    %vm1304 = vcmp.ge.f32.partialorder %v1289, 0.0
    %vm1305 = vcmp.ge.f32.partialorder %v1290, 0.0
    %vm1306 = vcmp.ge.f32.partialorder %v1291, 0.0
    %vm1307 = vcmp.ge.f32.partialorder %v1292, 0.0
    %vm1308 = vcmp.ge.f32.partialorder %v1293, 0.0
    %vm1309 = vcmp.ge.f32.partialorder %v1294, 0.0
    %vm1310 = vcmp.ge.f32.partialorder %v1295, 0.0
    %vm1311 = vcmp.ge.f32.partialorder %v1296, 0.0
    %vm1312 = vcmp.ge.f32.partialorder %v1297, 0.0
    %v1313 = vmul.f32 %v1283, 0.01
    %v1314 = vmul.f32 %v1284, 0.01
    %v1315 = vmul.f32 %v1285, 0.01
    %v1316 = vmul.f32 %v1286, 0.01
    %v1317 = vmul.f32 %v1287, 0.01
    %v1318 = vmul.f32 %v1288, 0.01
    %v1319 = vmul.f32 %v1289, 0.01
    %v1320 = vmul.f32 %v1290, 0.01
    %v1321 = vmul.f32 %v1291, 0.01
    %v1322 = vmul.f32 %v1292, 0.01
    %v1323 = vmul.f32 %v1293, 0.01
    %v1324 = vmul.f32 %v1294, 0.01
    %v1325 = vmul.f32 %v1295, 0.01
    %v1326 = vmul.f32 %v1296, 0.01
    %v1327 = vmul.f32 %v1297, 0.01
    %v1328 = vsel %vm1298, %v1283, %v1313
    %v1329 = vsel %vm1299, %v1284, %v1314
    %v1330 = vsel %vm1300, %v1285, %v1315
    %v1331 = vsel %vm1301, %v1286, %v1316
    %v1332 = vsel %vm1302, %v1287, %v1317
    %v1333 = vsel %vm1303, %v1288, %v1318
    %v1334 = vsel %vm1304, %v1289, %v1319
    %v1335 = vsel %vm1305, %v1290, %v1320
    %v1336 = vsel %vm1306, %v1291, %v1321
    %v1337 = vsel %vm1307, %v1292, %v1322
    %v1338 = vsel %vm1308, %v1293, %v1323
    %v1339 = vsel %vm1309, %v1294, %v1324
    %v1340 = vsel %vm1310, %v1295, %v1325
    %v1341 = vsel %vm1311, %v1296, %v1326
    %v1342 = vsel %vm1312, %v1297, %v1327
    %v1343 = vpack.c.bf16 %v1329, %v1328
    %v1344 = vpack.c.bf16 %v1331, %v1330
    %v1345 = vpack.c.bf16 %v1333, %v1332
    %v1346 = vpack.c.bf16 %v1335, %v1334
    %v1347 = vpack.c.bf16 %v1337, %v1336
    %v1348 = vpack.c.bf16 %v1339, %v1338
    %v1349 = vpack.c.bf16 %v1340, %v1340
    %v1350 = vld [vmem:[#allocation11] sm:$0xff]
    %v1351 = vld [vmem:[#allocation11 + $0x8] sm:$0xff]
    %v1352 = vld [vmem:[#allocation11 + $0x10] sm:$0xff]
    %v1353 = vld [vmem:[#allocation11 + $0x18] sm:$0xff]
    %v1354 = vld [vmem:[#allocation11 + $0x20] sm:$0xff]
    %v1355 = vld [vmem:[#allocation11 + $0x28] sm:$0xff]
    %v1356 = vld [vmem:[#allocation11 + $0x30] sm:$0xff]
    %v1357 = vld [vmem:[#allocation11 + $0x38] sm:$0xff]
    %v1358 = vld [vmem:[#allocation11 + $0x40] sm:$0xff]
    %v1359 = vld [vmem:[#allocation11 + $0x48] sm:$0xff]
    %v1360 = vpack.c.bf16 %v1330, %v1329
    %v1361 = vpack.c.bf16 %v1332, %v1331
    %v1362 = vpack.c.bf16 %v1334, %v1333
    %v1363 = vpack.c.bf16 %v1336, %v1335
    %v1364 = vpack.c.bf16 %v1338, %v1337
    %v1365 = vpack.c.bf16 %v1340, %v1339
    %v1366 = vpack.c.bf16 %v1341, %v1341
    %s1367 = scalar_lea.vmem [#allocation11], 80
    %v1368 = vld [vmem:[%s1367] sm:$0xff]
    %v1369 = vld [vmem:[%s1367 + $0x8] sm:$0xff]
    %v1370 = vld [vmem:[%s1367 + $0x10] sm:$0xff]
    %v1371 = vld [vmem:[%s1367 + $0x18] sm:$0xff]
    %v1372 = vld [vmem:[%s1367 + $0x20] sm:$0xff]
    %v1373 = vld [vmem:[%s1367 + $0x28] sm:$0xff]
    %v1374 = vld [vmem:[%s1367 + $0x30] sm:$0xff]
    %v1375 = vld [vmem:[%s1367 + $0x38] sm:$0xff]
    %v1376 = vld [vmem:[%s1367 + $0x40] sm:$0xff]
    %v1377 = vld [vmem:[%s1367 + $0x48] sm:$0xff]
    %v1388 = vunpack.c.l.b16 %v1368
    %v1389 = vunpack.c.h.b16 %v1368
    %v1390 = vunpack.c.l.b16 %v1369
    %v1391 = vunpack.c.h.b16 %v1369
    %v1392 = vunpack.c.l.b16 %v1370
    %v1393 = vunpack.c.h.b16 %v1370
    %v1394 = vunpack.c.l.b16 %v1371
    %v1395 = vunpack.c.h.b16 %v1371
    %v1396 = vunpack.c.l.b16 %v1372
    %v1397 = vunpack.c.h.b16 %v1372
    %v1398 = vunpack.c.l.b16 %v1373
    %v1399 = vunpack.c.h.b16 %v1373
    %v1400 = vunpack.c.l.b16 %v1374
    %v1401 = vunpack.c.h.b16 %v1374
    %v1402 = vunpack.c.l.b16 %v1375
    %v1403 = vunpack.c.h.b16 %v1375
    %v1404 = vunpack.c.l.b16 %v1376
    %v1405 = vunpack.c.h.b16 %v1376
    %v1406 = vunpack.c.l.b16 %v1377
    %v1407 = vunpack.c.h.b16 %v1377
    %v1408 = vpack.c.b16 %v1390, %v1388
    %v1409 = vpack.c.b16 %v1391, %v1389
    %v1410 = vpack.c.b16 %v1394, %v1392
    %v1411 = vpack.c.b16 %v1395, %v1393
    %v1412 = vpack.c.b16 %v1398, %v1396
    %v1413 = vpack.c.b16 %v1399, %v1397
    %v1414 = vpack.c.b16 %v1402, %v1400
    %v1415 = vpack.c.b16 %v1403, %v1401
    %v1416 = vpack.c.b16 %v1406, %v1404
    %v1417 = vpack.c.b16 %v1407, %v1405
    %vm1428 = vcmask 654336
    %v1430 = vsel %vm1428, %v1360, 0
    %v1433 = vsel %vm1428, %v1361, 0
    %v1436 = vsel %vm1428, %v1362, 0
    %v1439 = vsel %vm1428, %v1363, 0
    %v1442 = vsel %vm1428, %v1364, 0
    %v1445 = vsel %vm1428, %v1365, 0
    %v1448 = vsel %vm1428, %v1366, 0
    %1450 = vmatpush.bf16.msra.mxu0 0
    %1451 = vmatpush.bf16.msra.mxu0 0
    %1452 = vmatpush.bf16.msra.mxu0 0
    %1453 = vmatpush.bf16.msra.mxu0 %v1416
    %1454 = vmatpush.bf16.msra.mxu0 %v1414
    %1455 = vmatpush.bf16.msra.mxu0 %v1412
    %1456 = vmatpush.bf16.msra.mxu0 %v1410
    %1457 = vmatpush.bf16.msra.mxu0 %v1408
    %1458 = vmatmul.bf16.gmra.mxu0 %v1430
    %v1459 = vpop.f32.mrf.mxu0
    %v1460 = vadd.f32 0.0, %v1459
    %v1461 = vpop.f32.mrf.mxu0
    %v1462 = vadd.f32 0.0, %v1461
    %1463 = vmatmul.bf16.gmra.mxu0 %v1433
    %v1464 = vpop.f32.mrf.mxu0
    %v1465 = vadd.f32 0.0, %v1464
    %v1466 = vpop.f32.mrf.mxu0
    %v1467 = vadd.f32 0.0, %v1466
    %1468 = vmatmul.bf16.gmra.mxu0 %v1436
    %v1469 = vpop.f32.mrf.mxu0
    %v1470 = vadd.f32 0.0, %v1469
    %v1471 = vpop.f32.mrf.mxu0
    %v1472 = vadd.f32 0.0, %v1471
    %1473 = vmatmul.bf16.gmra.mxu0 %v1439
    %v1474 = vpop.f32.mrf.mxu0
    %v1475 = vadd.f32 0.0, %v1474
    %v1476 = vpop.f32.mrf.mxu0
    %v1477 = vadd.f32 0.0, %v1476
    %1478 = vmatmul.bf16.gmra.mxu0 %v1442
    %v1479 = vpop.f32.mrf.mxu0
    %v1480 = vadd.f32 0.0, %v1479
    %v1481 = vpop.f32.mrf.mxu0
    %v1482 = vadd.f32 0.0, %v1481
    %1483 = vmatmul.bf16.gmra.mxu0 %v1445
    %v1484 = vpop.f32.mrf.mxu0
    %v1485 = vadd.f32 0.0, %v1484
    %v1486 = vpop.f32.mrf.mxu0
    %v1487 = vadd.f32 0.0, %v1486
    %1488 = vmatmul.bf16.gmra.mxu0 %v1448
    %v1489 = vpop.f32.mrf.mxu0
    %v1490 = vadd.f32 0.0, %v1489
    %v1491 = vpop.f32.mrf.mxu0
    %1492 = vdwg.mxu0
    %1493 = vmatpush.bf16.msra.mxu0 0
    %1494 = vmatpush.bf16.msra.mxu0 0
    %1495 = vmatpush.bf16.msra.mxu0 0
    %1496 = vmatpush.bf16.msra.mxu0 %v1417
    %1497 = vmatpush.bf16.msra.mxu0 %v1415
    %1498 = vmatpush.bf16.msra.mxu0 %v1413
    %1499 = vmatpush.bf16.msra.mxu0 %v1411
    %1500 = vmatpush.bf16.msra.mxu0 %v1409
    %1501 = vmatmul.bf16.gmra.mxu0 %v1430
    %v1502 = vpop.f32.mrf.mxu0
    %v1503 = vadd.f32 0.0, %v1502
    %v1504 = vpop.f32.mrf.mxu0
    %v1505 = vadd.f32 0.0, %v1504
    %1506 = vmatmul.bf16.gmra.mxu0 %v1433
    %v1507 = vpop.f32.mrf.mxu0
    %v1508 = vadd.f32 0.0, %v1507
    %v1509 = vpop.f32.mrf.mxu0
    %v1510 = vadd.f32 0.0, %v1509
    %1511 = vmatmul.bf16.gmra.mxu0 %v1436
    %v1512 = vpop.f32.mrf.mxu0
    %v1513 = vadd.f32 0.0, %v1512
    %v1514 = vpop.f32.mrf.mxu0
    %v1515 = vadd.f32 0.0, %v1514
    %1516 = vmatmul.bf16.gmra.mxu0 %v1439
    %v1517 = vpop.f32.mrf.mxu0
    %v1518 = vadd.f32 0.0, %v1517
    %v1519 = vpop.f32.mrf.mxu0
    %v1520 = vadd.f32 0.0, %v1519
    %1521 = vmatmul.bf16.gmra.mxu0 %v1442
    %v1522 = vpop.f32.mrf.mxu0
    %v1523 = vadd.f32 0.0, %v1522
    %v1524 = vpop.f32.mrf.mxu0
    %v1525 = vadd.f32 0.0, %v1524
    %1526 = vmatmul.bf16.gmra.mxu0 %v1445
    %v1527 = vpop.f32.mrf.mxu0
    %v1528 = vadd.f32 0.0, %v1527
    %v1529 = vpop.f32.mrf.mxu0
    %v1530 = vadd.f32 0.0, %v1529
    %1531 = vmatmul.bf16.gmra.mxu0 %v1448
    %v1532 = vpop.f32.mrf.mxu0
    %v1533 = vadd.f32 0.0, %v1532
    %v1534 = vpop.f32.mrf.mxu0
    %1535 = vdwg.mxu0
    %v1546 = vunpack.c.l.b16 %v1350
    %v1547 = vunpack.c.h.b16 %v1350
    %v1548 = vunpack.c.l.b16 %v1351
    %v1549 = vunpack.c.h.b16 %v1351
    %v1550 = vunpack.c.l.b16 %v1352
    %v1551 = vunpack.c.h.b16 %v1352
    %v1552 = vunpack.c.l.b16 %v1353
    %v1553 = vunpack.c.h.b16 %v1353
    %v1554 = vunpack.c.l.b16 %v1354
    %v1555 = vunpack.c.h.b16 %v1354
    %v1556 = vunpack.c.l.b16 %v1355
    %v1557 = vunpack.c.h.b16 %v1355
    %v1558 = vunpack.c.l.b16 %v1356
    %v1559 = vunpack.c.h.b16 %v1356
    %v1560 = vunpack.c.l.b16 %v1357
    %v1561 = vunpack.c.h.b16 %v1357
    %v1562 = vunpack.c.l.b16 %v1358
    %v1563 = vunpack.c.h.b16 %v1358
    %v1564 = vunpack.c.l.b16 %v1359
    %v1565 = vunpack.c.h.b16 %v1359
    %v1566 = vpack.c.b16 %v1548, %v1546
    %v1567 = vpack.c.b16 %v1549, %v1547
    %v1568 = vpack.c.b16 %v1552, %v1550
    %v1569 = vpack.c.b16 %v1553, %v1551
    %v1570 = vpack.c.b16 %v1556, %v1554
    %v1571 = vpack.c.b16 %v1557, %v1555
    %v1572 = vpack.c.b16 %v1560, %v1558
    %v1573 = vpack.c.b16 %v1561, %v1559
    %v1574 = vpack.c.b16 %v1564, %v1562
    %v1575 = vpack.c.b16 %v1565, %v1563
    %v1587 = vsel %vm1428, %v1343, 0
    %v1590 = vsel %vm1428, %v1344, 0
    %v1593 = vsel %vm1428, %v1345, 0
    %v1596 = vsel %vm1428, %v1346, 0
    %v1599 = vsel %vm1428, %v1347, 0
    %v1602 = vsel %vm1428, %v1348, 0
    %v1605 = vsel %vm1428, %v1349, 0
    %1607 = vmatpush.bf16.msra.mxu0 0
    %1608 = vmatpush.bf16.msra.mxu0 0
    %1609 = vmatpush.bf16.msra.mxu0 0
    %1610 = vmatpush.bf16.msra.mxu0 %v1574
    %1611 = vmatpush.bf16.msra.mxu0 %v1572
    %1612 = vmatpush.bf16.msra.mxu0 %v1570
    %1613 = vmatpush.bf16.msra.mxu0 %v1568
    %1614 = vmatpush.bf16.msra.mxu0 %v1566
    %1615 = vmatmul.bf16.gmra.mxu0 %v1587
    %v1616 = vpop.f32.mrf.mxu0
    %v1617 = vadd.f32 %v1460, %v1616
    %v1618 = vpop.f32.mrf.mxu0
    %v1619 = vadd.f32 %v1462, %v1618
    %1620 = vmatmul.bf16.gmra.mxu0 %v1590
    %v1621 = vpop.f32.mrf.mxu0
    %v1622 = vadd.f32 %v1465, %v1621
    %v1623 = vpop.f32.mrf.mxu0
    %v1624 = vadd.f32 %v1467, %v1623
    %1625 = vmatmul.bf16.gmra.mxu0 %v1593
    %v1626 = vpop.f32.mrf.mxu0
    %v1627 = vadd.f32 %v1470, %v1626
    %v1628 = vpop.f32.mrf.mxu0
    %v1629 = vadd.f32 %v1472, %v1628
    %1630 = vmatmul.bf16.gmra.mxu0 %v1596
    %v1631 = vpop.f32.mrf.mxu0
    %v1632 = vadd.f32 %v1475, %v1631
    %v1633 = vpop.f32.mrf.mxu0
    %v1634 = vadd.f32 %v1477, %v1633
    %1635 = vmatmul.bf16.gmra.mxu0 %v1599
    %v1636 = vpop.f32.mrf.mxu0
    %v1637 = vadd.f32 %v1480, %v1636
    %v1638 = vpop.f32.mrf.mxu0
    %v1639 = vadd.f32 %v1482, %v1638
    %1640 = vmatmul.bf16.gmra.mxu0 %v1602
    %v1641 = vpop.f32.mrf.mxu0
    %v1642 = vadd.f32 %v1485, %v1641
    %v1643 = vpop.f32.mrf.mxu0
    %v1644 = vadd.f32 %v1487, %v1643
    %1645 = vmatmul.bf16.gmra.mxu0 %v1605
    %v1646 = vpop.f32.mrf.mxu0
    %v1647 = vadd.f32 %v1490, %v1646
    %v1648 = vpop.f32.mrf.mxu0
    %1649 = vdwg.mxu0
    %1650 = vmatpush.bf16.msra.mxu0 0
    %1651 = vmatpush.bf16.msra.mxu0 0
    %1652 = vmatpush.bf16.msra.mxu0 0
    %1653 = vmatpush.bf16.msra.mxu0 %v1575
    %1654 = vmatpush.bf16.msra.mxu0 %v1573
    %1655 = vmatpush.bf16.msra.mxu0 %v1571
    %1656 = vmatpush.bf16.msra.mxu0 %v1569
    %1657 = vmatpush.bf16.msra.mxu0 %v1567
    %1658 = vmatmul.bf16.gmra.mxu0 %v1587
    %v1659 = vpop.f32.mrf.mxu0
    %v1660 = vadd.f32 %v1503, %v1659
    %v1661 = vpop.f32.mrf.mxu0
    %v1662 = vadd.f32 %v1505, %v1661
    %1663 = vmatmul.bf16.gmra.mxu0 %v1590
    %v1664 = vpop.f32.mrf.mxu0
    %v1665 = vadd.f32 %v1508, %v1664
    %v1666 = vpop.f32.mrf.mxu0
    %v1667 = vadd.f32 %v1510, %v1666
    %1668 = vmatmul.bf16.gmra.mxu0 %v1593
    %v1669 = vpop.f32.mrf.mxu0
    %v1670 = vadd.f32 %v1513, %v1669
    %v1671 = vpop.f32.mrf.mxu0
    %v1672 = vadd.f32 %v1515, %v1671
    %1673 = vmatmul.bf16.gmra.mxu0 %v1596
    %v1674 = vpop.f32.mrf.mxu0
    %v1675 = vadd.f32 %v1518, %v1674
    %v1676 = vpop.f32.mrf.mxu0
    %v1677 = vadd.f32 %v1520, %v1676
    %1678 = vmatmul.bf16.gmra.mxu0 %v1599
    %v1679 = vpop.f32.mrf.mxu0
    %v1680 = vadd.f32 %v1523, %v1679
    %v1681 = vpop.f32.mrf.mxu0
    %v1682 = vadd.f32 %v1525, %v1681
    %1683 = vmatmul.bf16.gmra.mxu0 %v1602
    %v1684 = vpop.f32.mrf.mxu0
    %v1685 = vadd.f32 %v1528, %v1684
    %v1686 = vpop.f32.mrf.mxu0
    %v1687 = vadd.f32 %v1530, %v1686
    %1688 = vmatmul.bf16.gmra.mxu0 %v1605
    %v1689 = vpop.f32.mrf.mxu0
    %v1690 = vadd.f32 %v1533, %v1689
    %v1691 = vpop.f32.mrf.mxu0
    %1692 = vdwg.mxu0
    %v1693 = vpack.c.bf16 %v1341, %v1340
    %v1694 = vpack.c.bf16 %v1342, %v1342
    %s1695 = scalar_lea.vmem [#allocation11], 160
    %v1696 = vld [vmem:[%s1695] sm:$0xff]
    %v1697 = vld [vmem:[%s1695 + $0x8] sm:$0xff]
    %v1698 = vld [vmem:[%s1695 + $0x10] sm:$0xff]
    %v1699 = vld [vmem:[%s1695 + $0x18] sm:$0xff]
    %v1700 = vld [vmem:[%s1695 + $0x20] sm:$0xff]
    %v1701 = vld [vmem:[%s1695 + $0x28] sm:$0xff]
    %v1702 = vld [vmem:[%s1695 + $0x30] sm:$0xff]
    %v1703 = vld [vmem:[%s1695 + $0x38] sm:$0xff]
    %v1704 = vld [vmem:[%s1695 + $0x40] sm:$0xff]
    %v1705 = vld [vmem:[%s1695 + $0x48] sm:$0xff]
    %v1716 = vunpack.c.l.b16 %v1696
    %v1717 = vunpack.c.h.b16 %v1696
    %v1718 = vunpack.c.l.b16 %v1697
    %v1719 = vunpack.c.h.b16 %v1697
    %v1720 = vunpack.c.l.b16 %v1698
    %v1721 = vunpack.c.h.b16 %v1698
    %v1722 = vunpack.c.l.b16 %v1699
    %v1723 = vunpack.c.h.b16 %v1699
    %v1724 = vunpack.c.l.b16 %v1700
    %v1725 = vunpack.c.h.b16 %v1700
    %v1726 = vunpack.c.l.b16 %v1701
    %v1727 = vunpack.c.h.b16 %v1701
    %v1728 = vunpack.c.l.b16 %v1702
    %v1729 = vunpack.c.h.b16 %v1702
    %v1730 = vunpack.c.l.b16 %v1703
    %v1731 = vunpack.c.h.b16 %v1703
    %v1732 = vunpack.c.l.b16 %v1704
    %v1733 = vunpack.c.h.b16 %v1704
    %v1734 = vunpack.c.l.b16 %v1705
    %v1735 = vunpack.c.h.b16 %v1705
    %v1736 = vpack.c.b16 %v1718, %v1716
    %v1737 = vpack.c.b16 %v1719, %v1717
    %v1738 = vpack.c.b16 %v1722, %v1720
    %v1739 = vpack.c.b16 %v1723, %v1721
    %v1740 = vpack.c.b16 %v1726, %v1724
    %v1741 = vpack.c.b16 %v1727, %v1725
    %v1742 = vpack.c.b16 %v1730, %v1728
    %v1743 = vpack.c.b16 %v1731, %v1729
    %v1744 = vpack.c.b16 %v1734, %v1732
    %v1745 = vpack.c.b16 %v1735, %v1733
    %v1757 = vsel %vm1428, %v1693, 0
    %v1760 = vsel %vm1428, %v1694, 0
    %1762 = vmatpush.bf16.msra.mxu0 0
    %1763 = vmatpush.bf16.msra.mxu0 0
    %1764 = vmatpush.bf16.msra.mxu0 0
    %1765 = vmatpush.bf16.msra.mxu0 %v1744
    %1766 = vmatpush.bf16.msra.mxu0 %v1742
    %1767 = vmatpush.bf16.msra.mxu0 %v1740
    %1768 = vmatpush.bf16.msra.mxu0 %v1738
    %1769 = vmatpush.bf16.msra.mxu0 %v1736
    %1770 = vmatmul.bf16.gmra.mxu0 %v1590
    %v1771 = vpop.f32.mrf.mxu0
    %v1772 = vadd.f32 0.0, %v1771
    %v1773 = vpop.f32.mrf.mxu0
    %v1774 = vadd.f32 0.0, %v1773
    %1775 = vmatmul.bf16.gmra.mxu0 %v1593
    %v1776 = vpop.f32.mrf.mxu0
    %v1777 = vadd.f32 0.0, %v1776
    %v1778 = vpop.f32.mrf.mxu0
    %v1779 = vadd.f32 0.0, %v1778
    %1780 = vmatmul.bf16.gmra.mxu0 %v1596
    %v1781 = vpop.f32.mrf.mxu0
    %v1782 = vadd.f32 0.0, %v1781
    %v1783 = vpop.f32.mrf.mxu0
    %v1784 = vadd.f32 0.0, %v1783
    %1785 = vmatmul.bf16.gmra.mxu0 %v1599
    %v1786 = vpop.f32.mrf.mxu0
    %v1787 = vadd.f32 0.0, %v1786
    %v1788 = vpop.f32.mrf.mxu0
    %v1789 = vadd.f32 0.0, %v1788
    %1790 = vmatmul.bf16.gmra.mxu0 %v1602
    %v1791 = vpop.f32.mrf.mxu0
    %v1792 = vadd.f32 0.0, %v1791
    %v1793 = vpop.f32.mrf.mxu0
    %v1794 = vadd.f32 0.0, %v1793
    %1795 = vmatmul.bf16.gmra.mxu0 %v1757
    %v1796 = vpop.f32.mrf.mxu0
    %v1797 = vadd.f32 0.0, %v1796
    %v1798 = vpop.f32.mrf.mxu0
    %v1799 = vadd.f32 0.0, %v1798
    %1800 = vmatmul.bf16.gmra.mxu0 %v1760
    %v1801 = vpop.f32.mrf.mxu0
    %v1802 = vadd.f32 0.0, %v1801
    %v1803 = vpop.f32.mrf.mxu0
    %1804 = vdwg.mxu0
    %1805 = vmatpush.bf16.msra.mxu0 0
    %1806 = vmatpush.bf16.msra.mxu0 0
    %1807 = vmatpush.bf16.msra.mxu0 0
    %1808 = vmatpush.bf16.msra.mxu0 %v1745
    %1809 = vmatpush.bf16.msra.mxu0 %v1743
    %1810 = vmatpush.bf16.msra.mxu0 %v1741
    %1811 = vmatpush.bf16.msra.mxu0 %v1739
    %1812 = vmatpush.bf16.msra.mxu0 %v1737
    %1813 = vmatmul.bf16.gmra.mxu0 %v1590
    %v1814 = vpop.f32.mrf.mxu0
    %v1815 = vadd.f32 0.0, %v1814
    %v1816 = vpop.f32.mrf.mxu0
    %v1817 = vadd.f32 0.0, %v1816
    %1818 = vmatmul.bf16.gmra.mxu0 %v1593
    %v1819 = vpop.f32.mrf.mxu0
    %v1820 = vadd.f32 0.0, %v1819
    %v1821 = vpop.f32.mrf.mxu0
    %v1822 = vadd.f32 0.0, %v1821
    %1823 = vmatmul.bf16.gmra.mxu0 %v1596
    %v1824 = vpop.f32.mrf.mxu0
    %v1825 = vadd.f32 0.0, %v1824
    %v1826 = vpop.f32.mrf.mxu0
    %v1827 = vadd.f32 0.0, %v1826
    %1828 = vmatmul.bf16.gmra.mxu0 %v1599
    %v1829 = vpop.f32.mrf.mxu0
    %v1830 = vadd.f32 0.0, %v1829
    %v1831 = vpop.f32.mrf.mxu0
    %v1832 = vadd.f32 0.0, %v1831
    %1833 = vmatmul.bf16.gmra.mxu0 %v1602
    %v1834 = vpop.f32.mrf.mxu0
    %v1835 = vadd.f32 0.0, %v1834
    %v1836 = vpop.f32.mrf.mxu0
    %v1837 = vadd.f32 0.0, %v1836
    %1838 = vmatmul.bf16.gmra.mxu0 %v1757
    %v1839 = vpop.f32.mrf.mxu0
    %v1840 = vadd.f32 0.0, %v1839
    %v1841 = vpop.f32.mrf.mxu0
    %v1842 = vadd.f32 0.0, %v1841
    %1843 = vmatmul.bf16.gmra.mxu0 %v1760
    %v1844 = vpop.f32.mrf.mxu0
    %v1845 = vadd.f32 0.0, %v1844
    %v1846 = vpop.f32.mrf.mxu0
    %1847 = vdwg.mxu0
    %v1848 = vadd.f32 %v1617, %v1772
    %v1849 = vadd.f32 %v1660, %v1815
    %v1850 = vadd.f32 %v1619, %v1774
    %v1851 = vadd.f32 %v1662, %v1817
    %v1852 = vadd.f32 %v1622, %v1777
    %v1853 = vadd.f32 %v1665, %v1820
    %v1854 = vadd.f32 %v1624, %v1779
    %v1855 = vadd.f32 %v1667, %v1822
    %v1856 = vadd.f32 %v1627, %v1782
    %v1857 = vadd.f32 %v1670, %v1825
    %v1858 = vadd.f32 %v1629, %v1784
    %v1859 = vadd.f32 %v1672, %v1827
    %v1860 = vadd.f32 %v1632, %v1787
    %v1861 = vadd.f32 %v1675, %v1830
    %v1862 = vadd.f32 %v1634, %v1789
    %v1863 = vadd.f32 %v1677, %v1832
    %v1864 = vadd.f32 %v1637, %v1792
    %v1865 = vadd.f32 %v1680, %v1835
    %v1866 = vadd.f32 %v1639, %v1794
    %v1867 = vadd.f32 %v1682, %v1837
    %v1868 = vadd.f32 %v1642, %v1797
    %v1869 = vadd.f32 %v1685, %v1840
    %v1870 = vadd.f32 %v1644, %v1799
    %v1871 = vadd.f32 %v1687, %v1842
    %v1872 = vadd.f32 %v1647, %v1802
    %v1873 = vadd.f32 %v1690, %v1845
    %v1874 = vld [vmem:[%s8] sm:$0x3]
    %v1876 = vperm.slane %v1874, 0
    %v1877 = vperm.slane %v1874, 1
    %v1880 = vadd.f32 %v1848, %v1876
    %v1881 = vadd.f32 %v1849, %v1877
    %v1882 = vadd.f32 %v1850, %v1876
    %v1883 = vadd.f32 %v1851, %v1877
    %v1884 = vadd.f32 %v1852, %v1876
    %v1885 = vadd.f32 %v1853, %v1877
    %v1886 = vadd.f32 %v1854, %v1876
    %v1887 = vadd.f32 %v1855, %v1877
    %v1888 = vadd.f32 %v1856, %v1876
    %v1889 = vadd.f32 %v1857, %v1877
    %v1890 = vadd.f32 %v1858, %v1876
    %v1891 = vadd.f32 %v1859, %v1877
    %v1892 = vadd.f32 %v1860, %v1876
    %v1893 = vadd.f32 %v1861, %v1877
    %v1894 = vadd.f32 %v1862, %v1876
    %v1895 = vadd.f32 %v1863, %v1877
    %v1896 = vadd.f32 %v1864, %v1876
    %v1897 = vadd.f32 %v1865, %v1877
    %v1898 = vadd.f32 %v1866, %v1876
    %v1899 = vadd.f32 %v1867, %v1877
    %v1900 = vadd.f32 %v1868, %v1876
    %v1901 = vadd.f32 %v1869, %v1877
    %v1902 = vadd.f32 %v1870, %v1876
    %v1903 = vadd.f32 %v1871, %v1877
    %v1904 = vadd.f32 %v1872, %v1876
    %v1905 = vadd.f32 %v1873, %v1877
    %vm1906 = vcmp.ge.f32.partialorder %v1880, 0.0
    %vm1907 = vcmp.ge.f32.partialorder %v1881, 0.0
    %vm1908 = vcmp.ge.f32.partialorder %v1882, 0.0
    %vm1909 = vcmp.ge.f32.partialorder %v1883, 0.0
    %vm1910 = vcmp.ge.f32.partialorder %v1884, 0.0
    %vm1911 = vcmp.ge.f32.partialorder %v1885, 0.0
    %vm1912 = vcmp.ge.f32.partialorder %v1886, 0.0
    %vm1913 = vcmp.ge.f32.partialorder %v1887, 0.0
    %vm1914 = vcmp.ge.f32.partialorder %v1888, 0.0
    %vm1915 = vcmp.ge.f32.partialorder %v1889, 0.0
    %vm1916 = vcmp.ge.f32.partialorder %v1890, 0.0
    %vm1917 = vcmp.ge.f32.partialorder %v1891, 0.0
    %vm1918 = vcmp.ge.f32.partialorder %v1892, 0.0
    %vm1919 = vcmp.ge.f32.partialorder %v1893, 0.0
    %vm1920 = vcmp.ge.f32.partialorder %v1894, 0.0
    %vm1921 = vcmp.ge.f32.partialorder %v1895, 0.0
    %vm1922 = vcmp.ge.f32.partialorder %v1896, 0.0
    %vm1923 = vcmp.ge.f32.partialorder %v1897, 0.0
    %vm1924 = vcmp.ge.f32.partialorder %v1898, 0.0
    %vm1925 = vcmp.ge.f32.partialorder %v1899, 0.0
    %vm1926 = vcmp.ge.f32.partialorder %v1900, 0.0
    %vm1927 = vcmp.ge.f32.partialorder %v1901, 0.0
    %vm1928 = vcmp.ge.f32.partialorder %v1902, 0.0
    %vm1929 = vcmp.ge.f32.partialorder %v1903, 0.0
    %vm1930 = vcmp.ge.f32.partialorder %v1904, 0.0
    %vm1931 = vcmp.ge.f32.partialorder %v1905, 0.0
    %v1932 = vmul.f32 %v1880, 0.01
    %v1933 = vmul.f32 %v1881, 0.01
    %v1934 = vmul.f32 %v1882, 0.01
    %v1935 = vmul.f32 %v1883, 0.01
    %v1936 = vmul.f32 %v1884, 0.01
    %v1937 = vmul.f32 %v1885, 0.01
    %v1938 = vmul.f32 %v1886, 0.01
    %v1939 = vmul.f32 %v1887, 0.01
    %v1940 = vmul.f32 %v1888, 0.01
    %v1941 = vmul.f32 %v1889, 0.01
    %v1942 = vmul.f32 %v1890, 0.01
    %v1943 = vmul.f32 %v1891, 0.01
    %v1944 = vmul.f32 %v1892, 0.01
    %v1945 = vmul.f32 %v1893, 0.01
    %v1946 = vmul.f32 %v1894, 0.01
    %v1947 = vmul.f32 %v1895, 0.01
    %v1948 = vmul.f32 %v1896, 0.01
    %v1949 = vmul.f32 %v1897, 0.01
    %v1950 = vmul.f32 %v1898, 0.01
    %v1951 = vmul.f32 %v1899, 0.01
    %v1952 = vmul.f32 %v1900, 0.01
    %v1953 = vmul.f32 %v1901, 0.01
    %v1954 = vmul.f32 %v1902, 0.01
    %v1955 = vmul.f32 %v1903, 0.01
    %v1956 = vmul.f32 %v1904, 0.01
    %v1957 = vmul.f32 %v1905, 0.01
    %v1958 = vsel %vm1906, %v1880, %v1932
    %v1959 = vsel %vm1907, %v1881, %v1933
    %v1960 = vsel %vm1908, %v1882, %v1934
    %v1961 = vsel %vm1909, %v1883, %v1935
    %v1962 = vsel %vm1910, %v1884, %v1936
    %v1963 = vsel %vm1911, %v1885, %v1937
    %v1964 = vsel %vm1912, %v1886, %v1938
    %v1965 = vsel %vm1913, %v1887, %v1939
    %v1966 = vsel %vm1914, %v1888, %v1940
    %v1967 = vsel %vm1915, %v1889, %v1941
    %v1968 = vsel %vm1916, %v1890, %v1942
    %v1969 = vsel %vm1917, %v1891, %v1943
    %v1970 = vsel %vm1918, %v1892, %v1944
    %v1971 = vsel %vm1919, %v1893, %v1945
    %v1972 = vsel %vm1920, %v1894, %v1946
    %v1973 = vsel %vm1921, %v1895, %v1947
    %v1974 = vsel %vm1922, %v1896, %v1948
    %v1975 = vsel %vm1923, %v1897, %v1949
    %v1976 = vsel %vm1924, %v1898, %v1950
    %v1977 = vsel %vm1925, %v1899, %v1951
    %v1978 = vsel %vm1926, %v1900, %v1952
    %v1979 = vsel %vm1927, %v1901, %v1953
    %v1980 = vsel %vm1928, %v1902, %v1954
    %v1981 = vsel %vm1929, %v1903, %v1955
    %v1982 = vsel %vm1930, %v1904, %v1956
    %v1983 = vsel %vm1931, %v1905, %v1957
    %v1984 = vld [vmem:[%s9] sm:$0x3]
    %v1986 = vperm.slane %v1984, 0
    %v1987 = vperm.slane %v1984, 1
    %v1990 = vmul.f32 %v1958, %v1986
    %v1991 = vmul.f32 %v1959, %v1987
    %v1992 = vmul.f32 %v1960, %v1986
    %v1993 = vmul.f32 %v1961, %v1987
    %v1994 = vmul.f32 %v1962, %v1986
    %v1995 = vmul.f32 %v1963, %v1987
    %v1996 = vmul.f32 %v1964, %v1986
    %v1997 = vmul.f32 %v1965, %v1987
    %v1998 = vmul.f32 %v1966, %v1986
    %v1999 = vmul.f32 %v1967, %v1987
    %v2000 = vmul.f32 %v1968, %v1986
    %v2001 = vmul.f32 %v1969, %v1987
    %v2002 = vmul.f32 %v1970, %v1986
    %v2003 = vmul.f32 %v1971, %v1987
    %v2004 = vmul.f32 %v1972, %v1986
    %v2005 = vmul.f32 %v1973, %v1987
    %v2006 = vmul.f32 %v1974, %v1986
    %v2007 = vmul.f32 %v1975, %v1987
    %v2008 = vmul.f32 %v1976, %v1986
    %v2009 = vmul.f32 %v1977, %v1987
    %v2010 = vmul.f32 %v1978, %v1986
    %v2011 = vmul.f32 %v1979, %v1987
    %v2012 = vmul.f32 %v1980, %v1986
    %v2013 = vmul.f32 %v1981, %v1987
    %v2014 = vmul.f32 %v1982, %v1986
    %v2015 = vmul.f32 %v1983, %v1987
    %vm2016 = vcmask 261120
    %v2017 = vsel %vm2016, %v1991, 0.0
    %v2018 = vadd.f32 %v1990, %v2017
    %2019 = vadd.xlane.f32.xlu0 %v2018
    %v2020 = vpop.xlane.xlu0 %2019
    %v2021 = vsel %vm2016, %v1993, 0.0
    %v2022 = vadd.f32 %v1992, %v2021
    %2023 = vadd.xlane.f32.xlu0 %v2022
    %v2024 = vpop.xlane.xlu0 %2023
    %v2025 = vsel %vm2016, %v1995, 0.0
    %v2026 = vadd.f32 %v1994, %v2025
    %2027 = vadd.xlane.f32.xlu0 %v2026
    %v2028 = vpop.xlane.xlu0 %2027
    %v2029 = vsel %vm2016, %v1997, 0.0
    %v2030 = vadd.f32 %v1996, %v2029
    %2031 = vadd.xlane.f32.xlu0 %v2030
    %v2032 = vpop.xlane.xlu0 %2031
    %v2033 = vsel %vm2016, %v1999, 0.0
    %v2034 = vadd.f32 %v1998, %v2033
    %2035 = vadd.xlane.f32.xlu0 %v2034
    %v2036 = vpop.xlane.xlu0 %2035
    %v2037 = vsel %vm2016, %v2001, 0.0
    %v2038 = vadd.f32 %v2000, %v2037
    %2039 = vadd.xlane.f32.xlu0 %v2038
    %v2040 = vpop.xlane.xlu0 %2039
    %v2041 = vsel %vm2016, %v2003, 0.0
    %v2042 = vadd.f32 %v2002, %v2041
    %2043 = vadd.xlane.f32.xlu0 %v2042
    %v2044 = vpop.xlane.xlu0 %2043
    %v2045 = vsel %vm2016, %v2005, 0.0
    %v2046 = vadd.f32 %v2004, %v2045
    %2047 = vadd.xlane.f32.xlu0 %v2046
    %v2048 = vpop.xlane.xlu0 %2047
    %v2049 = vsel %vm2016, %v2007, 0.0
    %v2050 = vadd.f32 %v2006, %v2049
    %2051 = vadd.xlane.f32.xlu0 %v2050
    %v2052 = vpop.xlane.xlu0 %2051
    %v2053 = vsel %vm2016, %v2009, 0.0
    %v2054 = vadd.f32 %v2008, %v2053
    %2055 = vadd.xlane.f32.xlu0 %v2054
    %v2056 = vpop.xlane.xlu0 %2055
    %v2057 = vsel %vm2016, %v2011, 0.0
    %v2058 = vadd.f32 %v2010, %v2057
    %2059 = vadd.xlane.f32.xlu0 %v2058
    %v2060 = vpop.xlane.xlu0 %2059
    %v2061 = vsel %vm2016, %v2013, 0.0
    %v2062 = vadd.f32 %v2012, %v2061
    %2063 = vadd.xlane.f32.xlu0 %v2062
    %v2064 = vpop.xlane.xlu0 %2063
    %v2065 = vsel %vm2016, %v2015, 0.0
    %v2066 = vadd.f32 %v2014, %v2065
    %2067 = vadd.xlane.f32.xlu0 %v2066
    %v2068 = vpop.xlane.xlu0 %2067
    %v2069 = vld [vmem:[#allocation2] sm:$0x1]
    %v2071 = vperm.slane %v2069, 0
    %2072 = vset.pattern.permute.xlu0 0
    %2073 = vperm.xlu0 %2072, %v2071
    %v2074 = vpop.permute.xlu0 %2073
    %v2076 = vadd.f32 %v2020, %v2074
    %v2077 = vadd.f32 %v2024, %v2074
    %v2078 = vadd.f32 %v2028, %v2074
    %v2079 = vadd.f32 %v2032, %v2074
    %v2080 = vadd.f32 %v2036, %v2074
    %v2081 = vadd.f32 %v2040, %v2074
    %v2082 = vadd.f32 %v2044, %v2074
    %v2083 = vadd.f32 %v2048, %v2074
    %v2084 = vadd.f32 %v2052, %v2074
    %v2085 = vadd.f32 %v2056, %v2074
    %v2086 = vadd.f32 %v2060, %v2074
    %v2087 = vadd.f32 %v2064, %v2074
    %v2088 = vadd.f32 %v2068, %v2074
    %vm2089 = vcmp.ge.f32.partialorder %v2076, 0.0
    %vm2090 = vcmp.ge.f32.partialorder %v2077, 0.0
    %vm2091 = vcmp.ge.f32.partialorder %v2078, 0.0
    %vm2092 = vcmp.ge.f32.partialorder %v2079, 0.0
    %vm2093 = vcmp.ge.f32.partialorder %v2080, 0.0
    %vm2094 = vcmp.ge.f32.partialorder %v2081, 0.0
    %vm2095 = vcmp.ge.f32.partialorder %v2082, 0.0
    %vm2096 = vcmp.ge.f32.partialorder %v2083, 0.0
    %vm2097 = vcmp.ge.f32.partialorder %v2084, 0.0
    %vm2098 = vcmp.ge.f32.partialorder %v2085, 0.0
    %vm2099 = vcmp.ge.f32.partialorder %v2086, 0.0
    %vm2100 = vcmp.ge.f32.partialorder %v2087, 0.0
    %vm2101 = vcmp.ge.f32.partialorder %v2088, 0.0
    %v2102 = vmul.f32 %v2076, 0.01
    %v2103 = vmul.f32 %v2077, 0.01
    %v2104 = vmul.f32 %v2078, 0.01
    %v2105 = vmul.f32 %v2079, 0.01
    %v2106 = vmul.f32 %v2080, 0.01
    %v2107 = vmul.f32 %v2081, 0.01
    %v2108 = vmul.f32 %v2082, 0.01
    %v2109 = vmul.f32 %v2083, 0.01
    %v2110 = vmul.f32 %v2084, 0.01
    %v2111 = vmul.f32 %v2085, 0.01
    %v2112 = vmul.f32 %v2086, 0.01
    %v2113 = vmul.f32 %v2087, 0.01
    %v2114 = vmul.f32 %v2088, 0.01
    %v2115 = vsel %vm2089, %v2076, %v2102
    %v2116 = vsel %vm2090, %v2077, %v2103
    %v2117 = vsel %vm2091, %v2078, %v2104
    %v2118 = vsel %vm2092, %v2079, %v2105
    %v2119 = vsel %vm2093, %v2080, %v2106
    %v2120 = vsel %vm2094, %v2081, %v2107
    %v2121 = vsel %vm2095, %v2082, %v2108
    %v2122 = vsel %vm2096, %v2083, %v2109
    %v2123 = vsel %vm2097, %v2084, %v2110
    %v2124 = vsel %vm2098, %v2085, %v2111
    %v2125 = vsel %vm2099, %v2086, %v2112
    %v2126 = vsel %vm2100, %v2087, %v2113
    %v2127 = vsel %vm2101, %v2088, %v2114
    %v2141 = vlaneseq
    %v2142 = vand.u32 %v2141, 127
    %v2143 = vperm.slane %v2115, %v2142
    %v2144 = vperm.slane %v2116, %v2142
    %v2145 = vperm.slane %v2117, %v2142
    %v2146 = vperm.slane %v2118, %v2142
    %v2147 = vperm.slane %v2119, %v2142
    %v2148 = vperm.slane %v2120, %v2142
    %v2149 = vperm.slane %v2121, %v2142
    %v2150 = vperm.slane %v2122, %v2142
    %v2151 = vperm.slane %v2123, %v2142
    %v2152 = vperm.slane %v2124, %v2142
    %v2153 = vperm.slane %v2125, %v2142
    %v2154 = vperm.slane %v2126, %v2142
    %v2155 = vperm.slane %v2127, %v2142
    %vm2156 = vcmask 1041409
    %v2157 = vsel %vm2156, %v2144, %v2143
    %vm2158 = vcmask 1042434
    %v2159 = vsel %vm2158, %v2145, %v2157
    %vm2160 = vcmask 1043459
    %v2161 = vsel %vm2160, %v2146, %v2159
    %vm2162 = vcmask 1044484
    %v2163 = vsel %vm2162, %v2147, %v2161
    %vm2164 = vcmask 1045509
    %v2165 = vsel %vm2164, %v2148, %v2163
    %vm2166 = vcmask 1046534
    %v2167 = vsel %vm2166, %v2149, %v2165
    %vm2168 = vcmask 1047559
    %v2169 = vsel %vm2168, %v2150, %v2167
    %v2170 = vsel %vm2156, %v2152, %v2151
    %v2171 = vsel %vm2158, %v2153, %v2170
    %v2172 = vsel %vm2160, %v2154, %v2171
    %v2173 = vsel %vm2162, %v2155, %v2172
    %2176 = vxpose.xlu0.b32.start [1/16] %v2169, 128
    %2177 = vxpose.xlu0.b32.cont [2/16] %v2173, 128
    %2178 = vxpose.xlu0.b32.cont [3/16] 0.0, 128
    %2179 = vxpose.xlu0.b32.cont [4/16] 0.0, 128
    %2180 = vxpose.xlu0.b32.cont [5/16] 0.0, 128
    %2181 = vxpose.xlu0.b32.cont [6/16] 0.0, 128
    %2182 = vxpose.xlu0.b32.cont [7/16] 0.0, 128
    %2183 = vxpose.xlu0.b32.cont [8/16] 0.0, 128
    %2184 = vxpose.xlu0.b32.cont [9/16] 0.0, 128
    %2185 = vxpose.xlu0.b32.cont [10/16] 0.0, 128
    %2186 = vxpose.xlu0.b32.cont [11/16] 0.0, 128
    %2187 = vxpose.xlu0.b32.cont [12/16] 0.0, 128
    %2188 = vxpose.xlu0.b32.cont [13/16] 0.0, 128
    %2189 = vxpose.xlu0.b32.cont [14/16] 0.0, 128
    %2190 = vxpose.xlu0.b32.cont [15/16] 0.0, 128
    %2191 = vxpose.xlu0.b32.end [16/16] 0.0, 128
    %v2192 = vpop.trf.xlu0
    %v2193 = vpop.trf.xlu0
    %v2194 = vpop.trf.xlu0
    %v2195 = vpop.trf.xlu0
    %v2196 = vpop.trf.xlu0
    %v2197 = vpop.trf.xlu0
    %v2198 = vpop.trf.xlu0
    %v2199 = vpop.trf.xlu0
    %v2200 = vpop.trf.xlu0
    %v2201 = vpop.trf.xlu0
    %v2202 = vpop.trf.xlu0
    %v2203 = vpop.trf.xlu0
    %v2204 = vpop.trf.xlu0
    %v2205 = vpop.trf.xlu0
    %v2206 = vpop.trf.xlu0
    %v2207 = vpop.trf.xlu0
    %v2208 = vpack.c.bf16 %v2192, %v2192
    %v2209 = vld [vmem:[%s11] sm:$0xff]
    %v2210 = vld [vmem:[%s11 + $0x8] sm:$0xff]
    %v2211 = vld [vmem:[%s11 + $0x10] sm:$0x77]
    %v2212 = vld [vmem:[%s11 + $0x18] sm:$0x77]
    %v2217 = vunpack.c.l.b16 %v2209
    %v2218 = vunpack.c.h.b16 %v2209
    %v2219 = vunpack.c.l.b16 %v2210
    %v2220 = vunpack.c.h.b16 %v2210
    %v2221 = vunpack.c.l.b16 %v2211
    %v2222 = vunpack.c.h.b16 %v2211
    %v2223 = vunpack.c.l.b16 %v2212
    %v2224 = vunpack.c.h.b16 %v2212
    %v2225 = vpack.c.b16 %v2221, %v2217
    %v2226 = vpack.c.b16 %v2222, %v2218
    %v2227 = vpack.c.b16 %v2223, %v2219
    %v2228 = vpack.c.b16 %v2224, %v2220
    %vm2229 = vcmask 105472
    %v2231 = vsel %vm2229, %v2208, 0
    %vm2233 = vcmask 1045504
    %vm2234 = vcmask 1046528
    %v2235 = vsel %vm2233, 4294967295, 65535
    %v2236 = vsel %vm2234, %v2235, 0
    %v2238 = vand.u32 %v2225, %v2236
    %v2241 = vand.u32 %v2226, %v2236
    %v2244 = vand.u32 %v2227, %v2236
    %v2247 = vand.u32 %v2228, %v2236
    %2249 = vmatpush.bf16.msra.mxu0 0
    %2250 = vmatpush.bf16.msra.mxu0 0
    %2251 = vmatpush.bf16.msra.mxu0 0
    %2252 = vmatpush.bf16.msra.mxu0 0
    %2253 = vmatpush.bf16.msra.mxu0 0
    %2254 = vmatpush.bf16.msra.mxu0 0
    %2255 = vmatpush.bf16.msra.mxu0 0
    %2256 = vmatpush.bf16.msra.mxu0 %v2238
    %2257 = vmatmul.bf16.gmra.mxu0 %v2231
    %v2258 = vpop.f32.mrf.mxu0
    %v2259 = vadd.f32 0.0, %v2258
    %v2260 = vpop.f32.mrf.mxu0
    %2261 = vdwg.mxu0
    %2262 = vmatpush.bf16.msra.mxu0 0
    %2263 = vmatpush.bf16.msra.mxu0 0
    %2264 = vmatpush.bf16.msra.mxu0 0
    %2265 = vmatpush.bf16.msra.mxu0 0
    %2266 = vmatpush.bf16.msra.mxu0 0
    %2267 = vmatpush.bf16.msra.mxu0 0
    %2268 = vmatpush.bf16.msra.mxu0 0
    %2269 = vmatpush.bf16.msra.mxu0 %v2241
    %2270 = vmatmul.bf16.gmra.mxu0 %v2231
    %v2271 = vpop.f32.mrf.mxu0
    %v2272 = vadd.f32 0.0, %v2271
    %v2273 = vpop.f32.mrf.mxu0
    %2274 = vdwg.mxu0
    %2275 = vmatpush.bf16.msra.mxu0 0
    %2276 = vmatpush.bf16.msra.mxu0 0
    %2277 = vmatpush.bf16.msra.mxu0 0
    %2278 = vmatpush.bf16.msra.mxu0 0
    %2279 = vmatpush.bf16.msra.mxu0 0
    %2280 = vmatpush.bf16.msra.mxu0 0
    %2281 = vmatpush.bf16.msra.mxu0 0
    %2282 = vmatpush.bf16.msra.mxu0 %v2244
    %2283 = vmatmul.bf16.gmra.mxu0 %v2231
    %v2284 = vpop.f32.mrf.mxu0
    %v2285 = vadd.f32 0.0, %v2284
    %v2286 = vpop.f32.mrf.mxu0
    %2287 = vdwg.mxu0
    %2288 = vmatpush.bf16.msra.mxu0 0
    %2289 = vmatpush.bf16.msra.mxu0 0
    %2290 = vmatpush.bf16.msra.mxu0 0
    %2291 = vmatpush.bf16.msra.mxu0 0
    %2292 = vmatpush.bf16.msra.mxu0 0
    %2293 = vmatpush.bf16.msra.mxu0 0
    %2294 = vmatpush.bf16.msra.mxu0 0
    %2295 = vmatpush.bf16.msra.mxu0 %v2247
    %2296 = vmatmul.bf16.gmra.mxu0 %v2231
    %v2297 = vpop.f32.mrf.mxu0
    %v2298 = vadd.f32 0.0, %v2297
    %v2299 = vpop.f32.mrf.mxu0
    %2300 = vdwg.mxu0
    %vm2301 = vcmp.ge.f32.partialorder %v2259, 0.0
    %vm2302 = vcmp.ge.f32.partialorder %v2272, 0.0
    %vm2303 = vcmp.ge.f32.partialorder %v2285, 0.0
    %vm2304 = vcmp.ge.f32.partialorder %v2298, 0.0
    %v2305 = vmul.f32 %v2259, 0.01
    %v2306 = vmul.f32 %v2272, 0.01
    %v2307 = vmul.f32 %v2285, 0.01
    %v2308 = vmul.f32 %v2298, 0.01
    %v2309 = vsel %vm2301, %v2259, %v2305
    %v2310 = vsel %vm2302, %v2272, %v2306
    %v2311 = vsel %vm2303, %v2285, %v2307
    %v2312 = vsel %vm2304, %v2298, %v2308
    %v2313 = vpack.c.bf16 %v2309, %v2309
    %v2314 = vpack.c.bf16 %v2310, %v2310
    %v2315 = vpack.c.bf16 %v2311, %v2311
    %v2316 = vpack.c.bf16 %v2312, %v2312
    %v2317 = vld [vmem:[#allocation12] sm:$0xff]
    %v2318 = vld [vmem:[#allocation12 + $0x8] sm:$0xff]
    %v2319 = vld [vmem:[#allocation12 + $0x10] sm:$0xff]
    %v2320 = vld [vmem:[#allocation12 + $0x18] sm:$0xff]
    %v2321 = vld [vmem:[#allocation12 + $0x20] sm:$0xff]
    %v2322 = vld [vmem:[#allocation12 + $0x28] sm:$0xff]
    %v2323 = vld [vmem:[#allocation12 + $0x30] sm:$0xff]
    %v2324 = vld [vmem:[#allocation12 + $0x38] sm:$0xff]
    %v2325 = vld [vmem:[#allocation12 + $0x40] sm:$0xff]
    %v2326 = vld [vmem:[#allocation12 + $0x48] sm:$0xff]
    %v2327 = vld [vmem:[#allocation12 + $0x50] sm:$0xff]
    %v2328 = vld [vmem:[#allocation12 + $0x58] sm:$0xff]
    %v2329 = vld [vmem:[#allocation12 + $0x60] sm:$0xff]
    %v2330 = vld [vmem:[#allocation12 + $0x68] sm:$0xff]
    %v2331 = vld [vmem:[#allocation12 + $0x70] sm:$0xff]
    %v2332 = vld [vmem:[#allocation12 + $0x78] sm:$0xff]
    %v2333 = vld [vmem:[#allocation12 + $0x80] sm:$0xff]
    %v2334 = vld [vmem:[#allocation12 + $0x88] sm:$0xff]
    %v2335 = vld [vmem:[#allocation12 + $0x90] sm:$0xff]
    %v2336 = vld [vmem:[#allocation12 + $0x98] sm:$0xff]
    %v2337 = vld [vmem:[#allocation12 + $0xa0] sm:$0xff]
    %v2338 = vld [vmem:[#allocation12 + $0xa8] sm:$0xff]
    %v2339 = vld [vmem:[#allocation12 + $0xb0] sm:$0xff]
    %v2340 = vld [vmem:[#allocation12 + $0xb8] sm:$0xff]
    %v2341 = vld [vmem:[#allocation12 + $0xc0] sm:$0xff]
    %v2342 = vld [vmem:[#allocation12 + $0xc8] sm:$0xff]
    %v2343 = vld [vmem:[#allocation12 + $0xd0] sm:$0xff]
    %v2344 = vld [vmem:[#allocation12 + $0xd8] sm:$0xff]
    %v2345 = vld [vmem:[#allocation12 + $0xe0] sm:$0xff]
    %v2346 = vld [vmem:[#allocation12 + $0xe8] sm:$0xff]
    %v2347 = vld [vmem:[#allocation12 + $0xf0] sm:$0xff]
    %v2348 = vld [vmem:[#allocation12 + $0xf8] sm:$0xff]
    %v2349 = vld [vmem:[#allocation12 + $0x100] sm:$0xff]
    %v2350 = vld [vmem:[#allocation12 + $0x108] sm:$0xff]
    %v2351 = vld [vmem:[#allocation12 + $0x110] sm:$0xff]
    %v2352 = vld [vmem:[#allocation12 + $0x118] sm:$0xff]
    %v2353 = vld [vmem:[#allocation12 + $0x120] sm:$0xff]
    %v2354 = vld [vmem:[#allocation12 + $0x128] sm:$0xff]
    %v2355 = vld [vmem:[#allocation12 + $0x130] sm:$0xff]
    %v2356 = vld [vmem:[#allocation12 + $0x138] sm:$0xff]
    %v2357 = vld [vmem:[#allocation12 + $0x140] sm:$0xff]
    %v2358 = vld [vmem:[#allocation12 + $0x148] sm:$0xff]
    %v2359 = vld [vmem:[#allocation12 + $0x150] sm:$0xff]
    %v2360 = vld [vmem:[#allocation12 + $0x158] sm:$0xff]
    %v2361 = vld [vmem:[#allocation12 + $0x160] sm:$0xff]
    %v2362 = vld [vmem:[#allocation12 + $0x168] sm:$0xff]
    %v2363 = vld [vmem:[#allocation12 + $0x170] sm:$0xff]
    %v2364 = vld [vmem:[#allocation12 + $0x178] sm:$0xff]
    %v2365 = vld [vmem:[#allocation12 + $0x180] sm:$0xff]
    %v2366 = vld [vmem:[#allocation12 + $0x188] sm:$0xff]
    %v2367 = vld [vmem:[#allocation12 + $0x190] sm:$0xff]
    %v2368 = vld [vmem:[#allocation12 + $0x198] sm:$0xff]
    %v2369 = vld [vmem:[#allocation12 + $0x1a0] sm:$0xff]
    %v2370 = vld [vmem:[#allocation12 + $0x1a8] sm:$0xff]
    %v2371 = vld [vmem:[#allocation12 + $0x1b0] sm:$0xff]
    %v2372 = vld [vmem:[#allocation12 + $0x1b8] sm:$0xff]
    %v2373 = vld [vmem:[#allocation12 + $0x1c0] sm:$0xff]
    %v2374 = vld [vmem:[#allocation12 + $0x1c8] sm:$0xff]
    %v2375 = vld [vmem:[#allocation12 + $0x1d0] sm:$0xff]
    %v2376 = vld [vmem:[#allocation12 + $0x1d8] sm:$0xff]
    %v2377 = vld [vmem:[#allocation12 + $0x1e0] sm:$0xff]
    %v2378 = vld [vmem:[#allocation12 + $0x1e8] sm:$0xff]
    %v2379 = vld [vmem:[#allocation12 + $0x1f0] sm:$0xff]
    %v2380 = vld [vmem:[#allocation12 + $0x1f8] sm:$0xff]
    %v2381 = vld [vmem:[#allocation12 + $0x200] sm:$0xff]
    %v2382 = vld [vmem:[#allocation12 + $0x208] sm:$0xff]
    %v2383 = vld [vmem:[#allocation12 + $0x210] sm:$0xff]
    %v2384 = vld [vmem:[#allocation12 + $0x218] sm:$0xff]
    %v2385 = vld [vmem:[#allocation12 + $0x220] sm:$0xff]
    %v2386 = vld [vmem:[#allocation12 + $0x228] sm:$0xff]
    %v2387 = vld [vmem:[#allocation12 + $0x230] sm:$0xff]
    %v2388 = vld [vmem:[#allocation12 + $0x238] sm:$0xff]
    %v2389 = vld [vmem:[#allocation12 + $0x240] sm:$0xff]
    %v2390 = vld [vmem:[#allocation12 + $0x248] sm:$0xff]
    %v2391 = vld [vmem:[#allocation12 + $0x250] sm:$0xff]
    %v2392 = vld [vmem:[#allocation12 + $0x258] sm:$0xff]
    %v2393 = vld [vmem:[#allocation12 + $0x260] sm:$0xff]
    %v2394 = vld [vmem:[#allocation12 + $0x268] sm:$0xff]
    %v2395 = vld [vmem:[#allocation12 + $0x270] sm:$0xff]
    %v2396 = vld [vmem:[#allocation12 + $0x278] sm:$0xff]
    %v2397 = vld [vmem:[#allocation12 + $0x280] sm:$0xff]
    %v2398 = vld [vmem:[#allocation12 + $0x288] sm:$0xff]
    %v2399 = vld [vmem:[#allocation12 + $0x290] sm:$0xff]
    %v2400 = vld [vmem:[#allocation12 + $0x298] sm:$0xff]
    %v2401 = vld [vmem:[#allocation12 + $0x2a0] sm:$0xff]
    %v2402 = vld [vmem:[#allocation12 + $0x2a8] sm:$0xff]
    %v2403 = vld [vmem:[#allocation12 + $0x2b0] sm:$0xff]
    %v2404 = vld [vmem:[#allocation12 + $0x2b8] sm:$0xff]
    %v2405 = vld [vmem:[#allocation12 + $0x2c0] sm:$0xff]
    %v2406 = vld [vmem:[#allocation12 + $0x2c8] sm:$0xff]
    %v2407 = vld [vmem:[#allocation12 + $0x2d0] sm:$0xff]
    %v2408 = vld [vmem:[#allocation12 + $0x2d8] sm:$0xff]
    %v2409 = vld [vmem:[#allocation12 + $0x2e0] sm:$0xff]
    %v2410 = vld [vmem:[#allocation12 + $0x2e8] sm:$0xff]
    %v2411 = vld [vmem:[#allocation12 + $0x2f0] sm:$0xff]
    %v2412 = vld [vmem:[#allocation12 + $0x2f8] sm:$0xff]
    %v2413 = vld [vmem:[#allocation12 + $0x300] sm:$0xff]
    %v2414 = vld [vmem:[#allocation12 + $0x308] sm:$0xff]
    %v2415 = vld [vmem:[#allocation12 + $0x310] sm:$0xff]
    %v2416 = vld [vmem:[#allocation12 + $0x318] sm:$0xff]
    %v2417 = vld [vmem:[#allocation12 + $0x320] sm:$0xff]
    %v2418 = vld [vmem:[#allocation12 + $0x328] sm:$0xff]
    %v2419 = vld [vmem:[#allocation12 + $0x330] sm:$0xff]
    %v2420 = vld [vmem:[#allocation12 + $0x338] sm:$0xff]
    %v2421 = vld [vmem:[#allocation12 + $0x340] sm:$0xff]
    %v2422 = vld [vmem:[#allocation12 + $0x348] sm:$0xff]
    %v2423 = vld [vmem:[#allocation12 + $0x350] sm:$0xff]
    %v2424 = vld [vmem:[#allocation12 + $0x358] sm:$0xff]
    %v2425 = vld [vmem:[#allocation12 + $0x360] sm:$0xff]
    %v2426 = vld [vmem:[#allocation12 + $0x368] sm:$0xff]
    %v2427 = vld [vmem:[#allocation12 + $0x370] sm:$0xff]
    %v2428 = vld [vmem:[#allocation12 + $0x378] sm:$0xff]
    %v2429 = vld [vmem:[#allocation12 + $0x380] sm:$0xff]
    %v2430 = vld [vmem:[#allocation12 + $0x388] sm:$0xff]
    %v2431 = vld [vmem:[#allocation12 + $0x390] sm:$0xff]
    %v2432 = vld [vmem:[#allocation12 + $0x398] sm:$0xff]
    %v2433 = vld [vmem:[#allocation12 + $0x3a0] sm:$0xff]
    %v2434 = vld [vmem:[#allocation12 + $0x3a8] sm:$0xff]
    %v2435 = vld [vmem:[#allocation12 + $0x3b0] sm:$0xff]
    %v2436 = vld [vmem:[#allocation12 + $0x3b8] sm:$0xff]
    %v2437 = vld [vmem:[#allocation12 + $0x3c0] sm:$0xff]
    %v2438 = vld [vmem:[#allocation12 + $0x3c8] sm:$0xff]
    %v2439 = vld [vmem:[#allocation12 + $0x3d0] sm:$0xff]
    %v2440 = vld [vmem:[#allocation12 + $0x3d8] sm:$0xff]
    %v2441 = vld [vmem:[#allocation12 + $0x3e0] sm:$0xff]
    %v2442 = vld [vmem:[#allocation12 + $0x3e8] sm:$0xff]
    %v2443 = vld [vmem:[#allocation12 + $0x3f0] sm:$0xff]
    %v2444 = vld [vmem:[#allocation12 + $0x3f8] sm:$0xff]
    %v2573 = vunpack.c.l.b16 %v2317
    %v2574 = vunpack.c.h.b16 %v2317
    %v2575 = vunpack.c.l.b16 %v2318
    %v2576 = vunpack.c.h.b16 %v2318
    %v2577 = vunpack.c.l.b16 %v2319
    %v2578 = vunpack.c.h.b16 %v2319
    %v2579 = vunpack.c.l.b16 %v2320
    %v2580 = vunpack.c.h.b16 %v2320
    %v2581 = vunpack.c.l.b16 %v2321
    %v2582 = vunpack.c.h.b16 %v2321
    %v2583 = vunpack.c.l.b16 %v2322
    %v2584 = vunpack.c.h.b16 %v2322
    %v2585 = vunpack.c.l.b16 %v2323
    %v2586 = vunpack.c.h.b16 %v2323
    %v2587 = vunpack.c.l.b16 %v2324
    %v2588 = vunpack.c.h.b16 %v2324
    %v2589 = vunpack.c.l.b16 %v2325
    %v2590 = vunpack.c.h.b16 %v2325
    %v2591 = vunpack.c.l.b16 %v2326
    %v2592 = vunpack.c.h.b16 %v2326
    %v2593 = vunpack.c.l.b16 %v2327
    %v2594 = vunpack.c.h.b16 %v2327
    %v2595 = vunpack.c.l.b16 %v2328
    %v2596 = vunpack.c.h.b16 %v2328
    %v2597 = vunpack.c.l.b16 %v2329
    %v2598 = vunpack.c.h.b16 %v2329
    %v2599 = vunpack.c.l.b16 %v2330
    %v2600 = vunpack.c.h.b16 %v2330
    %v2601 = vunpack.c.l.b16 %v2331
    %v2602 = vunpack.c.h.b16 %v2331
    %v2603 = vunpack.c.l.b16 %v2332
    %v2604 = vunpack.c.h.b16 %v2332
    %v2605 = vunpack.c.l.b16 %v2333
    %v2606 = vunpack.c.h.b16 %v2333
    %v2607 = vunpack.c.l.b16 %v2334
    %v2608 = vunpack.c.h.b16 %v2334
    %v2609 = vunpack.c.l.b16 %v2335
    %v2610 = vunpack.c.h.b16 %v2335
    %v2611 = vunpack.c.l.b16 %v2336
    %v2612 = vunpack.c.h.b16 %v2336
    %v2613 = vunpack.c.l.b16 %v2337
    %v2614 = vunpack.c.h.b16 %v2337
    %v2615 = vunpack.c.l.b16 %v2338
    %v2616 = vunpack.c.h.b16 %v2338
    %v2617 = vunpack.c.l.b16 %v2339
    %v2618 = vunpack.c.h.b16 %v2339
    %v2619 = vunpack.c.l.b16 %v2340
    %v2620 = vunpack.c.h.b16 %v2340
    %v2621 = vunpack.c.l.b16 %v2341
    %v2622 = vunpack.c.h.b16 %v2341
    %v2623 = vunpack.c.l.b16 %v2342
    %v2624 = vunpack.c.h.b16 %v2342
    %v2625 = vunpack.c.l.b16 %v2343
    %v2626 = vunpack.c.h.b16 %v2343
    %v2627 = vunpack.c.l.b16 %v2344
    %v2628 = vunpack.c.h.b16 %v2344
    %v2629 = vunpack.c.l.b16 %v2345
    %v2630 = vunpack.c.h.b16 %v2345
    %v2631 = vunpack.c.l.b16 %v2346
    %v2632 = vunpack.c.h.b16 %v2346
    %v2633 = vunpack.c.l.b16 %v2347
    %v2634 = vunpack.c.h.b16 %v2347
    %v2635 = vunpack.c.l.b16 %v2348
    %v2636 = vunpack.c.h.b16 %v2348
    %v2637 = vunpack.c.l.b16 %v2349
    %v2638 = vunpack.c.h.b16 %v2349
    %v2639 = vunpack.c.l.b16 %v2350
    %v2640 = vunpack.c.h.b16 %v2350
    %v2641 = vunpack.c.l.b16 %v2351
    %v2642 = vunpack.c.h.b16 %v2351
    %v2643 = vunpack.c.l.b16 %v2352
    %v2644 = vunpack.c.h.b16 %v2352
    %v2645 = vunpack.c.l.b16 %v2353
    %v2646 = vunpack.c.h.b16 %v2353
    %v2647 = vunpack.c.l.b16 %v2354
    %v2648 = vunpack.c.h.b16 %v2354
    %v2649 = vunpack.c.l.b16 %v2355
    %v2650 = vunpack.c.h.b16 %v2355
    %v2651 = vunpack.c.l.b16 %v2356
    %v2652 = vunpack.c.h.b16 %v2356
    %v2653 = vunpack.c.l.b16 %v2357
    %v2654 = vunpack.c.h.b16 %v2357
    %v2655 = vunpack.c.l.b16 %v2358
    %v2656 = vunpack.c.h.b16 %v2358
    %v2657 = vunpack.c.l.b16 %v2359
    %v2658 = vunpack.c.h.b16 %v2359
    %v2659 = vunpack.c.l.b16 %v2360
    %v2660 = vunpack.c.h.b16 %v2360
    %v2661 = vunpack.c.l.b16 %v2361
    %v2662 = vunpack.c.h.b16 %v2361
    %v2663 = vunpack.c.l.b16 %v2362
    %v2664 = vunpack.c.h.b16 %v2362
    %v2665 = vunpack.c.l.b16 %v2363
    %v2666 = vunpack.c.h.b16 %v2363
    %v2667 = vunpack.c.l.b16 %v2364
    %v2668 = vunpack.c.h.b16 %v2364
    %v2669 = vunpack.c.l.b16 %v2365
    %v2670 = vunpack.c.h.b16 %v2365
    %v2671 = vunpack.c.l.b16 %v2366
    %v2672 = vunpack.c.h.b16 %v2366
    %v2673 = vunpack.c.l.b16 %v2367
    %v2674 = vunpack.c.h.b16 %v2367
    %v2675 = vunpack.c.l.b16 %v2368
    %v2676 = vunpack.c.h.b16 %v2368
    %v2677 = vunpack.c.l.b16 %v2369
    %v2678 = vunpack.c.h.b16 %v2369
    %v2679 = vunpack.c.l.b16 %v2370
    %v2680 = vunpack.c.h.b16 %v2370
    %v2681 = vunpack.c.l.b16 %v2371
    %v2682 = vunpack.c.h.b16 %v2371
    %v2683 = vunpack.c.l.b16 %v2372
    %v2684 = vunpack.c.h.b16 %v2372
    %v2685 = vunpack.c.l.b16 %v2373
    %v2686 = vunpack.c.h.b16 %v2373
    %v2687 = vunpack.c.l.b16 %v2374
    %v2688 = vunpack.c.h.b16 %v2374
    %v2689 = vunpack.c.l.b16 %v2375
    %v2690 = vunpack.c.h.b16 %v2375
    %v2691 = vunpack.c.l.b16 %v2376
    %v2692 = vunpack.c.h.b16 %v2376
    %v2693 = vunpack.c.l.b16 %v2377
    %v2694 = vunpack.c.h.b16 %v2377
    %v2695 = vunpack.c.l.b16 %v2378
    %v2696 = vunpack.c.h.b16 %v2378
    %v2697 = vunpack.c.l.b16 %v2379
    %v2698 = vunpack.c.h.b16 %v2379
    %v2699 = vunpack.c.l.b16 %v2380
    %v2700 = vunpack.c.h.b16 %v2380
    %v2701 = vunpack.c.l.b16 %v2381
    %v2702 = vunpack.c.h.b16 %v2381
    %v2703 = vunpack.c.l.b16 %v2382
    %v2704 = vunpack.c.h.b16 %v2382
    %v2705 = vunpack.c.l.b16 %v2383
    %v2706 = vunpack.c.h.b16 %v2383
    %v2707 = vunpack.c.l.b16 %v2384
    %v2708 = vunpack.c.h.b16 %v2384
    %v2709 = vunpack.c.l.b16 %v2385
    %v2710 = vunpack.c.h.b16 %v2385
    %v2711 = vunpack.c.l.b16 %v2386
    %v2712 = vunpack.c.h.b16 %v2386
    %v2713 = vunpack.c.l.b16 %v2387
    %v2714 = vunpack.c.h.b16 %v2387
    %v2715 = vunpack.c.l.b16 %v2388
    %v2716 = vunpack.c.h.b16 %v2388
    %v2717 = vunpack.c.l.b16 %v2389
    %v2718 = vunpack.c.h.b16 %v2389
    %v2719 = vunpack.c.l.b16 %v2390
    %v2720 = vunpack.c.h.b16 %v2390
    %v2721 = vunpack.c.l.b16 %v2391
    %v2722 = vunpack.c.h.b16 %v2391
    %v2723 = vunpack.c.l.b16 %v2392
    %v2724 = vunpack.c.h.b16 %v2392
    %v2725 = vunpack.c.l.b16 %v2393
    %v2726 = vunpack.c.h.b16 %v2393
    %v2727 = vunpack.c.l.b16 %v2394
    %v2728 = vunpack.c.h.b16 %v2394
    %v2729 = vunpack.c.l.b16 %v2395
    %v2730 = vunpack.c.h.b16 %v2395
    %v2731 = vunpack.c.l.b16 %v2396
    %v2732 = vunpack.c.h.b16 %v2396
    %v2733 = vunpack.c.l.b16 %v2397
    %v2734 = vunpack.c.h.b16 %v2397
    %v2735 = vunpack.c.l.b16 %v2398
    %v2736 = vunpack.c.h.b16 %v2398
    %v2737 = vunpack.c.l.b16 %v2399
    %v2738 = vunpack.c.h.b16 %v2399
    %v2739 = vunpack.c.l.b16 %v2400
    %v2740 = vunpack.c.h.b16 %v2400
    %v2741 = vunpack.c.l.b16 %v2401
    %v2742 = vunpack.c.h.b16 %v2401
    %v2743 = vunpack.c.l.b16 %v2402
    %v2744 = vunpack.c.h.b16 %v2402
    %v2745 = vunpack.c.l.b16 %v2403
    %v2746 = vunpack.c.h.b16 %v2403
    %v2747 = vunpack.c.l.b16 %v2404
    %v2748 = vunpack.c.h.b16 %v2404
    %v2749 = vunpack.c.l.b16 %v2405
    %v2750 = vunpack.c.h.b16 %v2405
    %v2751 = vunpack.c.l.b16 %v2406
    %v2752 = vunpack.c.h.b16 %v2406
    %v2753 = vunpack.c.l.b16 %v2407
    %v2754 = vunpack.c.h.b16 %v2407
    %v2755 = vunpack.c.l.b16 %v2408
    %v2756 = vunpack.c.h.b16 %v2408
    %v2757 = vunpack.c.l.b16 %v2409
    %v2758 = vunpack.c.h.b16 %v2409
    %v2759 = vunpack.c.l.b16 %v2410
    %v2760 = vunpack.c.h.b16 %v2410
    %v2761 = vunpack.c.l.b16 %v2411
    %v2762 = vunpack.c.h.b16 %v2411
    %v2763 = vunpack.c.l.b16 %v2412
    %v2764 = vunpack.c.h.b16 %v2412
    %v2765 = vunpack.c.l.b16 %v2413
    %v2766 = vunpack.c.h.b16 %v2413
    %v2767 = vunpack.c.l.b16 %v2414
    %v2768 = vunpack.c.h.b16 %v2414
    %v2769 = vunpack.c.l.b16 %v2415
    %v2770 = vunpack.c.h.b16 %v2415
    %v2771 = vunpack.c.l.b16 %v2416
    %v2772 = vunpack.c.h.b16 %v2416
    %v2773 = vunpack.c.l.b16 %v2417
    %v2774 = vunpack.c.h.b16 %v2417
    %v2775 = vunpack.c.l.b16 %v2418
    %v2776 = vunpack.c.h.b16 %v2418
    %v2777 = vunpack.c.l.b16 %v2419
    %v2778 = vunpack.c.h.b16 %v2419
    %v2779 = vunpack.c.l.b16 %v2420
    %v2780 = vunpack.c.h.b16 %v2420
    %v2781 = vunpack.c.l.b16 %v2421
    %v2782 = vunpack.c.h.b16 %v2421
    %v2783 = vunpack.c.l.b16 %v2422
    %v2784 = vunpack.c.h.b16 %v2422
    %v2785 = vunpack.c.l.b16 %v2423
    %v2786 = vunpack.c.h.b16 %v2423
    %v2787 = vunpack.c.l.b16 %v2424
    %v2788 = vunpack.c.h.b16 %v2424
    %v2789 = vunpack.c.l.b16 %v2425
    %v2790 = vunpack.c.h.b16 %v2425
    %v2791 = vunpack.c.l.b16 %v2426
    %v2792 = vunpack.c.h.b16 %v2426
    %v2793 = vunpack.c.l.b16 %v2427
    %v2794 = vunpack.c.h.b16 %v2427
    %v2795 = vunpack.c.l.b16 %v2428
    %v2796 = vunpack.c.h.b16 %v2428
    %v2797 = vunpack.c.l.b16 %v2429
    %v2798 = vunpack.c.h.b16 %v2429
    %v2799 = vunpack.c.l.b16 %v2430
    %v2800 = vunpack.c.h.b16 %v2430
    %v2801 = vunpack.c.l.b16 %v2431
    %v2802 = vunpack.c.h.b16 %v2431
    %v2803 = vunpack.c.l.b16 %v2432
    %v2804 = vunpack.c.h.b16 %v2432
    %v2805 = vunpack.c.l.b16 %v2433
    %v2806 = vunpack.c.h.b16 %v2433
    %v2807 = vunpack.c.l.b16 %v2434
    %v2808 = vunpack.c.h.b16 %v2434
    %v2809 = vunpack.c.l.b16 %v2435
    %v2810 = vunpack.c.h.b16 %v2435
    %v2811 = vunpack.c.l.b16 %v2436
    %v2812 = vunpack.c.h.b16 %v2436
    %v2813 = vunpack.c.l.b16 %v2437
    %v2814 = vunpack.c.h.b16 %v2437
    %v2815 = vunpack.c.l.b16 %v2438
    %v2816 = vunpack.c.h.b16 %v2438
    %v2817 = vunpack.c.l.b16 %v2439
    %v2818 = vunpack.c.h.b16 %v2439
    %v2819 = vunpack.c.l.b16 %v2440
    %v2820 = vunpack.c.h.b16 %v2440
    %v2821 = vunpack.c.l.b16 %v2441
    %v2822 = vunpack.c.h.b16 %v2441
    %v2823 = vunpack.c.l.b16 %v2442
    %v2824 = vunpack.c.h.b16 %v2442
    %v2825 = vunpack.c.l.b16 %v2443
    %v2826 = vunpack.c.h.b16 %v2443
    %v2827 = vunpack.c.l.b16 %v2444
    %v2828 = vunpack.c.h.b16 %v2444
    %v2829 = vpack.c.b16 %v2577, %v2573
    %v2830 = vpack.c.b16 %v2578, %v2574
    %v2831 = vpack.c.b16 %v2579, %v2575
    %v2832 = vpack.c.b16 %v2580, %v2576
    %v2833 = vpack.c.b16 %v2585, %v2581
    %v2834 = vpack.c.b16 %v2586, %v2582
    %v2835 = vpack.c.b16 %v2587, %v2583
    %v2836 = vpack.c.b16 %v2588, %v2584
    %v2837 = vpack.c.b16 %v2593, %v2589
    %v2838 = vpack.c.b16 %v2594, %v2590
    %v2839 = vpack.c.b16 %v2595, %v2591
    %v2840 = vpack.c.b16 %v2596, %v2592
    %v2841 = vpack.c.b16 %v2601, %v2597
    %v2842 = vpack.c.b16 %v2602, %v2598
    %v2843 = vpack.c.b16 %v2603, %v2599
    %v2844 = vpack.c.b16 %v2604, %v2600
    %v2845 = vpack.c.b16 %v2609, %v2605
    %v2846 = vpack.c.b16 %v2610, %v2606
    %v2847 = vpack.c.b16 %v2611, %v2607
    %v2848 = vpack.c.b16 %v2612, %v2608
    %v2849 = vpack.c.b16 %v2617, %v2613
    %v2850 = vpack.c.b16 %v2618, %v2614
    %v2851 = vpack.c.b16 %v2619, %v2615
    %v2852 = vpack.c.b16 %v2620, %v2616
    %v2853 = vpack.c.b16 %v2625, %v2621
    %v2854 = vpack.c.b16 %v2626, %v2622
    %v2855 = vpack.c.b16 %v2627, %v2623
    %v2856 = vpack.c.b16 %v2628, %v2624
    %v2857 = vpack.c.b16 %v2633, %v2629
    %v2858 = vpack.c.b16 %v2634, %v2630
    %v2859 = vpack.c.b16 %v2635, %v2631
    %v2860 = vpack.c.b16 %v2636, %v2632
    %v2861 = vpack.c.b16 %v2641, %v2637
    %v2862 = vpack.c.b16 %v2642, %v2638
    %v2863 = vpack.c.b16 %v2643, %v2639
    %v2864 = vpack.c.b16 %v2644, %v2640
    %v2865 = vpack.c.b16 %v2649, %v2645
    %v2866 = vpack.c.b16 %v2650, %v2646
    %v2867 = vpack.c.b16 %v2651, %v2647
    %v2868 = vpack.c.b16 %v2652, %v2648
    %v2869 = vpack.c.b16 %v2657, %v2653
    %v2870 = vpack.c.b16 %v2658, %v2654
    %v2871 = vpack.c.b16 %v2659, %v2655
    %v2872 = vpack.c.b16 %v2660, %v2656
    %v2873 = vpack.c.b16 %v2665, %v2661
    %v2874 = vpack.c.b16 %v2666, %v2662
    %v2875 = vpack.c.b16 %v2667, %v2663
    %v2876 = vpack.c.b16 %v2668, %v2664
    %v2877 = vpack.c.b16 %v2673, %v2669
    %v2878 = vpack.c.b16 %v2674, %v2670
    %v2879 = vpack.c.b16 %v2675, %v2671
    %v2880 = vpack.c.b16 %v2676, %v2672
    %v2881 = vpack.c.b16 %v2681, %v2677
    %v2882 = vpack.c.b16 %v2682, %v2678
    %v2883 = vpack.c.b16 %v2683, %v2679
    %v2884 = vpack.c.b16 %v2684, %v2680
    %v2885 = vpack.c.b16 %v2689, %v2685
    %v2886 = vpack.c.b16 %v2690, %v2686
    %v2887 = vpack.c.b16 %v2691, %v2687
    %v2888 = vpack.c.b16 %v2692, %v2688
    %v2889 = vpack.c.b16 %v2697, %v2693
    %v2890 = vpack.c.b16 %v2698, %v2694
    %v2891 = vpack.c.b16 %v2699, %v2695
    %v2892 = vpack.c.b16 %v2700, %v2696
    %v2893 = vpack.c.b16 %v2705, %v2701
    %v2894 = vpack.c.b16 %v2706, %v2702
    %v2895 = vpack.c.b16 %v2707, %v2703
    %v2896 = vpack.c.b16 %v2708, %v2704
    %v2897 = vpack.c.b16 %v2713, %v2709
    %v2898 = vpack.c.b16 %v2714, %v2710
    %v2899 = vpack.c.b16 %v2715, %v2711
    %v2900 = vpack.c.b16 %v2716, %v2712
    %v2901 = vpack.c.b16 %v2721, %v2717
    %v2902 = vpack.c.b16 %v2722, %v2718
    %v2903 = vpack.c.b16 %v2723, %v2719
    %v2904 = vpack.c.b16 %v2724, %v2720
    %v2905 = vpack.c.b16 %v2729, %v2725
    %v2906 = vpack.c.b16 %v2730, %v2726
    %v2907 = vpack.c.b16 %v2731, %v2727
    %v2908 = vpack.c.b16 %v2732, %v2728
    %v2909 = vpack.c.b16 %v2737, %v2733
    %v2910 = vpack.c.b16 %v2738, %v2734
    %v2911 = vpack.c.b16 %v2739, %v2735
    %v2912 = vpack.c.b16 %v2740, %v2736
    %v2913 = vpack.c.b16 %v2745, %v2741
    %v2914 = vpack.c.b16 %v2746, %v2742
    %v2915 = vpack.c.b16 %v2747, %v2743
    %v2916 = vpack.c.b16 %v2748, %v2744
    %v2917 = vpack.c.b16 %v2753, %v2749
    %v2918 = vpack.c.b16 %v2754, %v2750
    %v2919 = vpack.c.b16 %v2755, %v2751
    %v2920 = vpack.c.b16 %v2756, %v2752
    %v2921 = vpack.c.b16 %v2761, %v2757
    %v2922 = vpack.c.b16 %v2762, %v2758
    %v2923 = vpack.c.b16 %v2763, %v2759
    %v2924 = vpack.c.b16 %v2764, %v2760
    %v2925 = vpack.c.b16 %v2769, %v2765
    %v2926 = vpack.c.b16 %v2770, %v2766
    %v2927 = vpack.c.b16 %v2771, %v2767
    %v2928 = vpack.c.b16 %v2772, %v2768
    %v2929 = vpack.c.b16 %v2777, %v2773
    %v2930 = vpack.c.b16 %v2778, %v2774
    %v2931 = vpack.c.b16 %v2779, %v2775
    %v2932 = vpack.c.b16 %v2780, %v2776
    %v2933 = vpack.c.b16 %v2785, %v2781
    %v2934 = vpack.c.b16 %v2786, %v2782
    %v2935 = vpack.c.b16 %v2787, %v2783
    %v2936 = vpack.c.b16 %v2788, %v2784
    %v2937 = vpack.c.b16 %v2793, %v2789
    %v2938 = vpack.c.b16 %v2794, %v2790
    %v2939 = vpack.c.b16 %v2795, %v2791
    %v2940 = vpack.c.b16 %v2796, %v2792
    %v2941 = vpack.c.b16 %v2801, %v2797
    %v2942 = vpack.c.b16 %v2802, %v2798
    %v2943 = vpack.c.b16 %v2803, %v2799
    %v2944 = vpack.c.b16 %v2804, %v2800
    %v2945 = vpack.c.b16 %v2809, %v2805
    %v2946 = vpack.c.b16 %v2810, %v2806
    %v2947 = vpack.c.b16 %v2811, %v2807
    %v2948 = vpack.c.b16 %v2812, %v2808
    %v2949 = vpack.c.b16 %v2817, %v2813
    %v2950 = vpack.c.b16 %v2818, %v2814
    %v2951 = vpack.c.b16 %v2819, %v2815
    %v2952 = vpack.c.b16 %v2820, %v2816
    %v2953 = vpack.c.b16 %v2825, %v2821
    %v2954 = vpack.c.b16 %v2826, %v2822
    %v2955 = vpack.c.b16 %v2827, %v2823
    %v2956 = vpack.c.b16 %v2828, %v2824
    %3085 = vmatpush.bf16.msra.mxu0 %v2857
    %3086 = vmatpush.bf16.msra.mxu0 %v2853
    %3087 = vmatpush.bf16.msra.mxu0 %v2849
    %3088 = vmatpush.bf16.msra.mxu0 %v2845
    %3089 = vmatpush.bf16.msra.mxu0 %v2841
    %3090 = vmatpush.bf16.msra.mxu0 %v2837
    %3091 = vmatpush.bf16.msra.mxu0 %v2833
    %3092 = vmatpush.bf16.msra.mxu0 %v2829
    %3093 = vmatmul.bf16.gmra.mxu0 %v2313
    %v3094 = vpop.f32.mrf.mxu0
    %v3095 = vadd.f32 0.0, %v3094
    %v3096 = vpop.f32.mrf.mxu0
    %3097 = vdwg.mxu0
    %3098 = vmatpush.bf16.msra.mxu0 %v2889
    %3099 = vmatpush.bf16.msra.mxu0 %v2885
    %3100 = vmatpush.bf16.msra.mxu0 %v2881
    %3101 = vmatpush.bf16.msra.mxu0 %v2877
    %3102 = vmatpush.bf16.msra.mxu0 %v2873
    %3103 = vmatpush.bf16.msra.mxu0 %v2869
    %3104 = vmatpush.bf16.msra.mxu0 %v2865
    %3105 = vmatpush.bf16.msra.mxu0 %v2861
    %3106 = vmatmul.bf16.gmra.mxu0 %v2314
    %v3107 = vpop.f32.mrf.mxu0
    %v3108 = vadd.f32 %v3095, %v3107
    %v3109 = vpop.f32.mrf.mxu0
    %3110 = vdwg.mxu0
    %3111 = vmatpush.bf16.msra.mxu0 %v2921
    %3112 = vmatpush.bf16.msra.mxu0 %v2917
    %3113 = vmatpush.bf16.msra.mxu0 %v2913
    %3114 = vmatpush.bf16.msra.mxu0 %v2909
    %3115 = vmatpush.bf16.msra.mxu0 %v2905
    %3116 = vmatpush.bf16.msra.mxu0 %v2901
    %3117 = vmatpush.bf16.msra.mxu0 %v2897
    %3118 = vmatpush.bf16.msra.mxu0 %v2893
    %3119 = vmatmul.bf16.gmra.mxu0 %v2315
    %v3120 = vpop.f32.mrf.mxu0
    %v3121 = vadd.f32 %v3108, %v3120
    %v3122 = vpop.f32.mrf.mxu0
    %3123 = vdwg.mxu0
    %3124 = vmatpush.bf16.msra.mxu0 %v2953
    %3125 = vmatpush.bf16.msra.mxu0 %v2949
    %3126 = vmatpush.bf16.msra.mxu0 %v2945
    %3127 = vmatpush.bf16.msra.mxu0 %v2941
    %3128 = vmatpush.bf16.msra.mxu0 %v2937
    %3129 = vmatpush.bf16.msra.mxu0 %v2933
    %3130 = vmatpush.bf16.msra.mxu0 %v2929
    %3131 = vmatpush.bf16.msra.mxu0 %v2925
    %3132 = vmatmul.bf16.gmra.mxu0 %v2316
    %v3133 = vpop.f32.mrf.mxu0
    %v3134 = vadd.f32 %v3121, %v3133
    %v3135 = vpop.f32.mrf.mxu0
    %3136 = vdwg.mxu0
    %3137 = vmatpush.bf16.msra.mxu0 %v2858
    %3138 = vmatpush.bf16.msra.mxu0 %v2854
    %3139 = vmatpush.bf16.msra.mxu0 %v2850
    %3140 = vmatpush.bf16.msra.mxu0 %v2846
    %3141 = vmatpush.bf16.msra.mxu0 %v2842
    %3142 = vmatpush.bf16.msra.mxu0 %v2838
    %3143 = vmatpush.bf16.msra.mxu0 %v2834
    %3144 = vmatpush.bf16.msra.mxu0 %v2830
    %3145 = vmatmul.bf16.gmra.mxu0 %v2313
    %v3146 = vpop.f32.mrf.mxu0
    %v3147 = vadd.f32 0.0, %v3146
    %v3148 = vpop.f32.mrf.mxu0
    %3149 = vdwg.mxu0
    %3150 = vmatpush.bf16.msra.mxu0 %v2890
    %3151 = vmatpush.bf16.msra.mxu0 %v2886
    %3152 = vmatpush.bf16.msra.mxu0 %v2882
    %3153 = vmatpush.bf16.msra.mxu0 %v2878
    %3154 = vmatpush.bf16.msra.mxu0 %v2874
    %3155 = vmatpush.bf16.msra.mxu0 %v2870
    %3156 = vmatpush.bf16.msra.mxu0 %v2866
    %3157 = vmatpush.bf16.msra.mxu0 %v2862
    %3158 = vmatmul.bf16.gmra.mxu0 %v2314
    %v3159 = vpop.f32.mrf.mxu0
    %v3160 = vadd.f32 %v3147, %v3159
    %v3161 = vpop.f32.mrf.mxu0
    %3162 = vdwg.mxu0
    %3163 = vmatpush.bf16.msra.mxu0 %v2922
    %3164 = vmatpush.bf16.msra.mxu0 %v2918
    %3165 = vmatpush.bf16.msra.mxu0 %v2914
    %3166 = vmatpush.bf16.msra.mxu0 %v2910
    %3167 = vmatpush.bf16.msra.mxu0 %v2906
    %3168 = vmatpush.bf16.msra.mxu0 %v2902
    %3169 = vmatpush.bf16.msra.mxu0 %v2898
    %3170 = vmatpush.bf16.msra.mxu0 %v2894
    %3171 = vmatmul.bf16.gmra.mxu0 %v2315
    %v3172 = vpop.f32.mrf.mxu0
    %v3173 = vadd.f32 %v3160, %v3172
    %v3174 = vpop.f32.mrf.mxu0
    %3175 = vdwg.mxu0
    %3176 = vmatpush.bf16.msra.mxu0 %v2954
    %3177 = vmatpush.bf16.msra.mxu0 %v2950
    %3178 = vmatpush.bf16.msra.mxu0 %v2946
    %3179 = vmatpush.bf16.msra.mxu0 %v2942
    %3180 = vmatpush.bf16.msra.mxu0 %v2938
    %3181 = vmatpush.bf16.msra.mxu0 %v2934
    %3182 = vmatpush.bf16.msra.mxu0 %v2930
    %3183 = vmatpush.bf16.msra.mxu0 %v2926
    %3184 = vmatmul.bf16.gmra.mxu0 %v2316
    %v3185 = vpop.f32.mrf.mxu0
    %v3186 = vadd.f32 %v3173, %v3185
    %v3187 = vpop.f32.mrf.mxu0
    %3188 = vdwg.mxu0
    %3189 = vmatpush.bf16.msra.mxu0 %v2859
    %3190 = vmatpush.bf16.msra.mxu0 %v2855
    %3191 = vmatpush.bf16.msra.mxu0 %v2851
    %3192 = vmatpush.bf16.msra.mxu0 %v2847
    %3193 = vmatpush.bf16.msra.mxu0 %v2843
    %3194 = vmatpush.bf16.msra.mxu0 %v2839
    %3195 = vmatpush.bf16.msra.mxu0 %v2835
    %3196 = vmatpush.bf16.msra.mxu0 %v2831
    %3197 = vmatmul.bf16.gmra.mxu0 %v2313
    %v3198 = vpop.f32.mrf.mxu0
    %v3199 = vadd.f32 0.0, %v3198
    %v3200 = vpop.f32.mrf.mxu0
    %3201 = vdwg.mxu0
    %3202 = vmatpush.bf16.msra.mxu0 %v2891
    %3203 = vmatpush.bf16.msra.mxu0 %v2887
    %3204 = vmatpush.bf16.msra.mxu0 %v2883
    %3205 = vmatpush.bf16.msra.mxu0 %v2879
    %3206 = vmatpush.bf16.msra.mxu0 %v2875
    %3207 = vmatpush.bf16.msra.mxu0 %v2871
    %3208 = vmatpush.bf16.msra.mxu0 %v2867
    %3209 = vmatpush.bf16.msra.mxu0 %v2863
    %3210 = vmatmul.bf16.gmra.mxu0 %v2314
    %v3211 = vpop.f32.mrf.mxu0
    %v3212 = vadd.f32 %v3199, %v3211
    %v3213 = vpop.f32.mrf.mxu0
    %3214 = vdwg.mxu0
    %3215 = vmatpush.bf16.msra.mxu0 %v2923
    %3216 = vmatpush.bf16.msra.mxu0 %v2919
    %3217 = vmatpush.bf16.msra.mxu0 %v2915
    %3218 = vmatpush.bf16.msra.mxu0 %v2911
    %3219 = vmatpush.bf16.msra.mxu0 %v2907
    %3220 = vmatpush.bf16.msra.mxu0 %v2903
    %3221 = vmatpush.bf16.msra.mxu0 %v2899
    %3222 = vmatpush.bf16.msra.mxu0 %v2895
    %3223 = vmatmul.bf16.gmra.mxu0 %v2315
    %v3224 = vpop.f32.mrf.mxu0
    %v3225 = vadd.f32 %v3212, %v3224
    %v3226 = vpop.f32.mrf.mxu0
    %3227 = vdwg.mxu0
    %3228 = vmatpush.bf16.msra.mxu0 %v2955
    %3229 = vmatpush.bf16.msra.mxu0 %v2951
    %3230 = vmatpush.bf16.msra.mxu0 %v2947
    %3231 = vmatpush.bf16.msra.mxu0 %v2943
    %3232 = vmatpush.bf16.msra.mxu0 %v2939
    %3233 = vmatpush.bf16.msra.mxu0 %v2935
    %3234 = vmatpush.bf16.msra.mxu0 %v2931
    %3235 = vmatpush.bf16.msra.mxu0 %v2927
    %3236 = vmatmul.bf16.gmra.mxu0 %v2316
    %v3237 = vpop.f32.mrf.mxu0
    %v3238 = vadd.f32 %v3225, %v3237
    %v3239 = vpop.f32.mrf.mxu0
    %3240 = vdwg.mxu0
    %3241 = vmatpush.bf16.msra.mxu0 %v2860
    %3242 = vmatpush.bf16.msra.mxu0 %v2856
    %3243 = vmatpush.bf16.msra.mxu0 %v2852
    %3244 = vmatpush.bf16.msra.mxu0 %v2848
    %3245 = vmatpush.bf16.msra.mxu0 %v2844
    %3246 = vmatpush.bf16.msra.mxu0 %v2840
    %3247 = vmatpush.bf16.msra.mxu0 %v2836
    %3248 = vmatpush.bf16.msra.mxu0 %v2832
    %3249 = vmatmul.bf16.gmra.mxu0 %v2313
    %v3250 = vpop.f32.mrf.mxu0
    %v3251 = vadd.f32 0.0, %v3250
    %v3252 = vpop.f32.mrf.mxu0
    %3253 = vdwg.mxu0
    %3254 = vmatpush.bf16.msra.mxu0 %v2892
    %3255 = vmatpush.bf16.msra.mxu0 %v2888
    %3256 = vmatpush.bf16.msra.mxu0 %v2884
    %3257 = vmatpush.bf16.msra.mxu0 %v2880
    %3258 = vmatpush.bf16.msra.mxu0 %v2876
    %3259 = vmatpush.bf16.msra.mxu0 %v2872
    %3260 = vmatpush.bf16.msra.mxu0 %v2868
    %3261 = vmatpush.bf16.msra.mxu0 %v2864
    %3262 = vmatmul.bf16.gmra.mxu0 %v2314
    %v3263 = vpop.f32.mrf.mxu0
    %v3264 = vadd.f32 %v3251, %v3263
    %v3265 = vpop.f32.mrf.mxu0
    %3266 = vdwg.mxu0
    %3267 = vmatpush.bf16.msra.mxu0 %v2924
    %3268 = vmatpush.bf16.msra.mxu0 %v2920
    %3269 = vmatpush.bf16.msra.mxu0 %v2916
    %3270 = vmatpush.bf16.msra.mxu0 %v2912
    %3271 = vmatpush.bf16.msra.mxu0 %v2908
    %3272 = vmatpush.bf16.msra.mxu0 %v2904
    %3273 = vmatpush.bf16.msra.mxu0 %v2900
    %3274 = vmatpush.bf16.msra.mxu0 %v2896
    %3275 = vmatmul.bf16.gmra.mxu0 %v2315
    %v3276 = vpop.f32.mrf.mxu0
    %v3277 = vadd.f32 %v3264, %v3276
    %v3278 = vpop.f32.mrf.mxu0
    %3279 = vdwg.mxu0
    %3280 = vmatpush.bf16.msra.mxu0 %v2956
    %3281 = vmatpush.bf16.msra.mxu0 %v2952
    %3282 = vmatpush.bf16.msra.mxu0 %v2948
    %3283 = vmatpush.bf16.msra.mxu0 %v2944
    %3284 = vmatpush.bf16.msra.mxu0 %v2940
    %3285 = vmatpush.bf16.msra.mxu0 %v2936
    %3286 = vmatpush.bf16.msra.mxu0 %v2932
    %3287 = vmatpush.bf16.msra.mxu0 %v2928
    %3288 = vmatmul.bf16.gmra.mxu0 %v2316
    %v3289 = vpop.f32.mrf.mxu0
    %v3290 = vadd.f32 %v3277, %v3289
    %v3291 = vpop.f32.mrf.mxu0
    %3292 = vdwg.mxu0
    %v3293 = vmax.f32 %v3134, 0.0
    %v3294 = vmax.f32 %v3186, 0.0
    %v3295 = vmax.f32 %v3238, 0.0
    %v3296 = vmax.f32 %v3290, 0.0
    %v3297 = vpack.c.bf16 %v3293, %v3293
    %v3298 = vpack.c.bf16 %v3294, %v3294
    %v3299 = vpack.c.bf16 %v3295, %v3295
    %v3300 = vpack.c.bf16 %v3296, %v3296
    %v3301 = vld [vmem:[#allocation14] sm:$0xf]
    %v3302 = vld [vmem:[#allocation14 + $0x4] sm:$0xf]
    %v3303 = vld [vmem:[#allocation14 + $0x8] sm:$0xf]
    %v3304 = vld [vmem:[#allocation14 + $0xc] sm:$0xf]
    %v3305 = vld [vmem:[#allocation14 + $0x10] sm:$0xf]
    %v3306 = vld [vmem:[#allocation14 + $0x14] sm:$0xf]
    %v3307 = vld [vmem:[#allocation14 + $0x18] sm:$0xf]
    %v3308 = vld [vmem:[#allocation14 + $0x1c] sm:$0xf]
    %v3309 = vld [vmem:[#allocation14 + $0x20] sm:$0xf]
    %v3310 = vld [vmem:[#allocation14 + $0x24] sm:$0xf]
    %v3311 = vld [vmem:[#allocation14 + $0x28] sm:$0xf]
    %v3312 = vld [vmem:[#allocation14 + $0x2c] sm:$0xf]
    %v3313 = vld [vmem:[#allocation14 + $0x30] sm:$0xf]
    %v3314 = vld [vmem:[#allocation14 + $0x34] sm:$0xf]
    %v3315 = vld [vmem:[#allocation14 + $0x38] sm:$0xf]
    %v3316 = vld [vmem:[#allocation14 + $0x3c] sm:$0xf]
    %v3317 = vld [vmem:[#allocation14 + $0x40] sm:$0xf]
    %v3318 = vld [vmem:[#allocation14 + $0x44] sm:$0xf]
    %v3319 = vld [vmem:[#allocation14 + $0x48] sm:$0xf]
    %v3320 = vld [vmem:[#allocation14 + $0x4c] sm:$0xf]
    %v3321 = vld [vmem:[#allocation14 + $0x50] sm:$0xf]
    %v3322 = vld [vmem:[#allocation14 + $0x54] sm:$0xf]
    %v3323 = vld [vmem:[#allocation14 + $0x58] sm:$0xf]
    %v3324 = vld [vmem:[#allocation14 + $0x5c] sm:$0xf]
    %v3325 = vld [vmem:[#allocation14 + $0x60] sm:$0xf]
    %v3326 = vld [vmem:[#allocation14 + $0x64] sm:$0xf]
    %v3327 = vld [vmem:[#allocation14 + $0x68] sm:$0xf]
    %v3328 = vld [vmem:[#allocation14 + $0x6c] sm:$0xf]
    %v3329 = vld [vmem:[#allocation14 + $0x70] sm:$0xf]
    %v3330 = vld [vmem:[#allocation14 + $0x74] sm:$0xf]
    %v3331 = vld [vmem:[#allocation14 + $0x78] sm:$0xf]
    %v3332 = vld [vmem:[#allocation14 + $0x7c] sm:$0xf]
    %v3333 = vld [vmem:[#allocation14 + $0x80] sm:$0xf]
    %v3334 = vld [vmem:[#allocation14 + $0x84] sm:$0xf]
    %v3335 = vld [vmem:[#allocation14 + $0x88] sm:$0xf]
    %v3336 = vld [vmem:[#allocation14 + $0x8c] sm:$0xf]
    %v3337 = vld [vmem:[#allocation14 + $0x90] sm:$0xf]
    %v3338 = vld [vmem:[#allocation14 + $0x94] sm:$0xf]
    %v3339 = vld [vmem:[#allocation14 + $0x98] sm:$0xf]
    %v3340 = vld [vmem:[#allocation14 + $0x9c] sm:$0xf]
    %v3341 = vld [vmem:[#allocation14 + $0xa0] sm:$0xf]
    %v3342 = vld [vmem:[#allocation14 + $0xa4] sm:$0xf]
    %v3343 = vld [vmem:[#allocation14 + $0xa8] sm:$0xf]
    %v3344 = vld [vmem:[#allocation14 + $0xac] sm:$0xf]
    %v3345 = vld [vmem:[#allocation14 + $0xb0] sm:$0xf]
    %v3346 = vld [vmem:[#allocation14 + $0xb4] sm:$0xf]
    %v3347 = vld [vmem:[#allocation14 + $0xb8] sm:$0xf]
    %v3348 = vld [vmem:[#allocation14 + $0xbc] sm:$0xf]
    %v3349 = vld [vmem:[#allocation14 + $0xc0] sm:$0xf]
    %v3350 = vld [vmem:[#allocation14 + $0xc4] sm:$0xf]
    %v3351 = vld [vmem:[#allocation14 + $0xc8] sm:$0xf]
    %v3352 = vld [vmem:[#allocation14 + $0xcc] sm:$0xf]
    %v3353 = vld [vmem:[#allocation14 + $0xd0] sm:$0xf]
    %v3354 = vld [vmem:[#allocation14 + $0xd4] sm:$0xf]
    %v3355 = vld [vmem:[#allocation14 + $0xd8] sm:$0xf]
    %v3356 = vld [vmem:[#allocation14 + $0xdc] sm:$0xf]
    %v3357 = vld [vmem:[#allocation14 + $0xe0] sm:$0xf]
    %v3358 = vld [vmem:[#allocation14 + $0xe4] sm:$0xf]
    %v3359 = vld [vmem:[#allocation14 + $0xe8] sm:$0xf]
    %v3360 = vld [vmem:[#allocation14 + $0xec] sm:$0xf]
    %v3361 = vld [vmem:[#allocation14 + $0xf0] sm:$0xf]
    %v3362 = vld [vmem:[#allocation14 + $0xf4] sm:$0xf]
    %v3363 = vld [vmem:[#allocation14 + $0xf8] sm:$0xf]
    %v3364 = vld [vmem:[#allocation14 + $0xfc] sm:$0xf]
    %v3365 = vld [vmem:[%s14] sm:$0x1]
    %v3367 = vperm.slane %v3365, 0
    %v3433 = vunpack.c.l.b16 %v3301
    %v3434 = vunpack.c.l.b16 %v3302
    %v3435 = vunpack.c.l.b16 %v3303
    %v3436 = vunpack.c.l.b16 %v3304
    %v3437 = vunpack.c.l.b16 %v3305
    %v3438 = vunpack.c.l.b16 %v3306
    %v3439 = vunpack.c.l.b16 %v3307
    %v3440 = vunpack.c.l.b16 %v3308
    %v3441 = vunpack.c.l.b16 %v3309
    %v3442 = vunpack.c.l.b16 %v3310
    %v3443 = vunpack.c.l.b16 %v3311
    %v3444 = vunpack.c.l.b16 %v3312
    %v3445 = vunpack.c.l.b16 %v3313
    %v3446 = vunpack.c.l.b16 %v3314
    %v3447 = vunpack.c.l.b16 %v3315
    %v3448 = vunpack.c.l.b16 %v3316
    %v3449 = vunpack.c.l.b16 %v3317
    %v3450 = vunpack.c.l.b16 %v3318
    %v3451 = vunpack.c.l.b16 %v3319
    %v3452 = vunpack.c.l.b16 %v3320
    %v3453 = vunpack.c.l.b16 %v3321
    %v3454 = vunpack.c.l.b16 %v3322
    %v3455 = vunpack.c.l.b16 %v3323
    %v3456 = vunpack.c.l.b16 %v3324
    %v3457 = vunpack.c.l.b16 %v3325
    %v3458 = vunpack.c.l.b16 %v3326
    %v3459 = vunpack.c.l.b16 %v3327
    %v3460 = vunpack.c.l.b16 %v3328
    %v3461 = vunpack.c.l.b16 %v3329
    %v3462 = vunpack.c.l.b16 %v3330
    %v3463 = vunpack.c.l.b16 %v3331
    %v3464 = vunpack.c.l.b16 %v3332
    %v3465 = vunpack.c.l.b16 %v3333
    %v3466 = vunpack.c.l.b16 %v3334
    %v3467 = vunpack.c.l.b16 %v3335
    %v3468 = vunpack.c.l.b16 %v3336
    %v3469 = vunpack.c.l.b16 %v3337
    %v3470 = vunpack.c.l.b16 %v3338
    %v3471 = vunpack.c.l.b16 %v3339
    %v3472 = vunpack.c.l.b16 %v3340
    %v3473 = vunpack.c.l.b16 %v3341
    %v3474 = vunpack.c.l.b16 %v3342
    %v3475 = vunpack.c.l.b16 %v3343
    %v3476 = vunpack.c.l.b16 %v3344
    %v3477 = vunpack.c.l.b16 %v3345
    %v3478 = vunpack.c.l.b16 %v3346
    %v3479 = vunpack.c.l.b16 %v3347
    %v3480 = vunpack.c.l.b16 %v3348
    %v3481 = vunpack.c.l.b16 %v3349
    %v3482 = vunpack.c.l.b16 %v3350
    %v3483 = vunpack.c.l.b16 %v3351
    %v3484 = vunpack.c.l.b16 %v3352
    %v3485 = vunpack.c.l.b16 %v3353
    %v3486 = vunpack.c.l.b16 %v3354
    %v3487 = vunpack.c.l.b16 %v3355
    %v3488 = vunpack.c.l.b16 %v3356
    %v3489 = vunpack.c.l.b16 %v3357
    %v3490 = vunpack.c.l.b16 %v3358
    %v3491 = vunpack.c.l.b16 %v3359
    %v3492 = vunpack.c.l.b16 %v3360
    %v3493 = vunpack.c.l.b16 %v3361
    %v3494 = vunpack.c.l.b16 %v3362
    %v3495 = vunpack.c.l.b16 %v3363
    %v3496 = vunpack.c.l.b16 %v3364
    %v3497 = vpack.c.b16 %v3434, %v3433
    %v3498 = vpack.c.b16 %v3436, %v3435
    %v3499 = vpack.c.b16 %v3438, %v3437
    %v3500 = vpack.c.b16 %v3440, %v3439
    %v3501 = vpack.c.b16 %v3442, %v3441
    %v3502 = vpack.c.b16 %v3444, %v3443
    %v3503 = vpack.c.b16 %v3446, %v3445
    %v3504 = vpack.c.b16 %v3448, %v3447
    %v3505 = vpack.c.b16 %v3450, %v3449
    %v3506 = vpack.c.b16 %v3452, %v3451
    %v3507 = vpack.c.b16 %v3454, %v3453
    %v3508 = vpack.c.b16 %v3456, %v3455
    %v3509 = vpack.c.b16 %v3458, %v3457
    %v3510 = vpack.c.b16 %v3460, %v3459
    %v3511 = vpack.c.b16 %v3462, %v3461
    %v3512 = vpack.c.b16 %v3464, %v3463
    %v3513 = vpack.c.b16 %v3466, %v3465
    %v3514 = vpack.c.b16 %v3468, %v3467
    %v3515 = vpack.c.b16 %v3470, %v3469
    %v3516 = vpack.c.b16 %v3472, %v3471
    %v3517 = vpack.c.b16 %v3474, %v3473
    %v3518 = vpack.c.b16 %v3476, %v3475
    %v3519 = vpack.c.b16 %v3478, %v3477
    %v3520 = vpack.c.b16 %v3480, %v3479
    %v3521 = vpack.c.b16 %v3482, %v3481
    %v3522 = vpack.c.b16 %v3484, %v3483
    %v3523 = vpack.c.b16 %v3486, %v3485
    %v3524 = vpack.c.b16 %v3488, %v3487
    %v3525 = vpack.c.b16 %v3490, %v3489
    %v3526 = vpack.c.b16 %v3492, %v3491
    %v3527 = vpack.c.b16 %v3494, %v3493
    %v3528 = vpack.c.b16 %v3496, %v3495
    %3561 = vmatpush.bf16.msra.mxu0 %v3504
    %3562 = vmatpush.bf16.msra.mxu0 %v3503
    %3563 = vmatpush.bf16.msra.mxu0 %v3502
    %3564 = vmatpush.bf16.msra.mxu0 %v3501
    %3565 = vmatpush.bf16.msra.mxu0 %v3500
    %3566 = vmatpush.bf16.msra.mxu0 %v3499
    %3567 = vmatpush.bf16.msra.mxu0 %v3498
    %3568 = vmatpush.bf16.msra.mxu0 %v3497
    %3569 = vmatmul.bf16.gmra.mxu0 %v3297
    %v3570 = vpop.f32.mrf.mxu0
    %v3571 = vadd.f32 %v3367, %v3570
    %v3572 = vpop.f32.mrf.mxu0
    %3573 = vdwg.mxu0
    %3574 = vmatpush.bf16.msra.mxu0 %v3512
    %3575 = vmatpush.bf16.msra.mxu0 %v3511
    %3576 = vmatpush.bf16.msra.mxu0 %v3510
    %3577 = vmatpush.bf16.msra.mxu0 %v3509
    %3578 = vmatpush.bf16.msra.mxu0 %v3508
    %3579 = vmatpush.bf16.msra.mxu0 %v3507
    %3580 = vmatpush.bf16.msra.mxu0 %v3506
    %3581 = vmatpush.bf16.msra.mxu0 %v3505
    %3582 = vmatmul.bf16.gmra.mxu0 %v3298
    %v3583 = vpop.f32.mrf.mxu0
    %v3584 = vadd.f32 %v3571, %v3583
    %v3585 = vpop.f32.mrf.mxu0
    %3586 = vdwg.mxu0
    %3587 = vmatpush.bf16.msra.mxu0 %v3520
    %3588 = vmatpush.bf16.msra.mxu0 %v3519
    %3589 = vmatpush.bf16.msra.mxu0 %v3518
    %3590 = vmatpush.bf16.msra.mxu0 %v3517
    %3591 = vmatpush.bf16.msra.mxu0 %v3516
    %3592 = vmatpush.bf16.msra.mxu0 %v3515
    %3593 = vmatpush.bf16.msra.mxu0 %v3514
    %3594 = vmatpush.bf16.msra.mxu0 %v3513
    %3595 = vmatmul.bf16.gmra.mxu0 %v3299
    %v3596 = vpop.f32.mrf.mxu0
    %v3597 = vadd.f32 %v3584, %v3596
    %v3598 = vpop.f32.mrf.mxu0
    %3599 = vdwg.mxu0
    %3600 = vmatpush.bf16.msra.mxu0 %v3528
    %3601 = vmatpush.bf16.msra.mxu0 %v3527
    %3602 = vmatpush.bf16.msra.mxu0 %v3526
    %3603 = vmatpush.bf16.msra.mxu0 %v3525
    %3604 = vmatpush.bf16.msra.mxu0 %v3524
    %3605 = vmatpush.bf16.msra.mxu0 %v3523
    %3606 = vmatpush.bf16.msra.mxu0 %v3522
    %3607 = vmatpush.bf16.msra.mxu0 %v3521
    %3608 = vmatmul.bf16.gmra.mxu0 %v3300
    %v3609 = vpop.f32.mrf.mxu0
    %v3610 = vadd.f32 %v3597, %v3609
    %v3611 = vpop.f32.mrf.mxu0
    %3612 = vdwg.mxu0
    %v3613 = vsub.f32 0.0, %v3610
    %v3614 = vmul.f32 %v3613, 1.442695
    %v3615 = vpow.pop %v3614
    %v3616 = vadd.f32 %v3615, 1.0
    %v3617 = vrcp.pop %v3616
    %3618 = vst [vmem:[#allocation15] sm:$0xff] %v3617
    // Predicated region
    $region90: #{tpu_custom_call.1} parent=1 // pred_check
      _
    $region91: #{tpu_custom_call.1} parent=1 // pred_check_branch
      %3620 = sbr.rel (0) target = $region93
    $region92: #{tpu_custom_call.1} parent=1 // pred_region
      %3622 = vsyncadd [#allocation5], 0
      %s3624 = sshll.u32 [#allocation15], 4
      %s3625 = int_to_ptr.vmem [resolvable:$true] %s3624
      %s3626 = sshll.u32 %s15, 4
      %s3627 = int_to_ptr.hbm [resolvable:$true] %s3626
      %3629 = dma.vmem_to_hbm [thread:$0]  %s3625, 128, %s3627, [#allocation5]
    $region93: #{tpu_custom_call.1} parent=1 // pred_fallthru
      _
    // Predicated region
    $region94: #{tpu_custom_call.1} parent=1 // pred_check
      _
    $region95: #{tpu_custom_call.1} parent=1 // pred_check_branch
      %3631 = sbr.rel (0) target = $region97
    $region96: #{tpu_custom_call.1} parent=1 // pred_region
      %3633 = dma.done [#allocation5], 128
    $region97: #{tpu_custom_call.1} parent=1 // pred_fallthru
      _
    %3634 = vsyncpa [#allocation4], 1
    %3635 = vsyncpa [#allocation7], 1
    %3636 = vsyncpa [#allocation10], 1
    %3637 = vsyncpa [#allocation13], 1
    %3638 = vsyncpa [#allocation5], 1

</llo_original>
